<compile_context>
chip_gen: v5e
topology: v5e:2x2
jax: 0.10.0
libtpu: 0.0.40
codegen_flags: <defaults>
</compile_context>

<pallas_src>
import math

import jax
import jax.numpy as jnp
from jax.experimental import pallas as pl
from jax.experimental.pallas import tpu as pltpu

# ---- config (mirrors TransformerEmbedding.__init__; heads/dim_head/mlp_dim
#      are hardcoded in the module, embedding_dim kept small for the test) ----
EMBED_DIM = 32              # embedding_dim
NUM_HEADS = 12              # hardcoded: heads=12
DIM_HEAD = 64               # hardcoded: dim_head=64
INNER_DIM = NUM_HEADS * DIM_HEAD   # 768
MLP_DIM = 3072              # hardcoded: mlp_dim=3072
LN_EPS = 1e-5


def _layer_norm(x, g, b):
    mu = jnp.mean(x, axis=-1, keepdims=True)
    var = jnp.mean(jnp.square(x - mu), axis=-1, keepdims=True)
    return (x - mu) * jax.lax.rsqrt(var + LN_EPS) * g + b


def transformer_embedding_kernel(
    ids_ref,                      # (TB, S, 1) int32
    tok_tab_ref,                  # (NE, D)    f32
    pos_tab_ref,                  # (S, D)     f32   (rows 0..S-1 of pos table)
    ln1_g_ref, ln1_b_ref,         # (1, D)     f32
    w_qkv_ref,                    # (D, 3*H*Dh) bf16 ([Q|K|V], scale folded in Q)
    w_out_ref,                    # (H*Dh, D)  bf16
    b_out_ref,                    # (1, D)     f32
    ln2_g_ref, ln2_b_ref,         # (1, D)     f32
    w_ff1_ref, b_ff1_ref,         # (D, MLP) bf16, (1, MLP) f32
    w_ff2_ref, b_ff2_ref,         # (MLP, D) bf16, (1, D)   f32
    out_ref,                      # (1, TB, D) f32   (mean over sequence)
):
    TB, S, _ = ids_ref.shape
    NE, D = tok_tab_ref.shape
    H, Dh, I = NUM_HEADS, DIM_HEAD, INNER_DIM
    R = TB * S                                                 # flattened rows

    # ---- fused embedding lookup: exact one-hot matmul gather + pos add ----
    # TODO(synk): for a real vocab replace the O(R*NE*D) one-hot matmul with an
    # SMEM-ids row gather (jnp.take on the VMEM table / pl.Element DMA gather).
    ids = ids_ref[...].reshape(R, 1)                           # (R, 1) int32
    onehot = (jax.lax.broadcasted_iota(jnp.int32, (R, NE), 1) == ids)
    tok_e = jnp.dot(onehot.astype(jnp.float32), tok_tab_ref[...],
                    preferred_element_type=jnp.float32)        # (R, D) exact
    x = (tok_e.reshape(TB, S, D) + pos_tab_ref[...][None]).reshape(R, D)

    # ---- PreNorm LayerNorm #1 (f32) + multi-head self-attention ----
    xn = _layer_norm(x, ln1_g_ref[...], ln1_b_ref[...])        # (R, D) f32

    # single fused QKV projection: (R, D) @ (D, 3*H*Dh), N=2304
    qkv = jnp.dot(xn.astype(jnp.bfloat16), w_qkv_ref[...],
                  preferred_element_type=jnp.float32)          # (R, 3I) f32
    q2 = qkv[:, :I]                                            # (R, I), scaled
    k2 = qkv[:, I:2 * I]
    v2 = qkv[:, 2 * I:]

    def to_heads(t):
        # (R, H*Dh) -> (H, R, Dh) -> (H*TB, S, Dh); pure lane slices + stack
        hs = jnp.stack([t[:, h * Dh:(h + 1) * Dh] for h in range(H)], axis=0)
        return hs.reshape(H * TB, S, Dh).astype(jnp.bfloat16)

    qb = to_heads(q2)
    kb = to_heads(k2)
    vb = to_heads(v2)

    dots = jnp.einsum('bqd,bkd->bqk', qb, kb,
                      preferred_element_type=jnp.float32)      # (H*TB, S, S)
    dots = dots - jnp.max(dots, axis=-1, keepdims=True)        # f32 softmax
    p = jnp.exp(dots)
    p = p / jnp.sum(p, axis=-1, keepdims=True)

    ctx = jnp.einsum('bqk,bkd->bqd', p.astype(jnp.bfloat16), vb,
                     preferred_element_type=jnp.float32)       # (H*TB, S, Dh)

    # merge heads back onto the lane axis and do ONE K=768 output projection
    ctx = ctx.reshape(H, R, Dh)
    ctx_cat = jnp.concatenate([ctx[h] for h in range(H)], axis=-1)  # (R, I)
    attn = jnp.dot(ctx_cat.astype(jnp.bfloat16), w_out_ref[...],
                   preferred_element_type=jnp.float32) + b_out_ref[...]
    x = x + attn                                               # residual

    # ---- PreNorm LayerNorm #2 (f32) + MLP ----
    # TODO(synk): for large blocks (R >~ 1k) tile the FF1->GELU->FF2 stage over
    # the 3072 axis (and use bf16 GELU on v6e/v7x) to shrink the h1 live range.
    xn2 = _layer_norm(x, ln2_g_ref[...], ln2_b_ref[...])
    h1 = jnp.dot(xn2.astype(jnp.bfloat16), w_ff1_ref[...],
                 preferred_element_type=jnp.float32) + b_ff1_ref[...]
    # TODO(synk): PyTorch nn.GELU() is the exact erf form; tanh approximation
    # used here (erf has no Mosaic lowering; max abs diff ~1e-3).
    h1 = jax.nn.gelu(h1, approximate=True)                     # f32 (EUP tanh)
    h2 = jnp.dot(h1.astype(jnp.bfloat16), w_ff2_ref[...],
                 preferred_element_type=jnp.float32) + b_ff2_ref[...]
    x = x + h2                                                 # residual

    # ---- torch .mean(dim=-2): mean over sequence -> (TB, D) ----
    out_ref[0] = jnp.mean(x.reshape(TB, S, D), axis=1)


def prepare_params(params, seq_len):
    """One-time weight preprocessing (scale fold, QKV fuse, bf16 casts).

    Hoisted out of the forward call so the reshapes/casts are not re-run as
    separate XLA ops on every invocation.
    """
    f32, bf16 = jnp.float32, jnp.bfloat16
    I = INNER_DIM
    scale = DIM_HEAD ** -0.5

    w_qkv = params["w_qkv"].astype(f32)                        # (D, 3*I) [Q|K|V]
    w_qkv_fused = jnp.concatenate(
        [w_qkv[:, :I] * scale,                                 # fold 1/sqrt(Dh)
         w_qkv[:, I:2 * I],
         w_qkv[:, 2 * I:]], axis=1).astype(bf16)               # (D, 3*I) bf16

    return dict(
        tok_tab=params["token_embedding"].astype(f32),         # (NE, D)
        pos_tab=params["position_embedding"][:seq_len].astype(f32),  # (S, D)
        ln1_g=params["ln1_g"].astype(f32),
        ln1_b=params["ln1_b"].astype(f32),
        w_qkv=w_qkv_fused,
        w_out=params["w_out"].astype(bf16),                    # (I, D)
        b_out=params["b_out"].astype(f32),
        ln2_g=params["ln2_g"].astype(f32),
        ln2_b=params["ln2_b"].astype(f32),
        w_ff1=params["w_ff1"].astype(bf16),                    # (D, MLP)
        b_ff1=params["b_ff1"].astype(f32),
        w_ff2=params["w_ff2"].astype(bf16),                    # (MLP, D)
        b_ff2=params["b_ff2"].astype(f32),
    )


def _pick_block_b(B, S):
    """Rows-per-block heuristic from the perf review.

    * Default: one grid point (G=1) — v5e/v6e have a single TensorCore, so
      extra grid points are serial overhead and shrink matmul M.
    * Split into 2 blocks (v7x 2-TC megacore) only if each block keeps
      >= 256 rows.
    * Cap rows per block so the (R, 3072) FF1 intermediate stays well inside
      the default scoped-VMEM limit (~R*3072*(4+2) bytes).
    """
    if B >= 2 and (B // 2) * S >= 256:
        block_b = pl.cdiv(B, 2)
    else:
        block_b = B
    max_rows = 512
    if block_b * S > max_rows:
        block_b = max(1, max_rows // S)
    return block_b


def transformer_embedding_forward(token_ids, prepared, block_b=None):
    """token_ids: int (B, S).  prepared: output of prepare_params.
    Returns f32 (B, EMBED_DIM)."""
    B, S = token_ids.shape
    D = EMBED_DIM

    if block_b is None:
        block_b = _pick_block_b(B, S)
    G = pl.cdiv(B, block_b)
    B_pad = G * block_b

    ids = token_ids.astype(jnp.int32)
    if B_pad != B:
        ids = jnp.pad(ids, ((0, B_pad - B), (0, 0)))           # id 0 is valid
    ids = ids.reshape(B_pad, S, 1)

    p = prepared
    NE = p["tok_tab"].shape[0]

    def const_spec(shape):
        zeros = (0,) * len(shape)
        return pl.BlockSpec(shape, lambda g, z=zeros: z)

    grid_spec = pltpu.PrefetchScalarGridSpec(
        num_scalar_prefetch=0,
        grid=(G,),
        in_specs=[
            pl.BlockSpec((block_b, S, 1), lambda g: (g, 0, 0)),   # token ids
            const_spec((NE, D)),                                  # token table
            const_spec((S, D)),                                   # position table
            const_spec((1, D)), const_spec((1, D)),               # ln1 g, b
            const_spec((D, 3 * INNER_DIM)),                       # fused w_qkv
            const_spec((INNER_DIM, D)),                           # w_out
            const_spec((1, D)),                                   # b_out
            const_spec((1, D)), const_spec((1, D)),               # ln2 g, b
            const_spec((D, MLP_DIM)), const_spec((1, MLP_DIM)),   # ff1 w, b
            const_spec((MLP_DIM, D)), const_spec((1, D)),         # ff2 w, b
        ],
        out_specs=pl.BlockSpec((1, block_b, D), lambda g: (g, 0, 0)),
    )

    out = pl.pallas_call(
        transformer_embedding_kernel,
        out_shape=jax.ShapeDtypeStruct((G, block_b, D), jnp.float32),
        grid_spec=grid_spec,
        compiler_params=pltpu.CompilerParams(
            dimension_semantics=("parallel",),
        ),
    )(
        ids, p["tok_tab"], p["pos_tab"],
        p["ln1_g"], p["ln1_b"],
        p["w_qkv"], p["w_out"], p["b_out"],
        p["ln2_g"], p["ln2_b"],
        p["w_ff1"], p["b_ff1"], p["w_ff2"], p["b_ff2"],
    )
    return out.reshape(B_pad, D)[:B]                            # (B, D)


def init_params(key, num_embeddings, max_num_token):
    """Deterministic synthetic init (shapes match the PyTorch module)."""
    ks = jax.random.split(key, 9)
    f = jnp.float32

    def linear_w(k, fan_in, fan_out):
        bound = 1.0 / math.sqrt(fan_in)
        return jax.random.uniform(k, (fan_in, fan_out), f, -bound, bound)

    def linear_b(k, fan_in, fan_out):
        bound = 1.0 / math.sqrt(fan_in)
        return jax.random.uniform(k, (1, fan_out), f, -bound, bound)

    return dict(
        token_embedding=jax.random.normal(ks[0], (num_embeddings, EMBED_DIM), f),
        position_embedding=jax.random.normal(ks[1], (max_num_token, EMBED_DIM), f),
        ln1_g=jnp.ones((1, EMBED_DIM), f),
        ln1_b=jnp.zeros((1, EMBED_DIM), f),
        w_qkv=linear_w(ks[2], EMBED_DIM, 3 * INNER_DIM),                 # no bias
        w_out=linear_w(ks[3], INNER_DIM, EMBED_DIM),
        b_out=linear_b(ks[4], INNER_DIM, EMBED_DIM),
        ln2_g=jnp.ones((1, EMBED_DIM), f),
        ln2_b=jnp.zeros((1, EMBED_DIM), f),
        w_ff1=linear_w(ks[5], EMBED_DIM, MLP_DIM),
        b_ff1=linear_b(ks[6], EMBED_DIM, MLP_DIM),
        w_ff2=linear_w(ks[7], MLP_DIM, EMBED_DIM),
        b_ff2=linear_b(ks[8], MLP_DIM, EMBED_DIM),
    )


if __name__ == "__main__":
    key = jax.random.PRNGKey(0)
    k_param, k_ids = jax.random.split(key)

    max_num_token = 16
    num_embeddings = 50
    B, S = 2, 8                                   # small test shapes

    params = init_params(k_param, num_embeddings, max_num_token)
    prepared = prepare_params(params, seq_len=S)  # one-time weight prep
    token_ids = jax.random.randint(k_ids, (B, S), 0, num_embeddings,
                                   dtype=jnp.int32)

    out = transformer_embedding_forward(token_ids, prepared)
    out = jax.block_until_ready(out)
    assert out.shape == (B, EMBED_DIM), out.shape
    assert bool(jnp.all(jnp.isfinite(out)))
    print("KERNEL_OK")
</pallas_src>

<mosaic_0001>
module attributes {stable_mosaic.version = 11 : i64} {
  func.func @transformer_embedding_kernel(%arg0: i32, %arg1: memref<2x8x1xi32, #tpu.memory_space<vmem>>, %arg2: memref<50x32xf32, #tpu.memory_space<vmem>>, %arg3: memref<8x32xf32, #tpu.memory_space<vmem>>, %arg4: memref<1x32xf32, #tpu.memory_space<vmem>>, %arg5: memref<1x32xf32, #tpu.memory_space<vmem>>, %arg6: memref<32x2304xbf16, #tpu.memory_space<vmem>>, %arg7: memref<768x32xbf16, #tpu.memory_space<vmem>>, %arg8: memref<1x32xf32, #tpu.memory_space<vmem>>, %arg9: memref<1x32xf32, #tpu.memory_space<vmem>>, %arg10: memref<1x32xf32, #tpu.memory_space<vmem>>, %arg11: memref<32x3072xbf16, #tpu.memory_space<vmem>>, %arg12: memref<1x3072xf32, #tpu.memory_space<vmem>>, %arg13: memref<3072x32xbf16, #tpu.memory_space<vmem>>, %arg14: memref<1x32xf32, #tpu.memory_space<vmem>>, %arg15: memref<1x2x32xf32, #tpu.memory_space<vmem>>) attributes {dimension_semantics = [#tpu.dimension_semantics<parallel>], iteration_bounds = array<i64: 1>, scalar_prefetch = 0 : i64, scratch_operands = 0 : i64, tpu.core_type = #tpu.core_type<tc>, window_params = [{transform_indices = @transform_0, window_bounds = array<i64: 2, 8, 1>}, {pipeline_mode = #tpu.pipeline_mode<synchronous>, transform_indices = @transform_1, window_bounds = array<i64: 50, 32>}, {pipeline_mode = #tpu.pipeline_mode<synchronous>, transform_indices = @transform_2, window_bounds = array<i64: 8, 32>}, {pipeline_mode = #tpu.pipeline_mode<synchronous>, transform_indices = @transform_3, window_bounds = array<i64: 1, 32>}, {pipeline_mode = #tpu.pipeline_mode<synchronous>, transform_indices = @transform_4, window_bounds = array<i64: 1, 32>}, {pipeline_mode = #tpu.pipeline_mode<synchronous>, transform_indices = @transform_5, window_bounds = array<i64: 32, 2304>}, {pipeline_mode = #tpu.pipeline_mode<synchronous>, transform_indices = @transform_6, window_bounds = array<i64: 768, 32>}, {pipeline_mode = #tpu.pipeline_mode<synchronous>, transform_indices = @transform_7, window_bounds = array<i64: 1, 32>}, {pipeline_mode = #tpu.pipeline_mode<synchronous>, transform_indices = @transform_8, window_bounds = array<i64: 1, 32>}, {pipeline_mode = #tpu.pipeline_mode<synchronous>, transform_indices = @transform_9, window_bounds = array<i64: 1, 32>}, {pipeline_mode = #tpu.pipeline_mode<synchronous>, transform_indices = @transform_10, window_bounds = array<i64: 32, 3072>}, {pipeline_mode = #tpu.pipeline_mode<synchronous>, transform_indices = @transform_11, window_bounds = array<i64: 1, 3072>}, {pipeline_mode = #tpu.pipeline_mode<synchronous>, transform_indices = @transform_12, window_bounds = array<i64: 3072, 32>}, {pipeline_mode = #tpu.pipeline_mode<synchronous>, transform_indices = @transform_13, window_bounds = array<i64: 1, 32>}, {transform_indices = @transform_14, window_bounds = array<i64: 1, 2, 32>}]} {
    %c0 = arith.constant 0 : index
    %c0_0 = arith.constant 0 : index
    %c0_1 = arith.constant 0 : index
    %0 = vector.load %arg1[%c0, %c0_0, %c0_1] : memref<2x8x1xi32, #tpu.memory_space<vmem>>, vector<2x8x1xi32>
    %1 = vector.shape_cast %0 : vector<2x8x1xi32> to vector<16x1xi32>
    %2 = tpu.iota {dimensions = array<i32: 1>} : vector<16x50xi32>
    %3 = vector.broadcast %1 : vector<16x1xi32> to vector<16x50xi32>
    %4 = arith.cmpi eq, %2, %3 : vector<16x50xi32>
    %5 = arith.extui %4 : vector<16x50xi1> to vector<16x50xi32>
    %6 = arith.sitofp %5 : vector<16x50xi32> to vector<16x50xf32>
    %c0_2 = arith.constant 0 : index
    %c0_3 = arith.constant 0 : index
    %7 = vector.load %arg2[%c0_2, %c0_3] : memref<50x32xf32, #tpu.memory_space<vmem>>, vector<50x32xf32>
    %cst = arith.constant dense<0.000000e+00> : vector<16x32xf32>
    %8 = tpu.matmul %6, %7, %cst {dimension_numbers = #tpu.dot_dimension_numbers<[1], [0], [0], [1], [0, 0, 1, 1], [], []>} : vector<16x50xf32>, vector<50x32xf32>, vector<16x32xf32> -> vector<16x32xf32>
    %9 = vector.shape_cast %8 : vector<16x32xf32> to vector<2x8x32xf32>
    %c0_4 = arith.constant 0 : index
    %c0_5 = arith.constant 0 : index
    %10 = vector.load %arg3[%c0_4, %c0_5] : memref<8x32xf32, #tpu.memory_space<vmem>>, vector<8x32xf32>
    %11 = vector.shape_cast %10 : vector<8x32xf32> to vector<1x8x32xf32>
    %12 = vector.broadcast %11 : vector<1x8x32xf32> to vector<2x8x32xf32>
    %13 = arith.addf %9, %12 : vector<2x8x32xf32>
    %14 = vector.shape_cast %13 : vector<2x8x32xf32> to vector<16x32xf32>
    %c0_6 = arith.constant 0 : index
    %c0_7 = arith.constant 0 : index
    %15 = vector.load %arg4[%c0_6, %c0_7] : memref<1x32xf32, #tpu.memory_space<vmem>>, vector<1x32xf32>
    %c0_8 = arith.constant 0 : index
    %c0_9 = arith.constant 0 : index
    %16 = vector.load %arg5[%c0_8, %c0_9] : memref<1x32xf32, #tpu.memory_space<vmem>>, vector<1x32xf32>
    %cst_10 = arith.constant dense<0.000000e+00> : vector<16xf32>
    %17 = vector.multi_reduction <add>, %14, %cst_10 [1] : vector<16x32xf32> to vector<16xf32>
    %18 = vector.shape_cast %17 : vector<16xf32> to vector<16x1xf32>
    %cst_11 = arith.constant 3.200000e+01 : f32
    %19 = vector.broadcast %cst_11 : f32 to vector<16x1xf32>
    %20 = arith.divf %18, %19 : vector<16x1xf32>
    %21 = vector.broadcast %20 : vector<16x1xf32> to vector<16x32xf32>
    %22 = arith.subf %14, %21 : vector<16x32xf32>
    %23 = arith.mulf %22, %22 : vector<16x32xf32>
    %cst_12 = arith.constant dense<0.000000e+00> : vector<16xf32>
    %24 = vector.multi_reduction <add>, %23, %cst_12 [1] : vector<16x32xf32> to vector<16xf32>
    %25 = vector.shape_cast %24 : vector<16xf32> to vector<16x1xf32>
    %cst_13 = arith.constant 3.200000e+01 : f32
    %26 = vector.broadcast %cst_13 : f32 to vector<16x1xf32>
    %27 = arith.divf %25, %26 : vector<16x1xf32>
    %28 = vector.broadcast %20 : vector<16x1xf32> to vector<16x32xf32>
    %29 = arith.subf %14, %28 : vector<16x32xf32>
    %cst_14 = arith.constant 9.99999974E-6 : f32
    %30 = vector.broadcast %cst_14 : f32 to vector<16x1xf32>
    %31 = arith.addf %27, %30 : vector<16x1xf32>
    %32 = math.rsqrt %31 : vector<16x1xf32>
    %33 = vector.broadcast %32 : vector<16x1xf32> to vector<16x32xf32>
    %34 = arith.mulf %29, %33 : vector<16x32xf32>
    %35 = vector.broadcast %15 : vector<1x32xf32> to vector<16x32xf32>
    %36 = arith.mulf %34, %35 : vector<16x32xf32>
    %37 = vector.broadcast %16 : vector<1x32xf32> to vector<16x32xf32>
    %38 = arith.addf %36, %37 : vector<16x32xf32>
    %39 = arith.truncf %38 : vector<16x32xf32> to vector<16x32xbf16>
    %c0_15 = arith.constant 0 : index
    %c0_16 = arith.constant 0 : index
    %40 = vector.load %arg6[%c0_15, %c0_16] : memref<32x2304xbf16, #tpu.memory_space<vmem>>, vector<32x2304xbf16>
    %cst_17 = arith.constant dense<0.000000e+00> : vector<16x2304xf32>
    %41 = tpu.matmul %39, %40, %cst_17 {dimension_numbers = #tpu.dot_dimension_numbers<[1], [0], [0], [1], [0, 0, 1, 1], [], []>} : vector<16x32xbf16>, vector<32x2304xbf16>, vector<16x2304xf32> -> vector<16x2304xf32>
    %42 = vector.extract_strided_slice %41 {offsets = [0, 0], sizes = [16, 768], strides = [1, 1]} : vector<16x2304xf32> to vector<16x768xf32>
    %43 = vector.extract_strided_slice %41 {offsets = [0, 768], sizes = [16, 768], strides = [1, 1]} : vector<16x2304xf32> to vector<16x768xf32>
    %44 = vector.extract_strided_slice %41 {offsets = [0, 1536], sizes = [16, 768], strides = [1, 1]} : vector<16x2304xf32> to vector<16x768xf32>
    %45 = vector.extract_strided_slice %42 {offsets = [0, 0], sizes = [16, 64], strides = [1, 1]} : vector<16x768xf32> to vector<16x64xf32>
    %46 = vector.extract_strided_slice %42 {offsets = [0, 64], sizes = [16, 64], strides = [1, 1]} : vector<16x768xf32> to vector<16x64xf32>
    %47 = vector.extract_strided_slice %42 {offsets = [0, 128], sizes = [16, 64], strides = [1, 1]} : vector<16x768xf32> to vector<16x64xf32>
    %48 = vector.extract_strided_slice %42 {offsets = [0, 192], sizes = [16, 64], strides = [1, 1]} : vector<16x768xf32> to vector<16x64xf32>
    %49 = vector.extract_strided_slice %42 {offsets = [0, 256], sizes = [16, 64], strides = [1, 1]} : vector<16x768xf32> to vector<16x64xf32>
    %50 = vector.extract_strided_slice %42 {offsets = [0, 320], sizes = [16, 64], strides = [1, 1]} : vector<16x768xf32> to vector<16x64xf32>
    %51 = vector.extract_strided_slice %42 {offsets = [0, 384], sizes = [16, 64], strides = [1, 1]} : vector<16x768xf32> to vector<16x64xf32>
    %52 = vector.extract_strided_slice %42 {offsets = [0, 448], sizes = [16, 64], strides = [1, 1]} : vector<16x768xf32> to vector<16x64xf32>
    %53 = vector.extract_strided_slice %42 {offsets = [0, 512], sizes = [16, 64], strides = [1, 1]} : vector<16x768xf32> to vector<16x64xf32>
    %54 = vector.extract_strided_slice %42 {offsets = [0, 576], sizes = [16, 64], strides = [1, 1]} : vector<16x768xf32> to vector<16x64xf32>
    %55 = vector.extract_strided_slice %42 {offsets = [0, 640], sizes = [16, 64], strides = [1, 1]} : vector<16x768xf32> to vector<16x64xf32>
    %56 = vector.extract_strided_slice %42 {offsets = [0, 704], sizes = [16, 64], strides = [1, 1]} : vector<16x768xf32> to vector<16x64xf32>
    %57 = vector.shape_cast %45 : vector<16x64xf32> to vector<1x16x64xf32>
    %58 = vector.shape_cast %46 : vector<16x64xf32> to vector<1x16x64xf32>
    %59 = vector.shape_cast %47 : vector<16x64xf32> to vector<1x16x64xf32>
    %60 = vector.shape_cast %48 : vector<16x64xf32> to vector<1x16x64xf32>
    %61 = vector.shape_cast %49 : vector<16x64xf32> to vector<1x16x64xf32>
    %62 = vector.shape_cast %50 : vector<16x64xf32> to vector<1x16x64xf32>
    %63 = vector.shape_cast %51 : vector<16x64xf32> to vector<1x16x64xf32>
    %64 = vector.shape_cast %52 : vector<16x64xf32> to vector<1x16x64xf32>
    %65 = vector.shape_cast %53 : vector<16x64xf32> to vector<1x16x64xf32>
    %66 = vector.shape_cast %54 : vector<16x64xf32> to vector<1x16x64xf32>
    %67 = vector.shape_cast %55 : vector<16x64xf32> to vector<1x16x64xf32>
    %68 = vector.shape_cast %56 : vector<16x64xf32> to vector<1x16x64xf32>
    %69 = tpu.concatenate %57, %58, %59, %60, %61, %62, %63, %64, %65, %66, %67, %68 in 0 : vector<1x16x64xf32>, vector<1x16x64xf32>, vector<1x16x64xf32>, vector<1x16x64xf32>, vector<1x16x64xf32>, vector<1x16x64xf32>, vector<1x16x64xf32>, vector<1x16x64xf32>, vector<1x16x64xf32>, vector<1x16x64xf32>, vector<1x16x64xf32>, vector<1x16x64xf32> -> vector<12x16x64xf32>
    %70 = vector.shape_cast %69 : vector<12x16x64xf32> to vector<24x8x64xf32>
    %71 = arith.truncf %70 : vector<24x8x64xf32> to vector<24x8x64xbf16>
    %72 = vector.extract_strided_slice %43 {offsets = [0, 0], sizes = [16, 64], strides = [1, 1]} : vector<16x768xf32> to vector<16x64xf32>
    %73 = vector.extract_strided_slice %43 {offsets = [0, 64], sizes = [16, 64], strides = [1, 1]} : vector<16x768xf32> to vector<16x64xf32>
    %74 = vector.extract_strided_slice %43 {offsets = [0, 128], sizes = [16, 64], strides = [1, 1]} : vector<16x768xf32> to vector<16x64xf32>
    %75 = vector.extract_strided_slice %43 {offsets = [0, 192], sizes = [16, 64], strides = [1, 1]} : vector<16x768xf32> to vector<16x64xf32>
    %76 = vector.extract_strided_slice %43 {offsets = [0, 256], sizes = [16, 64], strides = [1, 1]} : vector<16x768xf32> to vector<16x64xf32>
    %77 = vector.extract_strided_slice %43 {offsets = [0, 320], sizes = [16, 64], strides = [1, 1]} : vector<16x768xf32> to vector<16x64xf32>
    %78 = vector.extract_strided_slice %43 {offsets = [0, 384], sizes = [16, 64], strides = [1, 1]} : vector<16x768xf32> to vector<16x64xf32>
    %79 = vector.extract_strided_slice %43 {offsets = [0, 448], sizes = [16, 64], strides = [1, 1]} : vector<16x768xf32> to vector<16x64xf32>
    %80 = vector.extract_strided_slice %43 {offsets = [0, 512], sizes = [16, 64], strides = [1, 1]} : vector<16x768xf32> to vector<16x64xf32>
    %81 = vector.extract_strided_slice %43 {offsets = [0, 576], sizes = [16, 64], strides = [1, 1]} : vector<16x768xf32> to vector<16x64xf32>
    %82 = vector.extract_strided_slice %43 {offsets = [0, 640], sizes = [16, 64], strides = [1, 1]} : vector<16x768xf32> to vector<16x64xf32>
    %83 = vector.extract_strided_slice %43 {offsets = [0, 704], sizes = [16, 64], strides = [1, 1]} : vector<16x768xf32> to vector<16x64xf32>
    %84 = vector.shape_cast %72 : vector<16x64xf32> to vector<1x16x64xf32>
    %85 = vector.shape_cast %73 : vector<16x64xf32> to vector<1x16x64xf32>
    %86 = vector.shape_cast %74 : vector<16x64xf32> to vector<1x16x64xf32>
    %87 = vector.shape_cast %75 : vector<16x64xf32> to vector<1x16x64xf32>
    %88 = vector.shape_cast %76 : vector<16x64xf32> to vector<1x16x64xf32>
    %89 = vector.shape_cast %77 : vector<16x64xf32> to vector<1x16x64xf32>
    %90 = vector.shape_cast %78 : vector<16x64xf32> to vector<1x16x64xf32>
    %91 = vector.shape_cast %79 : vector<16x64xf32> to vector<1x16x64xf32>
    %92 = vector.shape_cast %80 : vector<16x64xf32> to vector<1x16x64xf32>
    %93 = vector.shape_cast %81 : vector<16x64xf32> to vector<1x16x64xf32>
    %94 = vector.shape_cast %82 : vector<16x64xf32> to vector<1x16x64xf32>
    %95 = vector.shape_cast %83 : vector<16x64xf32> to vector<1x16x64xf32>
    %96 = tpu.concatenate %84, %85, %86, %87, %88, %89, %90, %91, %92, %93, %94, %95 in 0 : vector<1x16x64xf32>, vector<1x16x64xf32>, vector<1x16x64xf32>, vector<1x16x64xf32>, vector<1x16x64xf32>, vector<1x16x64xf32>, vector<1x16x64xf32>, vector<1x16x64xf32>, vector<1x16x64xf32>, vector<1x16x64xf32>, vector<1x16x64xf32>, vector<1x16x64xf32> -> vector<12x16x64xf32>
    %97 = vector.shape_cast %96 : vector<12x16x64xf32> to vector<24x8x64xf32>
    %98 = arith.truncf %97 : vector<24x8x64xf32> to vector<24x8x64xbf16>
    %99 = vector.extract_strided_slice %44 {offsets = [0, 0], sizes = [16, 64], strides = [1, 1]} : vector<16x768xf32> to vector<16x64xf32>
    %100 = vector.extract_strided_slice %44 {offsets = [0, 64], sizes = [16, 64], strides = [1, 1]} : vector<16x768xf32> to vector<16x64xf32>
    %101 = vector.extract_strided_slice %44 {offsets = [0, 128], sizes = [16, 64], strides = [1, 1]} : vector<16x768xf32> to vector<16x64xf32>
    %102 = vector.extract_strided_slice %44 {offsets = [0, 192], sizes = [16, 64], strides = [1, 1]} : vector<16x768xf32> to vector<16x64xf32>
    %103 = vector.extract_strided_slice %44 {offsets = [0, 256], sizes = [16, 64], strides = [1, 1]} : vector<16x768xf32> to vector<16x64xf32>
    %104 = vector.extract_strided_slice %44 {offsets = [0, 320], sizes = [16, 64], strides = [1, 1]} : vector<16x768xf32> to vector<16x64xf32>
    %105 = vector.extract_strided_slice %44 {offsets = [0, 384], sizes = [16, 64], strides = [1, 1]} : vector<16x768xf32> to vector<16x64xf32>
    %106 = vector.extract_strided_slice %44 {offsets = [0, 448], sizes = [16, 64], strides = [1, 1]} : vector<16x768xf32> to vector<16x64xf32>
    %107 = vector.extract_strided_slice %44 {offsets = [0, 512], sizes = [16, 64], strides = [1, 1]} : vector<16x768xf32> to vector<16x64xf32>
    %108 = vector.extract_strided_slice %44 {offsets = [0, 576], sizes = [16, 64], strides = [1, 1]} : vector<16x768xf32> to vector<16x64xf32>
    %109 = vector.extract_strided_slice %44 {offsets = [0, 640], sizes = [16, 64], strides = [1, 1]} : vector<16x768xf32> to vector<16x64xf32>
    %110 = vector.extract_strided_slice %44 {offsets = [0, 704], sizes = [16, 64], strides = [1, 1]} : vector<16x768xf32> to vector<16x64xf32>
    %111 = vector.shape_cast %99 : vector<16x64xf32> to vector<1x16x64xf32>
    %112 = vector.shape_cast %100 : vector<16x64xf32> to vector<1x16x64xf32>
    %113 = vector.shape_cast %101 : vector<16x64xf32> to vector<1x16x64xf32>
    %114 = vector.shape_cast %102 : vector<16x64xf32> to vector<1x16x64xf32>
    %115 = vector.shape_cast %103 : vector<16x64xf32> to vector<1x16x64xf32>
    %116 = vector.shape_cast %104 : vector<16x64xf32> to vector<1x16x64xf32>
    %117 = vector.shape_cast %105 : vector<16x64xf32> to vector<1x16x64xf32>
    %118 = vector.shape_cast %106 : vector<16x64xf32> to vector<1x16x64xf32>
    %119 = vector.shape_cast %107 : vector<16x64xf32> to vector<1x16x64xf32>
    %120 = vector.shape_cast %108 : vector<16x64xf32> to vector<1x16x64xf32>
    %121 = vector.shape_cast %109 : vector<16x64xf32> to vector<1x16x64xf32>
    %122 = vector.shape_cast %110 : vector<16x64xf32> to vector<1x16x64xf32>
    %123 = tpu.concatenate %111, %112, %113, %114, %115, %116, %117, %118, %119, %120, %121, %122 in 0 : vector<1x16x64xf32>, vector<1x16x64xf32>, vector<1x16x64xf32>, vector<1x16x64xf32>, vector<1x16x64xf32>, vector<1x16x64xf32>, vector<1x16x64xf32>, vector<1x16x64xf32>, vector<1x16x64xf32>, vector<1x16x64xf32>, vector<1x16x64xf32>, vector<1x16x64xf32> -> vector<12x16x64xf32>
    %124 = vector.shape_cast %123 : vector<12x16x64xf32> to vector<24x8x64xf32>
    %125 = arith.truncf %124 : vector<24x8x64xf32> to vector<24x8x64xbf16>
    "tpu.trace_start"() <{level = 10 : i32, message = "bqd,bkd->bqk"}> : () -> ()
    %cst_18 = arith.constant dense<0.000000e+00> : vector<24x8x8xf32>
    %126 = tpu.matmul %71, %98, %cst_18 {dimension_numbers = #tpu.dot_dimension_numbers<[2], [2], [1], [1], [0, 0, 0, 1, 1, 1], [0], [0]>} : vector<24x8x64xbf16>, vector<24x8x64xbf16>, vector<24x8x8xf32> -> vector<24x8x8xf32>
    "tpu.trace_stop"() : () -> ()
    %cst_19 = arith.constant dense<0xFF800000> : vector<24x8xf32>
    %127 = vector.multi_reduction <maximumf>, %126, %cst_19 [2] : vector<24x8x8xf32> to vector<24x8xf32>
    %128 = vector.shape_cast %127 : vector<24x8xf32> to vector<24x8x1xf32>
    %129 = vector.broadcast %128 : vector<24x8x1xf32> to vector<24x8x8xf32>
    %130 = arith.subf %126, %129 : vector<24x8x8xf32>
    %131 = math.exp %130 : vector<24x8x8xf32>
    %cst_20 = arith.constant dense<0.000000e+00> : vector<24x8xf32>
    %132 = vector.multi_reduction <add>, %131, %cst_20 [2] : vector<24x8x8xf32> to vector<24x8xf32>
    %133 = vector.shape_cast %132 : vector<24x8xf32> to vector<24x8x1xf32>
    %134 = vector.broadcast %133 : vector<24x8x1xf32> to vector<24x8x8xf32>
    %135 = arith.divf %131, %134 : vector<24x8x8xf32>
    %136 = arith.truncf %135 : vector<24x8x8xf32> to vector<24x8x8xbf16>
    "tpu.trace_start"() <{level = 10 : i32, message = "bqk,bkd->bqd"}> : () -> ()
    %cst_21 = arith.constant dense<0.000000e+00> : vector<24x8x64xf32>
    %137 = tpu.matmul %136, %125, %cst_21 {dimension_numbers = #tpu.dot_dimension_numbers<[2], [1], [1], [2], [0, 0, 0, 1, 1, 2], [0], [0]>} : vector<24x8x8xbf16>, vector<24x8x64xbf16>, vector<24x8x64xf32> -> vector<24x8x64xf32>
    "tpu.trace_stop"() : () -> ()
    %138 = vector.shape_cast %137 : vector<24x8x64xf32> to vector<12x16x64xf32>
    %139 = vector.extract_strided_slice %138 {offsets = [0, 0, 0], sizes = [1, 16, 64], strides = [1, 1, 1]} : vector<12x16x64xf32> to vector<1x16x64xf32>
    %140 = vector.shape_cast %139 : vector<1x16x64xf32> to vector<16x64xf32>
    %141 = vector.extract_strided_slice %138 {offsets = [1, 0, 0], sizes = [1, 16, 64], strides = [1, 1, 1]} : vector<12x16x64xf32> to vector<1x16x64xf32>
    %142 = vector.shape_cast %141 : vector<1x16x64xf32> to vector<16x64xf32>
    %143 = vector.extract_strided_slice %138 {offsets = [2, 0, 0], sizes = [1, 16, 64], strides = [1, 1, 1]} : vector<12x16x64xf32> to vector<1x16x64xf32>
    %144 = vector.shape_cast %143 : vector<1x16x64xf32> to vector<16x64xf32>
    %145 = vector.extract_strided_slice %138 {offsets = [3, 0, 0], sizes = [1, 16, 64], strides = [1, 1, 1]} : vector<12x16x64xf32> to vector<1x16x64xf32>
    %146 = vector.shape_cast %145 : vector<1x16x64xf32> to vector<16x64xf32>
    %147 = vector.extract_strided_slice %138 {offsets = [4, 0, 0], sizes = [1, 16, 64], strides = [1, 1, 1]} : vector<12x16x64xf32> to vector<1x16x64xf32>
    %148 = vector.shape_cast %147 : vector<1x16x64xf32> to vector<16x64xf32>
    %149 = vector.extract_strided_slice %138 {offsets = [5, 0, 0], sizes = [1, 16, 64], strides = [1, 1, 1]} : vector<12x16x64xf32> to vector<1x16x64xf32>
    %150 = vector.shape_cast %149 : vector<1x16x64xf32> to vector<16x64xf32>
    %151 = vector.extract_strided_slice %138 {offsets = [6, 0, 0], sizes = [1, 16, 64], strides = [1, 1, 1]} : vector<12x16x64xf32> to vector<1x16x64xf32>
    %152 = vector.shape_cast %151 : vector<1x16x64xf32> to vector<16x64xf32>
    %153 = vector.extract_strided_slice %138 {offsets = [7, 0, 0], sizes = [1, 16, 64], strides = [1, 1, 1]} : vector<12x16x64xf32> to vector<1x16x64xf32>
    %154 = vector.shape_cast %153 : vector<1x16x64xf32> to vector<16x64xf32>
    %155 = vector.extract_strided_slice %138 {offsets = [8, 0, 0], sizes = [1, 16, 64], strides = [1, 1, 1]} : vector<12x16x64xf32> to vector<1x16x64xf32>
    %156 = vector.shape_cast %155 : vector<1x16x64xf32> to vector<16x64xf32>
    %157 = vector.extract_strided_slice %138 {offsets = [9, 0, 0], sizes = [1, 16, 64], strides = [1, 1, 1]} : vector<12x16x64xf32> to vector<1x16x64xf32>
    %158 = vector.shape_cast %157 : vector<1x16x64xf32> to vector<16x64xf32>
    %159 = vector.extract_strided_slice %138 {offsets = [10, 0, 0], sizes = [1, 16, 64], strides = [1, 1, 1]} : vector<12x16x64xf32> to vector<1x16x64xf32>
    %160 = vector.shape_cast %159 : vector<1x16x64xf32> to vector<16x64xf32>
    %161 = vector.extract_strided_slice %138 {offsets = [11, 0, 0], sizes = [1, 16, 64], strides = [1, 1, 1]} : vector<12x16x64xf32> to vector<1x16x64xf32>
    %162 = vector.shape_cast %161 : vector<1x16x64xf32> to vector<16x64xf32>
    %163 = tpu.concatenate %140, %142, %144, %146, %148, %150, %152, %154, %156, %158, %160, %162 in 1 : vector<16x64xf32>, vector<16x64xf32>, vector<16x64xf32>, vector<16x64xf32>, vector<16x64xf32>, vector<16x64xf32>, vector<16x64xf32>, vector<16x64xf32>, vector<16x64xf32>, vector<16x64xf32>, vector<16x64xf32>, vector<16x64xf32> -> vector<16x768xf32>
    %164 = arith.truncf %163 : vector<16x768xf32> to vector<16x768xbf16>
    %c0_22 = arith.constant 0 : index
    %c0_23 = arith.constant 0 : index
    %165 = vector.load %arg7[%c0_22, %c0_23] : memref<768x32xbf16, #tpu.memory_space<vmem>>, vector<768x32xbf16>
    %cst_24 = arith.constant dense<0.000000e+00> : vector<16x32xf32>
    %166 = tpu.matmul %164, %165, %cst_24 {dimension_numbers = #tpu.dot_dimension_numbers<[1], [0], [0], [1], [0, 0, 1, 1], [], []>} : vector<16x768xbf16>, vector<768x32xbf16>, vector<16x32xf32> -> vector<16x32xf32>
    %c0_25 = arith.constant 0 : index
    %c0_26 = arith.constant 0 : index
    %167 = vector.load %arg8[%c0_25, %c0_26] : memref<1x32xf32, #tpu.memory_space<vmem>>, vector<1x32xf32>
    %168 = vector.broadcast %167 : vector<1x32xf32> to vector<16x32xf32>
    %169 = arith.addf %166, %168 : vector<16x32xf32>
    %170 = arith.addf %14, %169 : vector<16x32xf32>
    %c0_27 = arith.constant 0 : index
    %c0_28 = arith.constant 0 : index
    %171 = vector.load %arg9[%c0_27, %c0_28] : memref<1x32xf32, #tpu.memory_space<vmem>>, vector<1x32xf32>
    %c0_29 = arith.constant 0 : index
    %c0_30 = arith.constant 0 : index
    %172 = vector.load %arg10[%c0_29, %c0_30] : memref<1x32xf32, #tpu.memory_space<vmem>>, vector<1x32xf32>
    %cst_31 = arith.constant dense<0.000000e+00> : vector<16xf32>
    %173 = vector.multi_reduction <add>, %170, %cst_31 [1] : vector<16x32xf32> to vector<16xf32>
    %174 = vector.shape_cast %173 : vector<16xf32> to vector<16x1xf32>
    %cst_32 = arith.constant 3.200000e+01 : f32
    %175 = vector.broadcast %cst_32 : f32 to vector<16x1xf32>
    %176 = arith.divf %174, %175 : vector<16x1xf32>
    %177 = vector.broadcast %176 : vector<16x1xf32> to vector<16x32xf32>
    %178 = arith.subf %170, %177 : vector<16x32xf32>
    %179 = arith.mulf %178, %178 : vector<16x32xf32>
    %cst_33 = arith.constant dense<0.000000e+00> : vector<16xf32>
    %180 = vector.multi_reduction <add>, %179, %cst_33 [1] : vector<16x32xf32> to vector<16xf32>
    %181 = vector.shape_cast %180 : vector<16xf32> to vector<16x1xf32>
    %cst_34 = arith.constant 3.200000e+01 : f32
    %182 = vector.broadcast %cst_34 : f32 to vector<16x1xf32>
    %183 = arith.divf %181, %182 : vector<16x1xf32>
    %184 = vector.broadcast %176 : vector<16x1xf32> to vector<16x32xf32>
    %185 = arith.subf %170, %184 : vector<16x32xf32>
    %cst_35 = arith.constant 9.99999974E-6 : f32
    %186 = vector.broadcast %cst_35 : f32 to vector<16x1xf32>
    %187 = arith.addf %183, %186 : vector<16x1xf32>
    %188 = math.rsqrt %187 : vector<16x1xf32>
    %189 = vector.broadcast %188 : vector<16x1xf32> to vector<16x32xf32>
    %190 = arith.mulf %185, %189 : vector<16x32xf32>
    %191 = vector.broadcast %171 : vector<1x32xf32> to vector<16x32xf32>
    %192 = arith.mulf %190, %191 : vector<16x32xf32>
    %193 = vector.broadcast %172 : vector<1x32xf32> to vector<16x32xf32>
    %194 = arith.addf %192, %193 : vector<16x32xf32>
    %195 = arith.truncf %194 : vector<16x32xf32> to vector<16x32xbf16>
    %c0_36 = arith.constant 0 : index
    %c0_37 = arith.constant 0 : index
    %196 = vector.load %arg11[%c0_36, %c0_37] : memref<32x3072xbf16, #tpu.memory_space<vmem>>, vector<32x3072xbf16>
    %cst_38 = arith.constant dense<0.000000e+00> : vector<16x3072xf32>
    %197 = tpu.matmul %195, %196, %cst_38 {dimension_numbers = #tpu.dot_dimension_numbers<[1], [0], [0], [1], [0, 0, 1, 1], [], []>} : vector<16x32xbf16>, vector<32x3072xbf16>, vector<16x3072xf32> -> vector<16x3072xf32>
    %c0_39 = arith.constant 0 : index
    %c0_40 = arith.constant 0 : index
    %198 = vector.load %arg12[%c0_39, %c0_40] : memref<1x3072xf32, #tpu.memory_space<vmem>>, vector<1x3072xf32>
    %199 = vector.broadcast %198 : vector<1x3072xf32> to vector<16x3072xf32>
    %200 = arith.addf %197, %199 : vector<16x3072xf32>
    %201 = arith.mulf %200, %200 : vector<16x3072xf32>
    %202 = arith.mulf %200, %201 : vector<16x3072xf32>
    %cst_41 = arith.constant 4.471500e-02 : f32
    %203 = vector.broadcast %cst_41 : f32 to vector<16x3072xf32>
    %204 = arith.mulf %203, %202 : vector<16x3072xf32>
    %205 = arith.addf %200, %204 : vector<16x3072xf32>
    %cst_42 = arith.constant 0.797884583 : f32
    %206 = vector.broadcast %cst_42 : f32 to vector<16x3072xf32>
    %207 = arith.mulf %206, %205 : vector<16x3072xf32>
    %208 = math.tanh %207 : vector<16x3072xf32>
    %cst_43 = arith.constant 1.000000e+00 : f32
    %209 = vector.broadcast %cst_43 : f32 to vector<16x3072xf32>
    %210 = arith.addf %209, %208 : vector<16x3072xf32>
    %cst_44 = arith.constant 5.000000e-01 : f32
    %211 = vector.broadcast %cst_44 : f32 to vector<16x3072xf32>
    %212 = arith.mulf %211, %210 : vector<16x3072xf32>
    %213 = arith.mulf %200, %212 : vector<16x3072xf32>
    %214 = arith.truncf %213 : vector<16x3072xf32> to vector<16x3072xbf16>
    %c0_45 = arith.constant 0 : index
    %c0_46 = arith.constant 0 : index
    %215 = vector.load %arg13[%c0_45, %c0_46] : memref<3072x32xbf16, #tpu.memory_space<vmem>>, vector<3072x32xbf16>
    %cst_47 = arith.constant dense<0.000000e+00> : vector<16x32xf32>
    %216 = tpu.matmul %214, %215, %cst_47 {dimension_numbers = #tpu.dot_dimension_numbers<[1], [0], [0], [1], [0, 0, 1, 1], [], []>} : vector<16x3072xbf16>, vector<3072x32xbf16>, vector<16x32xf32> -> vector<16x32xf32>
    %c0_48 = arith.constant 0 : index
    %c0_49 = arith.constant 0 : index
    %217 = vector.load %arg14[%c0_48, %c0_49] : memref<1x32xf32, #tpu.memory_space<vmem>>, vector<1x32xf32>
    %218 = vector.broadcast %217 : vector<1x32xf32> to vector<16x32xf32>
    %219 = arith.addf %216, %218 : vector<16x32xf32>
    %220 = arith.addf %170, %219 : vector<16x32xf32>
    %221 = vector.shape_cast %220 : vector<16x32xf32> to vector<2x8x32xf32>
    %cst_50 = arith.constant dense<0.000000e+00> : vector<2x32xf32>
    %222 = vector.multi_reduction <add>, %221, %cst_50 [1] : vector<2x8x32xf32> to vector<2x32xf32>
    %cst_51 = arith.constant 8.000000e+00 : f32
    %223 = vector.broadcast %cst_51 : f32 to vector<2x32xf32>
    %224 = arith.divf %222, %223 : vector<2x32xf32>
    %c0_52 = arith.constant 0 : index
    %c0_53 = arith.constant 0 : index
    %c0_54 = arith.constant 0 : index
    %225 = vector.load %arg15[%c0_52, %c0_53, %c0_54] : memref<1x2x32xf32, #tpu.memory_space<vmem>>, vector<1x2x32xf32>
    %226 = vector.shape_cast %225 : vector<1x2x32xf32> to vector<2x32xf32>
    %227 = vector.shape_cast %224 : vector<2x32xf32> to vector<1x2x32xf32>
    tpu.vector_store %arg15[%c0_52, %c0_53, %c0_54], %227 {strides = array<i32>} : memref<1x2x32xf32, #tpu.memory_space<vmem>>, vector<1x2x32xf32>,
    return
  }
  func.func @transform_0(%arg0: i32) -> (i32, i32, i32) {
    %c0_i32 = arith.constant 0 : i32
    %c0_i32_0 = arith.constant 0 : i32
    %c0_i32_1 = arith.constant 0 : i32
    return %arg0, %c0_i32, %c0_i32_0 : i32, i32, i32
  }
  func.func @transform_1(%arg0: i32) -> (i32, i32) {
    %c0_i32 = arith.constant 0 : i32
    %c0_i32_0 = arith.constant 0 : i32
    %c0_i32_1 = arith.constant 0 : i32
    return %c0_i32, %c0_i32_0 : i32, i32
  }
  func.func @transform_2(%arg0: i32) -> (i32, i32) {
    %c0_i32 = arith.constant 0 : i32
    %c0_i32_0 = arith.constant 0 : i32
    %c0_i32_1 = arith.constant 0 : i32
    return %c0_i32, %c0_i32_0 : i32, i32
  }
  func.func @transform_3(%arg0: i32) -> (i32, i32) {
    %c0_i32 = arith.constant 0 : i32
    %c0_i32_0 = arith.constant 0 : i32
    %c0_i32_1 = arith.constant 0 : i32
    return %c0_i32, %c0_i32_0 : i32, i32
  }
  func.func @transform_4(%arg0: i32) -> (i32, i32) {
    %c0_i32 = arith.constant 0 : i32
    %c0_i32_0 = arith.constant 0 : i32
    %c0_i32_1 = arith.constant 0 : i32
    return %c0_i32, %c0_i32_0 : i32, i32
  }
  func.func @transform_5(%arg0: i32) -> (i32, i32) {
    %c0_i32 = arith.constant 0 : i32
    %c0_i32_0 = arith.constant 0 : i32
    %c0_i32_1 = arith.constant 0 : i32
    return %c0_i32, %c0_i32_0 : i32, i32
  }
  func.func @transform_6(%arg0: i32) -> (i32, i32) {
    %c0_i32 = arith.constant 0 : i32
    %c0_i32_0 = arith.constant 0 : i32
    %c0_i32_1 = arith.constant 0 : i32
    return %c0_i32, %c0_i32_0 : i32, i32
  }
  func.func @transform_7(%arg0: i32) -> (i32, i32) {
    %c0_i32 = arith.constant 0 : i32
    %c0_i32_0 = arith.constant 0 : i32
    %c0_i32_1 = arith.constant 0 : i32
    return %c0_i32, %c0_i32_0 : i32, i32
  }
  func.func @transform_8(%arg0: i32) -> (i32, i32) {
    %c0_i32 = arith.constant 0 : i32
    %c0_i32_0 = arith.constant 0 : i32
    %c0_i32_1 = arith.constant 0 : i32
    return %c0_i32, %c0_i32_0 : i32, i32
  }
  func.func @transform_9(%arg0: i32) -> (i32, i32) {
    %c0_i32 = arith.constant 0 : i32
    %c0_i32_0 = arith.constant 0 : i32
    %c0_i32_1 = arith.constant 0 : i32
    return %c0_i32, %c0_i32_0 : i32, i32
  }
  func.func @transform_10(%arg0: i32) -> (i32, i32) {
    %c0_i32 = arith.constant 0 : i32
    %c0_i32_0 = arith.constant 0 : i32
    %c0_i32_1 = arith.constant 0 : i32
    return %c0_i32, %c0_i32_0 : i32, i32
  }
  func.func @transform_11(%arg0: i32) -> (i32, i32) {
    %c0_i32 = arith.constant 0 : i32
    %c0_i32_0 = arith.constant 0 : i32
    %c0_i32_1 = arith.constant 0 : i32
    return %c0_i32, %c0_i32_0 : i32, i32
  }
  func.func @transform_12(%arg0: i32) -> (i32, i32) {
    %c0_i32 = arith.constant 0 : i32
    %c0_i32_0 = arith.constant 0 : i32
    %c0_i32_1 = arith.constant 0 : i32
    return %c0_i32, %c0_i32_0 : i32, i32
  }
  func.func @transform_13(%arg0: i32) -> (i32, i32) {
    %c0_i32 = arith.constant 0 : i32
    %c0_i32_0 = arith.constant 0 : i32
    %c0_i32_1 = arith.constant 0 : i32
    return %c0_i32, %c0_i32_0 : i32, i32
  }
  func.func @transform_14(%arg0: i32) -> (i32, i32, i32) {
    %c0_i32 = arith.constant 0 : i32
    %c0_i32_0 = arith.constant 0 : i32
    %c0_i32_1 = arith.constant 0 : i32
    return %arg0, %c0_i32, %c0_i32_0 : i32, i32, i32
  }
}

</mosaic_0001>

<llo_original>
// kernel: tpu_custom_call.1
$region0: #{tpu_custom_call.1}
  #allocation0 [shape = 'u32[]', space=smem, size = 0x4, offset = 0x4, fixed_abs, tag = 'smem constant byte address 0x4 - core index']
  #allocation1 [shape = 'u32[72,128]{1,0:T(1,128)}', space=vmem, size = 0x9000, scoped, tag = 'internal scratch']
  %s0 = inlined_call_operand.vmem [shape: s32[2,8,1], index: 0, kind: input, shape index: {}]
  %s1 = inlined_call_operand.vmem [shape: f32[50,32], index: 1, kind: input, shape index: {}]
  %s2 = inlined_call_operand.vmem [shape: f32[8,32], index: 2, kind: input, shape index: {}]
  %s3 = inlined_call_operand.vmem [shape: f32[1,32], index: 3, kind: input, shape index: {}]
  %s4 = inlined_call_operand.vmem [shape: f32[1,32], index: 4, kind: input, shape index: {}]
  %s5 = inlined_call_operand.vmem [shape: bf16[32,2304], index: 5, kind: input, shape index: {}]
  %s6 = inlined_call_operand.vmem [shape: bf16[768,32], index: 6, kind: input, shape index: {}]
  %s7 = inlined_call_operand.vmem [shape: f32[1,32], index: 7, kind: input, shape index: {}]
  %s8 = inlined_call_operand.vmem [shape: f32[1,32], index: 8, kind: input, shape index: {}]
  %s9 = inlined_call_operand.vmem [shape: f32[1,32], index: 9, kind: input, shape index: {}]
  %s10 = inlined_call_operand.vmem [shape: bf16[32,3072], index: 10, kind: input, shape index: {}]
  %s11 = inlined_call_operand.vmem [shape: f32[1,3072], index: 11, kind: input, shape index: {}]
  %s12 = inlined_call_operand.vmem [shape: bf16[3072,32], index: 12, kind: input, shape index: {}]
  %s13 = inlined_call_operand.vmem [shape: f32[1,32], index: 13, kind: input, shape index: {}]
  %s14 = inlined_call_operand.hbm [shape: f32[1,2,32], index: 14, kind: output, shape index: {}]
  %s15 = sld [smem:[#allocation0]]
  $region66: #{tpu_custom_call.1} parent=0
    _
  %s17 = ssub.s32 1, %s15
  %s18 = scalar_select 0, %s17, %s15
  $region1: #{tpu_custom_call.1} parent=0
    #allocation2 [shape = 'u8[1024]{0}', space=vmem, size = 0x400, scoped, tag = 'output window, operand 0, single buffered']
    #allocation3 [shape = 's32[1]{0}', space=sflag, size = 0x4, scoped, tag = 'scoped memory for tpu_custom_call.1']
    %19 = vsyncpa [#allocation3], 0
    // Predicated region
    $region2: #{tpu_custom_call.1} parent=1 // pred_check
      _
    $region3: #{tpu_custom_call.1} parent=1 // pred_check_branch
      %21 = sbr.rel (0) target = $region5
    $region4: #{tpu_custom_call.1} parent=1 // pred_region
      _
    $region5: #{tpu_custom_call.1} parent=1 // pred_fallthru
      _
    // Predicated region
    $region6: #{tpu_custom_call.1} parent=1 // pred_check
      _
    $region7: #{tpu_custom_call.1} parent=1 // pred_check_branch
      %23 = sbr.rel (0) target = $region9
    $region8: #{tpu_custom_call.1} parent=1 // pred_region
      _
    $region9: #{tpu_custom_call.1} parent=1 // pred_fallthru
      _
    // Predicated region
    $region10: #{tpu_custom_call.1} parent=1 // pred_check
      _
    $region11: #{tpu_custom_call.1} parent=1 // pred_check_branch
      %25 = sbr.rel (0) target = $region13
    $region12: #{tpu_custom_call.1} parent=1 // pred_region
      _
    $region13: #{tpu_custom_call.1} parent=1 // pred_fallthru
      _
    // Predicated region
    $region14: #{tpu_custom_call.1} parent=1 // pred_check
      _
    $region15: #{tpu_custom_call.1} parent=1 // pred_check_branch
      %27 = sbr.rel (0) target = $region17
    $region16: #{tpu_custom_call.1} parent=1 // pred_region
      _
    $region17: #{tpu_custom_call.1} parent=1 // pred_fallthru
      _
    // Predicated region
    $region18: #{tpu_custom_call.1} parent=1 // pred_check
      _
    $region19: #{tpu_custom_call.1} parent=1 // pred_check_branch
      %29 = sbr.rel (0) target = $region21
    $region20: #{tpu_custom_call.1} parent=1 // pred_region
      _
    $region21: #{tpu_custom_call.1} parent=1 // pred_fallthru
      _
    // Predicated region
    $region22: #{tpu_custom_call.1} parent=1 // pred_check
      _
    $region23: #{tpu_custom_call.1} parent=1 // pred_check_branch
      %31 = sbr.rel (0) target = $region25
    $region24: #{tpu_custom_call.1} parent=1 // pred_region
      _
    $region25: #{tpu_custom_call.1} parent=1 // pred_fallthru
      _
    // Predicated region
    $region26: #{tpu_custom_call.1} parent=1 // pred_check
      _
    $region27: #{tpu_custom_call.1} parent=1 // pred_check_branch
      %33 = sbr.rel (0) target = $region29
    $region28: #{tpu_custom_call.1} parent=1 // pred_region
      _
    $region29: #{tpu_custom_call.1} parent=1 // pred_fallthru
      _
    // Predicated region
    $region30: #{tpu_custom_call.1} parent=1 // pred_check
      _
    $region31: #{tpu_custom_call.1} parent=1 // pred_check_branch
      %35 = sbr.rel (0) target = $region33
    $region32: #{tpu_custom_call.1} parent=1 // pred_region
      _
    $region33: #{tpu_custom_call.1} parent=1 // pred_fallthru
      _
    // Predicated region
    $region34: #{tpu_custom_call.1} parent=1 // pred_check
      _
    $region35: #{tpu_custom_call.1} parent=1 // pred_check_branch
      %37 = sbr.rel (0) target = $region37
    $region36: #{tpu_custom_call.1} parent=1 // pred_region
      _
    $region37: #{tpu_custom_call.1} parent=1 // pred_fallthru
      _
    // Predicated region
    $region38: #{tpu_custom_call.1} parent=1 // pred_check
      _
    $region39: #{tpu_custom_call.1} parent=1 // pred_check_branch
      %39 = sbr.rel (0) target = $region41
    $region40: #{tpu_custom_call.1} parent=1 // pred_region
      _
    $region41: #{tpu_custom_call.1} parent=1 // pred_fallthru
      _
    // Predicated region
    $region42: #{tpu_custom_call.1} parent=1 // pred_check
      _
    $region43: #{tpu_custom_call.1} parent=1 // pred_check_branch
      %41 = sbr.rel (0) target = $region45
    $region44: #{tpu_custom_call.1} parent=1 // pred_region
      _
    $region45: #{tpu_custom_call.1} parent=1 // pred_fallthru
      _
    // Predicated region
    $region46: #{tpu_custom_call.1} parent=1 // pred_check
      _
    $region47: #{tpu_custom_call.1} parent=1 // pred_check_branch
      %43 = sbr.rel (0) target = $region49
    $region48: #{tpu_custom_call.1} parent=1 // pred_region
      _
    $region49: #{tpu_custom_call.1} parent=1 // pred_fallthru
      _
    // Predicated region
    $region50: #{tpu_custom_call.1} parent=1 // pred_check
      _
    $region51: #{tpu_custom_call.1} parent=1 // pred_check_branch
      %45 = sbr.rel (0) target = $region53
    $region52: #{tpu_custom_call.1} parent=1 // pred_region
      _
    $region53: #{tpu_custom_call.1} parent=1 // pred_fallthru
      _
    // Predicated region
    $region54: #{tpu_custom_call.1} parent=1 // pred_check
      _
    $region55: #{tpu_custom_call.1} parent=1 // pred_check_branch
      %47 = sbr.rel (0) target = $region57
    $region56: #{tpu_custom_call.1} parent=1 // pred_region
      _
    $region57: #{tpu_custom_call.1} parent=1 // pred_fallthru
      _
    %v49 = vld [vmem:[%s0] sm:$0xff]
    %v50 = vld [vmem:[%s0 + $0x8] sm:$0xff]
    %v51 = vlaneseq
    %v52 = vand.u32 %v51, 127
    %53 = vset.pattern.permute.xlu0 0
    %54 = vperm.xlu0 %53, %v49
    %v55 = vpop.permute.xlu0 %54
    %56 = vset.pattern.permute.xlu0 0
    %57 = vperm.xlu0 %56, %v50
    %v58 = vpop.permute.xlu0 %57
    %vm59 = vcmp.eq.s32.totalorder %v52, %v55
    %vm60 = vcmp.eq.s32.totalorder %v52, %v58
    %v61 = vsel %vm59, 1, 0
    %v62 = vsel %vm60, 1, 0
    %v63 = vcvt.s32.f32 %v61
    %v64 = vcvt.s32.f32 %v62
    %v65 = vld [vmem:[%s1] sm:$0xff]
    %v66 = vld [vmem:[%s1 + $0x8] sm:$0xff]
    %v67 = vld [vmem:[%s1 + $0x10] sm:$0xff]
    %v68 = vld [vmem:[%s1 + $0x18] sm:$0xff]
    %v69 = vld [vmem:[%s1 + $0x20] sm:$0xff]
    %v70 = vld [vmem:[%s1 + $0x28] sm:$0xff]
    %v71 = vld [vmem:[%s1 + $0x30] sm:$0x3]
    %vm72 = vcmask 408576
    %v74 = vsel %vm72, %v63, 0
    %v77 = vsel %vm72, %v64, 0
    %vm79 = vcmask 1041408
    %v81 = vsel %vm79, %v71, 0
    %83 = vmatpush.msra.mxu0 0.0
    %84 = vmatpush.msra.mxu0 0.0
    %85 = vmatpush.msra.mxu0 0.0
    %86 = vmatpush.msra.mxu0 0.0
    %87 = vmatpush.msra.mxu0 0.0
    %88 = vmatpush.msra.mxu0 0.0
    %89 = vmatpush.msra.mxu0 0.0
    %90 = vmatpush.msra.mxu0 0.0
    %91 = vmatpush.msra.mxu0 0.0
    %92 = vmatpush.msra.mxu0 %v81
    %93 = vmatpush.msra.mxu0 %v70
    %94 = vmatpush.msra.mxu0 %v69
    %95 = vmatpush.msra.mxu0 %v68
    %96 = vmatpush.msra.mxu0 %v67
    %97 = vmatpush.msra.mxu0 %v66
    %98 = vmatpush.msra.mxu0 %v65
    %99 = vmatmul.f32.gmra.mxu0 %v74
    %v100 = vpop.f32.mrf.mxu0
    %v101 = vadd.f32 0.0, %v100
    %102 = vmatmul.f32.gmra.mxu0 %v77
    %v103 = vpop.f32.mrf.mxu0
    %v104 = vadd.f32 0.0, %v103
    %105 = vdwg.mxu0
    %v106 = vld [vmem:[%s2] sm:$0xff]
    %v107 = vadd.f32 %v101, %v106
    %v108 = vadd.f32 %v104, %v106
    %v109 = vld [vmem:[%s3] sm:$0x1]
    %v110 = vld [vmem:[%s4] sm:$0x1]
    %vm111 = vcmask 261120
    %v112 = vsel %vm111, %v107, 0.0
    %113 = vadd.xlane.f32.xlu0 %v112
    %v114 = vpop.xlane.xlu0 %113
    %v115 = vsel %vm111, %v108, 0.0
    %116 = vadd.xlane.f32.xlu0 %v115
    %v117 = vpop.xlane.xlu0 %116
    %v118 = vrcp.pop 32.0
    %v119 = vmul.f32 32.0, %v118
    %v120 = vsub.f32 1.0, %v119
    %v121 = vmul.f32 %v118, %v120
    %v122 = vadd.f32 %v118, %v121
    %vm123 = vweird.f32 %v118
    %v124 = vsel %vm123, %v118, %v122
    %v125 = vmul.f32 %v114, %v124
    %v126 = vmul.f32 %v117, %v124
    %v127 = vsub.f32 %v107, %v125
    %v128 = vsub.f32 %v108, %v126
    %v129 = vmul.f32 %v127, %v127
    %v130 = vmul.f32 %v128, %v128
    %v131 = vsel %vm111, %v129, 0.0
    %132 = vadd.xlane.f32.xlu0 %v131
    %v133 = vpop.xlane.xlu0 %132
    %v134 = vsel %vm111, %v130, 0.0
    %135 = vadd.xlane.f32.xlu0 %v134
    %v136 = vpop.xlane.xlu0 %135
    %v137 = vmul.f32 %v133, %v124
    %v138 = vmul.f32 %v136, %v124
    %v139 = vadd.f32 %v137, 1e-05
    %v140 = vadd.f32 %v138, 1e-05
    %v141 = vrsqrt.pop %v139
    %v142 = vmul.f32 %v141, %v139
    %v143 = vmul.f32 %v142, %v141
    %v144 = vmul.f32 0.5, %v143
    %v145 = vsub.f32 1.5, %v144
    %v146 = vmul.f32 %v141, %v145
    %vm147 = vweird.f32 %v139
    %vm148 = vweird.f32 %v141
    %vm149 = vmor %vm147, %vm148
    %v150 = vsel %vm149, %v141, %v146
    %v151 = vrsqrt.pop %v140
    %v152 = vmul.f32 %v151, %v140
    %v153 = vmul.f32 %v152, %v151
    %v154 = vmul.f32 0.5, %v153
    %v155 = vsub.f32 1.5, %v154
    %v156 = vmul.f32 %v151, %v155
    %vm157 = vweird.f32 %v140
    %vm158 = vweird.f32 %v151
    %vm159 = vmor %vm157, %vm158
    %v160 = vsel %vm159, %v151, %v156
    %v161 = vmul.f32 %v127, %v150
    %v162 = vmul.f32 %v128, %v160
    %v164 = vperm.slane %v109, 0
    %v166 = vmul.f32 %v161, %v164
    %v167 = vmul.f32 %v162, %v164
    %v169 = vperm.slane %v110, 0
    %v171 = vadd.f32 %v166, %v169
    %v172 = vadd.f32 %v167, %v169
    %v173 = vpack.c.bf16 %v172, %v171
    %v174 = vld [vmem:[%s5] sm:$0xff]
    %v175 = vld [vmem:[%s5 + $0x8] sm:$0xff]
    %v176 = vld [vmem:[%s5 + $0x10] sm:$0xff]
    %v177 = vld [vmem:[%s5 + $0x18] sm:$0xff]
    %v178 = vld [vmem:[%s5 + $0x20] sm:$0xff]
    %v179 = vld [vmem:[%s5 + $0x28] sm:$0xff]
    %v180 = vld [vmem:[%s5 + $0x30] sm:$0xff]
    %v181 = vld [vmem:[%s5 + $0x38] sm:$0xff]
    %v182 = vld [vmem:[%s5 + $0x40] sm:$0xff]
    %v183 = vld [vmem:[%s5 + $0x48] sm:$0xff]
    %v184 = vld [vmem:[%s5 + $0x50] sm:$0xff]
    %v185 = vld [vmem:[%s5 + $0x58] sm:$0xff]
    %v186 = vld [vmem:[%s5 + $0x60] sm:$0xff]
    %v187 = vld [vmem:[%s5 + $0x68] sm:$0xff]
    %v188 = vld [vmem:[%s5 + $0x70] sm:$0xff]
    %v189 = vld [vmem:[%s5 + $0x78] sm:$0xff]
    %v190 = vld [vmem:[%s5 + $0x80] sm:$0xff]
    %v191 = vld [vmem:[%s5 + $0x88] sm:$0xff]
    %v192 = vld [vmem:[%s5 + $0x90] sm:$0xff]
    %v193 = vld [vmem:[%s5 + $0x98] sm:$0xff]
    %v194 = vld [vmem:[%s5 + $0xa0] sm:$0xff]
    %v195 = vld [vmem:[%s5 + $0xa8] sm:$0xff]
    %v196 = vld [vmem:[%s5 + $0xb0] sm:$0xff]
    %v197 = vld [vmem:[%s5 + $0xb8] sm:$0xff]
    %v198 = vld [vmem:[%s5 + $0xc0] sm:$0xff]
    %v199 = vld [vmem:[%s5 + $0xc8] sm:$0xff]
    %v200 = vld [vmem:[%s5 + $0xd0] sm:$0xff]
    %v201 = vld [vmem:[%s5 + $0xd8] sm:$0xff]
    %v202 = vld [vmem:[%s5 + $0xe0] sm:$0xff]
    %v203 = vld [vmem:[%s5 + $0xe8] sm:$0xff]
    %v204 = vld [vmem:[%s5 + $0xf0] sm:$0xff]
    %v205 = vld [vmem:[%s5 + $0xf8] sm:$0xff]
    %v206 = vld [vmem:[%s5 + $0x100] sm:$0xff]
    %v207 = vld [vmem:[%s5 + $0x108] sm:$0xff]
    %v208 = vld [vmem:[%s5 + $0x110] sm:$0xff]
    %v209 = vld [vmem:[%s5 + $0x118] sm:$0xff]
    %v246 = vunpack.c.l.b16 %v174
    %v247 = vunpack.c.h.b16 %v174
    %v248 = vunpack.c.l.b16 %v175
    %v249 = vunpack.c.h.b16 %v175
    %v250 = vunpack.c.l.b16 %v176
    %v251 = vunpack.c.h.b16 %v176
    %v252 = vunpack.c.l.b16 %v177
    %v253 = vunpack.c.h.b16 %v177
    %v254 = vunpack.c.l.b16 %v178
    %v255 = vunpack.c.h.b16 %v178
    %v256 = vunpack.c.l.b16 %v179
    %v257 = vunpack.c.h.b16 %v179
    %v258 = vunpack.c.l.b16 %v180
    %v259 = vunpack.c.h.b16 %v180
    %v260 = vunpack.c.l.b16 %v181
    %v261 = vunpack.c.h.b16 %v181
    %v262 = vunpack.c.l.b16 %v182
    %v263 = vunpack.c.h.b16 %v182
    %v264 = vunpack.c.l.b16 %v183
    %v265 = vunpack.c.h.b16 %v183
    %v266 = vunpack.c.l.b16 %v184
    %v267 = vunpack.c.h.b16 %v184
    %v268 = vunpack.c.l.b16 %v185
    %v269 = vunpack.c.h.b16 %v185
    %v270 = vunpack.c.l.b16 %v186
    %v271 = vunpack.c.h.b16 %v186
    %v272 = vunpack.c.l.b16 %v187
    %v273 = vunpack.c.h.b16 %v187
    %v274 = vunpack.c.l.b16 %v188
    %v275 = vunpack.c.h.b16 %v188
    %v276 = vunpack.c.l.b16 %v189
    %v277 = vunpack.c.h.b16 %v189
    %v278 = vunpack.c.l.b16 %v190
    %v279 = vunpack.c.h.b16 %v190
    %v280 = vunpack.c.l.b16 %v191
    %v281 = vunpack.c.h.b16 %v191
    %v282 = vunpack.c.l.b16 %v192
    %v283 = vunpack.c.h.b16 %v192
    %v284 = vunpack.c.l.b16 %v193
    %v285 = vunpack.c.h.b16 %v193
    %v286 = vunpack.c.l.b16 %v194
    %v287 = vunpack.c.h.b16 %v194
    %v288 = vunpack.c.l.b16 %v195
    %v289 = vunpack.c.h.b16 %v195
    %v290 = vunpack.c.l.b16 %v196
    %v291 = vunpack.c.h.b16 %v196
    %v292 = vunpack.c.l.b16 %v197
    %v293 = vunpack.c.h.b16 %v197
    %v294 = vunpack.c.l.b16 %v198
    %v295 = vunpack.c.h.b16 %v198
    %v296 = vunpack.c.l.b16 %v199
    %v297 = vunpack.c.h.b16 %v199
    %v298 = vunpack.c.l.b16 %v200
    %v299 = vunpack.c.h.b16 %v200
    %v300 = vunpack.c.l.b16 %v201
    %v301 = vunpack.c.h.b16 %v201
    %v302 = vunpack.c.l.b16 %v202
    %v303 = vunpack.c.h.b16 %v202
    %v304 = vunpack.c.l.b16 %v203
    %v305 = vunpack.c.h.b16 %v203
    %v306 = vunpack.c.l.b16 %v204
    %v307 = vunpack.c.h.b16 %v204
    %v308 = vunpack.c.l.b16 %v205
    %v309 = vunpack.c.h.b16 %v205
    %v310 = vunpack.c.l.b16 %v206
    %v311 = vunpack.c.h.b16 %v206
    %v312 = vunpack.c.l.b16 %v207
    %v313 = vunpack.c.h.b16 %v207
    %v314 = vunpack.c.l.b16 %v208
    %v315 = vunpack.c.h.b16 %v208
    %v316 = vunpack.c.l.b16 %v209
    %v317 = vunpack.c.h.b16 %v209
    %v318 = vpack.c.b16 %v264, %v246
    %v319 = vpack.c.b16 %v265, %v247
    %v320 = vpack.c.b16 %v266, %v248
    %v321 = vpack.c.b16 %v267, %v249
    %v322 = vpack.c.b16 %v268, %v250
    %v323 = vpack.c.b16 %v269, %v251
    %v324 = vpack.c.b16 %v270, %v252
    %v325 = vpack.c.b16 %v271, %v253
    %v326 = vpack.c.b16 %v272, %v254
    %v327 = vpack.c.b16 %v273, %v255
    %v328 = vpack.c.b16 %v274, %v256
    %v329 = vpack.c.b16 %v275, %v257
    %v330 = vpack.c.b16 %v276, %v258
    %v331 = vpack.c.b16 %v277, %v259
    %v332 = vpack.c.b16 %v278, %v260
    %v333 = vpack.c.b16 %v279, %v261
    %v334 = vpack.c.b16 %v280, %v262
    %v335 = vpack.c.b16 %v281, %v263
    %v336 = vpack.c.b16 %v300, %v282
    %v337 = vpack.c.b16 %v301, %v283
    %v338 = vpack.c.b16 %v302, %v284
    %v339 = vpack.c.b16 %v303, %v285
    %v340 = vpack.c.b16 %v304, %v286
    %v341 = vpack.c.b16 %v305, %v287
    %v342 = vpack.c.b16 %v306, %v288
    %v343 = vpack.c.b16 %v307, %v289
    %v344 = vpack.c.b16 %v308, %v290
    %v345 = vpack.c.b16 %v309, %v291
    %v346 = vpack.c.b16 %v310, %v292
    %v347 = vpack.c.b16 %v311, %v293
    %v348 = vpack.c.b16 %v312, %v294
    %v349 = vpack.c.b16 %v313, %v295
    %v350 = vpack.c.b16 %v314, %v296
    %v351 = vpack.c.b16 %v315, %v297
    %v352 = vpack.c.b16 %v316, %v298
    %v353 = vpack.c.b16 %v317, %v299
    %v391 = vsel %vm111, %v173, 0
    %393 = vmatpush.bf16.msra.mxu0 0
    %394 = vmatpush.bf16.msra.mxu0 0
    %395 = vmatpush.bf16.msra.mxu0 0
    %396 = vmatpush.bf16.msra.mxu0 0
    %397 = vmatpush.bf16.msra.mxu0 0
    %398 = vmatpush.bf16.msra.mxu0 0
    %399 = vmatpush.bf16.msra.mxu0 %v336
    %400 = vmatpush.bf16.msra.mxu0 %v318
    %401 = vmatmul.bf16.gmra.mxu0 %v391
    %v402 = vpop.f32.mrf.mxu0
    %v403 = vadd.f32 0.0, %v402
    %v404 = vpop.f32.mrf.mxu0
    %v405 = vadd.f32 0.0, %v404
    %406 = vdwg.mxu0
    %407 = vmatpush.bf16.msra.mxu0 0
    %408 = vmatpush.bf16.msra.mxu0 0
    %409 = vmatpush.bf16.msra.mxu0 0
    %410 = vmatpush.bf16.msra.mxu0 0
    %411 = vmatpush.bf16.msra.mxu0 0
    %412 = vmatpush.bf16.msra.mxu0 0
    %413 = vmatpush.bf16.msra.mxu0 %v337
    %414 = vmatpush.bf16.msra.mxu0 %v319
    %415 = vmatmul.bf16.gmra.mxu0 %v391
    %v416 = vpop.f32.mrf.mxu0
    %v417 = vadd.f32 0.0, %v416
    %v418 = vpop.f32.mrf.mxu0
    %v419 = vadd.f32 0.0, %v418
    %420 = vdwg.mxu0
    %421 = vmatpush.bf16.msra.mxu0 0
    %422 = vmatpush.bf16.msra.mxu0 0
    %423 = vmatpush.bf16.msra.mxu0 0
    %424 = vmatpush.bf16.msra.mxu0 0
    %425 = vmatpush.bf16.msra.mxu0 0
    %426 = vmatpush.bf16.msra.mxu0 0
    %427 = vmatpush.bf16.msra.mxu0 %v338
    %428 = vmatpush.bf16.msra.mxu0 %v320
    %429 = vmatmul.bf16.gmra.mxu0 %v391
    %v430 = vpop.f32.mrf.mxu0
    %v431 = vadd.f32 0.0, %v430
    %v432 = vpop.f32.mrf.mxu0
    %v433 = vadd.f32 0.0, %v432
    %434 = vdwg.mxu0
    %435 = vmatpush.bf16.msra.mxu0 0
    %436 = vmatpush.bf16.msra.mxu0 0
    %437 = vmatpush.bf16.msra.mxu0 0
    %438 = vmatpush.bf16.msra.mxu0 0
    %439 = vmatpush.bf16.msra.mxu0 0
    %440 = vmatpush.bf16.msra.mxu0 0
    %441 = vmatpush.bf16.msra.mxu0 %v339
    %442 = vmatpush.bf16.msra.mxu0 %v321
    %443 = vmatmul.bf16.gmra.mxu0 %v391
    %v444 = vpop.f32.mrf.mxu0
    %v445 = vadd.f32 0.0, %v444
    %v446 = vpop.f32.mrf.mxu0
    %v447 = vadd.f32 0.0, %v446
    %448 = vdwg.mxu0
    %449 = vmatpush.bf16.msra.mxu0 0
    %450 = vmatpush.bf16.msra.mxu0 0
    %451 = vmatpush.bf16.msra.mxu0 0
    %452 = vmatpush.bf16.msra.mxu0 0
    %453 = vmatpush.bf16.msra.mxu0 0
    %454 = vmatpush.bf16.msra.mxu0 0
    %455 = vmatpush.bf16.msra.mxu0 %v340
    %456 = vmatpush.bf16.msra.mxu0 %v322
    %457 = vmatmul.bf16.gmra.mxu0 %v391
    %v458 = vpop.f32.mrf.mxu0
    %v459 = vadd.f32 0.0, %v458
    %v460 = vpop.f32.mrf.mxu0
    %v461 = vadd.f32 0.0, %v460
    %462 = vdwg.mxu0
    %463 = vmatpush.bf16.msra.mxu0 0
    %464 = vmatpush.bf16.msra.mxu0 0
    %465 = vmatpush.bf16.msra.mxu0 0
    %466 = vmatpush.bf16.msra.mxu0 0
    %467 = vmatpush.bf16.msra.mxu0 0
    %468 = vmatpush.bf16.msra.mxu0 0
    %469 = vmatpush.bf16.msra.mxu0 %v341
    %470 = vmatpush.bf16.msra.mxu0 %v323
    %471 = vmatmul.bf16.gmra.mxu0 %v391
    %v472 = vpop.f32.mrf.mxu0
    %v473 = vadd.f32 0.0, %v472
    %v474 = vpop.f32.mrf.mxu0
    %v475 = vadd.f32 0.0, %v474
    %476 = vdwg.mxu0
    %477 = vmatpush.bf16.msra.mxu0 0
    %478 = vmatpush.bf16.msra.mxu0 0
    %479 = vmatpush.bf16.msra.mxu0 0
    %480 = vmatpush.bf16.msra.mxu0 0
    %481 = vmatpush.bf16.msra.mxu0 0
    %482 = vmatpush.bf16.msra.mxu0 0
    %483 = vmatpush.bf16.msra.mxu0 %v342
    %484 = vmatpush.bf16.msra.mxu0 %v324
    %485 = vmatmul.bf16.gmra.mxu0 %v391
    %v486 = vpop.f32.mrf.mxu0
    %v487 = vadd.f32 0.0, %v486
    %v488 = vpop.f32.mrf.mxu0
    %v489 = vadd.f32 0.0, %v488
    %490 = vdwg.mxu0
    %491 = vmatpush.bf16.msra.mxu0 0
    %492 = vmatpush.bf16.msra.mxu0 0
    %493 = vmatpush.bf16.msra.mxu0 0
    %494 = vmatpush.bf16.msra.mxu0 0
    %495 = vmatpush.bf16.msra.mxu0 0
    %496 = vmatpush.bf16.msra.mxu0 0
    %497 = vmatpush.bf16.msra.mxu0 %v343
    %498 = vmatpush.bf16.msra.mxu0 %v325
    %499 = vmatmul.bf16.gmra.mxu0 %v391
    %v500 = vpop.f32.mrf.mxu0
    %v501 = vadd.f32 0.0, %v500
    %v502 = vpop.f32.mrf.mxu0
    %v503 = vadd.f32 0.0, %v502
    %504 = vdwg.mxu0
    %505 = vmatpush.bf16.msra.mxu0 0
    %506 = vmatpush.bf16.msra.mxu0 0
    %507 = vmatpush.bf16.msra.mxu0 0
    %508 = vmatpush.bf16.msra.mxu0 0
    %509 = vmatpush.bf16.msra.mxu0 0
    %510 = vmatpush.bf16.msra.mxu0 0
    %511 = vmatpush.bf16.msra.mxu0 %v344
    %512 = vmatpush.bf16.msra.mxu0 %v326
    %513 = vmatmul.bf16.gmra.mxu0 %v391
    %v514 = vpop.f32.mrf.mxu0
    %v515 = vadd.f32 0.0, %v514
    %v516 = vpop.f32.mrf.mxu0
    %v517 = vadd.f32 0.0, %v516
    %518 = vdwg.mxu0
    %519 = vmatpush.bf16.msra.mxu0 0
    %520 = vmatpush.bf16.msra.mxu0 0
    %521 = vmatpush.bf16.msra.mxu0 0
    %522 = vmatpush.bf16.msra.mxu0 0
    %523 = vmatpush.bf16.msra.mxu0 0
    %524 = vmatpush.bf16.msra.mxu0 0
    %525 = vmatpush.bf16.msra.mxu0 %v345
    %526 = vmatpush.bf16.msra.mxu0 %v327
    %527 = vmatmul.bf16.gmra.mxu0 %v391
    %v528 = vpop.f32.mrf.mxu0
    %v529 = vadd.f32 0.0, %v528
    %v530 = vpop.f32.mrf.mxu0
    %v531 = vadd.f32 0.0, %v530
    %532 = vdwg.mxu0
    %533 = vmatpush.bf16.msra.mxu0 0
    %534 = vmatpush.bf16.msra.mxu0 0
    %535 = vmatpush.bf16.msra.mxu0 0
    %536 = vmatpush.bf16.msra.mxu0 0
    %537 = vmatpush.bf16.msra.mxu0 0
    %538 = vmatpush.bf16.msra.mxu0 0
    %539 = vmatpush.bf16.msra.mxu0 %v346
    %540 = vmatpush.bf16.msra.mxu0 %v328
    %541 = vmatmul.bf16.gmra.mxu0 %v391
    %v542 = vpop.f32.mrf.mxu0
    %v543 = vadd.f32 0.0, %v542
    %v544 = vpop.f32.mrf.mxu0
    %v545 = vadd.f32 0.0, %v544
    %546 = vdwg.mxu0
    %547 = vmatpush.bf16.msra.mxu0 0
    %548 = vmatpush.bf16.msra.mxu0 0
    %549 = vmatpush.bf16.msra.mxu0 0
    %550 = vmatpush.bf16.msra.mxu0 0
    %551 = vmatpush.bf16.msra.mxu0 0
    %552 = vmatpush.bf16.msra.mxu0 0
    %553 = vmatpush.bf16.msra.mxu0 %v347
    %554 = vmatpush.bf16.msra.mxu0 %v329
    %555 = vmatmul.bf16.gmra.mxu0 %v391
    %v556 = vpop.f32.mrf.mxu0
    %v557 = vadd.f32 0.0, %v556
    %v558 = vpop.f32.mrf.mxu0
    %v559 = vadd.f32 0.0, %v558
    %560 = vdwg.mxu0
    %561 = vmatpush.bf16.msra.mxu0 0
    %562 = vmatpush.bf16.msra.mxu0 0
    %563 = vmatpush.bf16.msra.mxu0 0
    %564 = vmatpush.bf16.msra.mxu0 0
    %565 = vmatpush.bf16.msra.mxu0 0
    %566 = vmatpush.bf16.msra.mxu0 0
    %567 = vmatpush.bf16.msra.mxu0 %v348
    %568 = vmatpush.bf16.msra.mxu0 %v330
    %569 = vmatmul.bf16.gmra.mxu0 %v391
    %v570 = vpop.f32.mrf.mxu0
    %v571 = vadd.f32 0.0, %v570
    %v572 = vpop.f32.mrf.mxu0
    %v573 = vadd.f32 0.0, %v572
    %574 = vdwg.mxu0
    %575 = vmatpush.bf16.msra.mxu0 0
    %576 = vmatpush.bf16.msra.mxu0 0
    %577 = vmatpush.bf16.msra.mxu0 0
    %578 = vmatpush.bf16.msra.mxu0 0
    %579 = vmatpush.bf16.msra.mxu0 0
    %580 = vmatpush.bf16.msra.mxu0 0
    %581 = vmatpush.bf16.msra.mxu0 %v349
    %582 = vmatpush.bf16.msra.mxu0 %v331
    %583 = vmatmul.bf16.gmra.mxu0 %v391
    %v584 = vpop.f32.mrf.mxu0
    %v585 = vadd.f32 0.0, %v584
    %v586 = vpop.f32.mrf.mxu0
    %v587 = vadd.f32 0.0, %v586
    %588 = vdwg.mxu0
    %589 = vmatpush.bf16.msra.mxu0 0
    %590 = vmatpush.bf16.msra.mxu0 0
    %591 = vmatpush.bf16.msra.mxu0 0
    %592 = vmatpush.bf16.msra.mxu0 0
    %593 = vmatpush.bf16.msra.mxu0 0
    %594 = vmatpush.bf16.msra.mxu0 0
    %595 = vmatpush.bf16.msra.mxu0 %v350
    %596 = vmatpush.bf16.msra.mxu0 %v332
    %597 = vmatmul.bf16.gmra.mxu0 %v391
    %v598 = vpop.f32.mrf.mxu0
    %v599 = vadd.f32 0.0, %v598
    %v600 = vpop.f32.mrf.mxu0
    %v601 = vadd.f32 0.0, %v600
    %602 = vdwg.mxu0
    %603 = vmatpush.bf16.msra.mxu0 0
    %604 = vmatpush.bf16.msra.mxu0 0
    %605 = vmatpush.bf16.msra.mxu0 0
    %606 = vmatpush.bf16.msra.mxu0 0
    %607 = vmatpush.bf16.msra.mxu0 0
    %608 = vmatpush.bf16.msra.mxu0 0
    %609 = vmatpush.bf16.msra.mxu0 %v351
    %610 = vmatpush.bf16.msra.mxu0 %v333
    %611 = vmatmul.bf16.gmra.mxu0 %v391
    %v612 = vpop.f32.mrf.mxu0
    %v613 = vadd.f32 0.0, %v612
    %v614 = vpop.f32.mrf.mxu0
    %v615 = vadd.f32 0.0, %v614
    %616 = vdwg.mxu0
    %617 = vmatpush.bf16.msra.mxu0 0
    %618 = vmatpush.bf16.msra.mxu0 0
    %619 = vmatpush.bf16.msra.mxu0 0
    %620 = vmatpush.bf16.msra.mxu0 0
    %621 = vmatpush.bf16.msra.mxu0 0
    %622 = vmatpush.bf16.msra.mxu0 0
    %623 = vmatpush.bf16.msra.mxu0 %v352
    %624 = vmatpush.bf16.msra.mxu0 %v334
    %625 = vmatmul.bf16.gmra.mxu0 %v391
    %v626 = vpop.f32.mrf.mxu0
    %v627 = vadd.f32 0.0, %v626
    %v628 = vpop.f32.mrf.mxu0
    %v629 = vadd.f32 0.0, %v628
    %630 = vdwg.mxu0
    %631 = vmatpush.bf16.msra.mxu0 0
    %632 = vmatpush.bf16.msra.mxu0 0
    %633 = vmatpush.bf16.msra.mxu0 0
    %634 = vmatpush.bf16.msra.mxu0 0
    %635 = vmatpush.bf16.msra.mxu0 0
    %636 = vmatpush.bf16.msra.mxu0 0
    %637 = vmatpush.bf16.msra.mxu0 %v353
    %638 = vmatpush.bf16.msra.mxu0 %v335
    %639 = vmatmul.bf16.gmra.mxu0 %v391
    %v640 = vpop.f32.mrf.mxu0
    %v641 = vadd.f32 0.0, %v640
    %v642 = vpop.f32.mrf.mxu0
    %v643 = vadd.f32 0.0, %v642
    %644 = vdwg.mxu0
    %647 = vrot.lane.b32.xlu0 %v403, 64
    %v648 = vpop.permute.xlu0 %647
    %649 = vrot.lane.b32.xlu0 %v405, 64
    %v650 = vpop.permute.xlu0 %649
    %655 = vrot.lane.b32.xlu0 %v417, 64
    %v656 = vpop.permute.xlu0 %655
    %657 = vrot.lane.b32.xlu0 %v419, 64
    %v658 = vpop.permute.xlu0 %657
    %663 = vrot.lane.b32.xlu0 %v431, 64
    %v664 = vpop.permute.xlu0 %663
    %665 = vrot.lane.b32.xlu0 %v433, 64
    %v666 = vpop.permute.xlu0 %665
    %671 = vrot.lane.b32.xlu0 %v445, 64
    %v672 = vpop.permute.xlu0 %671
    %673 = vrot.lane.b32.xlu0 %v447, 64
    %v674 = vpop.permute.xlu0 %673
    %679 = vrot.lane.b32.xlu0 %v459, 64
    %v680 = vpop.permute.xlu0 %679
    %681 = vrot.lane.b32.xlu0 %v461, 64
    %v682 = vpop.permute.xlu0 %681
    %687 = vrot.lane.b32.xlu0 %v473, 64
    %v688 = vpop.permute.xlu0 %687
    %689 = vrot.lane.b32.xlu0 %v475, 64
    %v690 = vpop.permute.xlu0 %689
    %v693 = vpack.c.bf16 %v403, %v403
    %v694 = vpack.c.bf16 %v405, %v405
    %v695 = vpack.c.bf16 %v648, %v648
    %v696 = vpack.c.bf16 %v650, %v650
    %v697 = vpack.c.bf16 %v417, %v417
    %v698 = vpack.c.bf16 %v419, %v419
    %v699 = vpack.c.bf16 %v656, %v656
    %v700 = vpack.c.bf16 %v658, %v658
    %v701 = vpack.c.bf16 %v431, %v431
    %v702 = vpack.c.bf16 %v433, %v433
    %v703 = vpack.c.bf16 %v664, %v664
    %v704 = vpack.c.bf16 %v666, %v666
    %v705 = vpack.c.bf16 %v445, %v445
    %v706 = vpack.c.bf16 %v447, %v447
    %v707 = vpack.c.bf16 %v672, %v672
    %v708 = vpack.c.bf16 %v674, %v674
    %v709 = vpack.c.bf16 %v459, %v459
    %v710 = vpack.c.bf16 %v461, %v461
    %v711 = vpack.c.bf16 %v680, %v680
    %v712 = vpack.c.bf16 %v682, %v682
    %v713 = vpack.c.bf16 %v473, %v473
    %v714 = vpack.c.bf16 %v475, %v475
    %v715 = vpack.c.bf16 %v688, %v688
    %v716 = vpack.c.bf16 %v690, %v690
    %719 = vrot.lane.b32.xlu0 %v487, 64
    %v720 = vpop.permute.xlu0 %719
    %721 = vrot.lane.b32.xlu0 %v489, 64
    %v722 = vpop.permute.xlu0 %721
    %727 = vrot.lane.b32.xlu0 %v501, 64
    %v728 = vpop.permute.xlu0 %727
    %729 = vrot.lane.b32.xlu0 %v503, 64
    %v730 = vpop.permute.xlu0 %729
    %735 = vrot.lane.b32.xlu0 %v515, 64
    %v736 = vpop.permute.xlu0 %735
    %737 = vrot.lane.b32.xlu0 %v517, 64
    %v738 = vpop.permute.xlu0 %737
    %743 = vrot.lane.b32.xlu0 %v529, 64
    %v744 = vpop.permute.xlu0 %743
    %745 = vrot.lane.b32.xlu0 %v531, 64
    %v746 = vpop.permute.xlu0 %745
    %751 = vrot.lane.b32.xlu0 %v543, 64
    %v752 = vpop.permute.xlu0 %751
    %753 = vrot.lane.b32.xlu0 %v545, 64
    %v754 = vpop.permute.xlu0 %753
    %759 = vrot.lane.b32.xlu0 %v557, 64
    %v760 = vpop.permute.xlu0 %759
    %761 = vrot.lane.b32.xlu0 %v559, 64
    %v762 = vpop.permute.xlu0 %761
    %v765 = vpack.c.bf16 %v487, %v487
    %v766 = vpack.c.bf16 %v489, %v489
    %v767 = vpack.c.bf16 %v720, %v720
    %v768 = vpack.c.bf16 %v722, %v722
    %v769 = vpack.c.bf16 %v501, %v501
    %v770 = vpack.c.bf16 %v503, %v503
    %v771 = vpack.c.bf16 %v728, %v728
    %v772 = vpack.c.bf16 %v730, %v730
    %v773 = vpack.c.bf16 %v515, %v515
    %v774 = vpack.c.bf16 %v517, %v517
    %v775 = vpack.c.bf16 %v736, %v736
    %v776 = vpack.c.bf16 %v738, %v738
    %v777 = vpack.c.bf16 %v529, %v529
    %v778 = vpack.c.bf16 %v531, %v531
    %v779 = vpack.c.bf16 %v744, %v744
    %v780 = vpack.c.bf16 %v746, %v746
    %v781 = vpack.c.bf16 %v543, %v543
    %v782 = vpack.c.bf16 %v545, %v545
    %v783 = vpack.c.bf16 %v752, %v752
    %v784 = vpack.c.bf16 %v754, %v754
    %v785 = vpack.c.bf16 %v557, %v557
    %v786 = vpack.c.bf16 %v559, %v559
    %v787 = vpack.c.bf16 %v760, %v760
    %v788 = vpack.c.bf16 %v762, %v762
    %791 = vrot.lane.b32.xlu0 %v571, 64
    %v792 = vpop.permute.xlu0 %791
    %793 = vrot.lane.b32.xlu0 %v573, 64
    %v794 = vpop.permute.xlu0 %793
    %799 = vrot.lane.b32.xlu0 %v585, 64
    %v800 = vpop.permute.xlu0 %799
    %801 = vrot.lane.b32.xlu0 %v587, 64
    %v802 = vpop.permute.xlu0 %801
    %807 = vrot.lane.b32.xlu0 %v599, 64
    %v808 = vpop.permute.xlu0 %807
    %809 = vrot.lane.b32.xlu0 %v601, 64
    %v810 = vpop.permute.xlu0 %809
    %815 = vrot.lane.b32.xlu0 %v613, 64
    %v816 = vpop.permute.xlu0 %815
    %817 = vrot.lane.b32.xlu0 %v615, 64
    %v818 = vpop.permute.xlu0 %817
    %823 = vrot.lane.b32.xlu0 %v627, 64
    %v824 = vpop.permute.xlu0 %823
    %825 = vrot.lane.b32.xlu0 %v629, 64
    %v826 = vpop.permute.xlu0 %825
    %831 = vrot.lane.b32.xlu0 %v641, 64
    %v832 = vpop.permute.xlu0 %831
    %833 = vrot.lane.b32.xlu0 %v643, 64
    %v834 = vpop.permute.xlu0 %833
    %v837 = vpack.c.bf16 %v571, %v571
    %v838 = vpack.c.bf16 %v573, %v573
    %v839 = vpack.c.bf16 %v792, %v792
    %v840 = vpack.c.bf16 %v794, %v794
    %v841 = vpack.c.bf16 %v585, %v585
    %v842 = vpack.c.bf16 %v587, %v587
    %v843 = vpack.c.bf16 %v800, %v800
    %v844 = vpack.c.bf16 %v802, %v802
    %v845 = vpack.c.bf16 %v599, %v599
    %v846 = vpack.c.bf16 %v601, %v601
    %v847 = vpack.c.bf16 %v808, %v808
    %v848 = vpack.c.bf16 %v810, %v810
    %v849 = vpack.c.bf16 %v613, %v613
    %v850 = vpack.c.bf16 %v615, %v615
    %v851 = vpack.c.bf16 %v816, %v816
    %v852 = vpack.c.bf16 %v818, %v818
    %v853 = vpack.c.bf16 %v627, %v627
    %v854 = vpack.c.bf16 %v629, %v629
    %v855 = vpack.c.bf16 %v824, %v824
    %v856 = vpack.c.bf16 %v826, %v826
    %v857 = vpack.c.bf16 %v641, %v641
    %v858 = vpack.c.bf16 %v643, %v643
    %v859 = vpack.c.bf16 %v832, %v832
    %v860 = vpack.c.bf16 %v834, %v834
    %vm861 = vcmask 523264
    %v863 = vsel %vm861, %v693, 0
    %v866 = vsel %vm861, %v765, 0
    %868 = vmatpush.bf16.xpose.msra.mxu0 0
    %869 = vmatpush.bf16.xpose.msra.mxu0 0
    %870 = vmatpush.bf16.xpose.msra.mxu0 0
    %871 = vmatpush.bf16.xpose.msra.mxu0 0
    %872 = vmatpush.bf16.xpose.msra.mxu0 0
    %873 = vmatpush.bf16.xpose.msra.mxu0 0
    %874 = vmatpush.bf16.xpose.msra.mxu0 0
    %875 = vmatpush.bf16.xpose.msra.mxu0 %v866
    %876 = vmatmul.bf16.gmra.mxu0 %v863
    %v877 = vpop.f32.mrf.mxu0
    %v878 = vadd.f32 0.0, %v877
    %v879 = vpop.f32.mrf.mxu0
    %880 = vdwg.mxu0
    %v882 = vsel %vm861, %v694, 0
    %v885 = vsel %vm861, %v766, 0
    %887 = vmatpush.bf16.xpose.msra.mxu0 0
    %888 = vmatpush.bf16.xpose.msra.mxu0 0
    %889 = vmatpush.bf16.xpose.msra.mxu0 0
    %890 = vmatpush.bf16.xpose.msra.mxu0 0
    %891 = vmatpush.bf16.xpose.msra.mxu0 0
    %892 = vmatpush.bf16.xpose.msra.mxu0 0
    %893 = vmatpush.bf16.xpose.msra.mxu0 0
    %894 = vmatpush.bf16.xpose.msra.mxu0 %v885
    %895 = vmatmul.bf16.gmra.mxu0 %v882
    %v896 = vpop.f32.mrf.mxu0
    %v897 = vadd.f32 0.0, %v896
    %v898 = vpop.f32.mrf.mxu0
    %899 = vdwg.mxu0
    %v901 = vsel %vm861, %v695, 0
    %v904 = vsel %vm861, %v767, 0
    %906 = vmatpush.bf16.xpose.msra.mxu0 0
    %907 = vmatpush.bf16.xpose.msra.mxu0 0
    %908 = vmatpush.bf16.xpose.msra.mxu0 0
    %909 = vmatpush.bf16.xpose.msra.mxu0 0
    %910 = vmatpush.bf16.xpose.msra.mxu0 0
    %911 = vmatpush.bf16.xpose.msra.mxu0 0
    %912 = vmatpush.bf16.xpose.msra.mxu0 0
    %913 = vmatpush.bf16.xpose.msra.mxu0 %v904
    %914 = vmatmul.bf16.gmra.mxu0 %v901
    %v915 = vpop.f32.mrf.mxu0
    %v916 = vadd.f32 0.0, %v915
    %v917 = vpop.f32.mrf.mxu0
    %918 = vdwg.mxu0
    %v920 = vsel %vm861, %v696, 0
    %v923 = vsel %vm861, %v768, 0
    %925 = vmatpush.bf16.xpose.msra.mxu0 0
    %926 = vmatpush.bf16.xpose.msra.mxu0 0
    %927 = vmatpush.bf16.xpose.msra.mxu0 0
    %928 = vmatpush.bf16.xpose.msra.mxu0 0
    %929 = vmatpush.bf16.xpose.msra.mxu0 0
    %930 = vmatpush.bf16.xpose.msra.mxu0 0
    %931 = vmatpush.bf16.xpose.msra.mxu0 0
    %932 = vmatpush.bf16.xpose.msra.mxu0 %v923
    %933 = vmatmul.bf16.gmra.mxu0 %v920
    %v934 = vpop.f32.mrf.mxu0
    %v935 = vadd.f32 0.0, %v934
    %v936 = vpop.f32.mrf.mxu0
    %937 = vdwg.mxu0
    %v939 = vsel %vm861, %v697, 0
    %v942 = vsel %vm861, %v769, 0
    %944 = vmatpush.bf16.xpose.msra.mxu0 0
    %945 = vmatpush.bf16.xpose.msra.mxu0 0
    %946 = vmatpush.bf16.xpose.msra.mxu0 0
    %947 = vmatpush.bf16.xpose.msra.mxu0 0
    %948 = vmatpush.bf16.xpose.msra.mxu0 0
    %949 = vmatpush.bf16.xpose.msra.mxu0 0
    %950 = vmatpush.bf16.xpose.msra.mxu0 0
    %951 = vmatpush.bf16.xpose.msra.mxu0 %v942
    %952 = vmatmul.bf16.gmra.mxu0 %v939
    %v953 = vpop.f32.mrf.mxu0
    %v954 = vadd.f32 0.0, %v953
    %v955 = vpop.f32.mrf.mxu0
    %956 = vdwg.mxu0
    %v958 = vsel %vm861, %v698, 0
    %v961 = vsel %vm861, %v770, 0
    %963 = vmatpush.bf16.xpose.msra.mxu0 0
    %964 = vmatpush.bf16.xpose.msra.mxu0 0
    %965 = vmatpush.bf16.xpose.msra.mxu0 0
    %966 = vmatpush.bf16.xpose.msra.mxu0 0
    %967 = vmatpush.bf16.xpose.msra.mxu0 0
    %968 = vmatpush.bf16.xpose.msra.mxu0 0
    %969 = vmatpush.bf16.xpose.msra.mxu0 0
    %970 = vmatpush.bf16.xpose.msra.mxu0 %v961
    %971 = vmatmul.bf16.gmra.mxu0 %v958
    %v972 = vpop.f32.mrf.mxu0
    %v973 = vadd.f32 0.0, %v972
    %v974 = vpop.f32.mrf.mxu0
    %975 = vdwg.mxu0
    %v977 = vsel %vm861, %v699, 0
    %v980 = vsel %vm861, %v771, 0
    %982 = vmatpush.bf16.xpose.msra.mxu0 0
    %983 = vmatpush.bf16.xpose.msra.mxu0 0
    %984 = vmatpush.bf16.xpose.msra.mxu0 0
    %985 = vmatpush.bf16.xpose.msra.mxu0 0
    %986 = vmatpush.bf16.xpose.msra.mxu0 0
    %987 = vmatpush.bf16.xpose.msra.mxu0 0
    %988 = vmatpush.bf16.xpose.msra.mxu0 0
    %989 = vmatpush.bf16.xpose.msra.mxu0 %v980
    %990 = vmatmul.bf16.gmra.mxu0 %v977
    %v991 = vpop.f32.mrf.mxu0
    %v992 = vadd.f32 0.0, %v991
    %v993 = vpop.f32.mrf.mxu0
    %994 = vdwg.mxu0
    %v996 = vsel %vm861, %v700, 0
    %v999 = vsel %vm861, %v772, 0
    %1001 = vmatpush.bf16.xpose.msra.mxu0 0
    %1002 = vmatpush.bf16.xpose.msra.mxu0 0
    %1003 = vmatpush.bf16.xpose.msra.mxu0 0
    %1004 = vmatpush.bf16.xpose.msra.mxu0 0
    %1005 = vmatpush.bf16.xpose.msra.mxu0 0
    %1006 = vmatpush.bf16.xpose.msra.mxu0 0
    %1007 = vmatpush.bf16.xpose.msra.mxu0 0
    %1008 = vmatpush.bf16.xpose.msra.mxu0 %v999
    %1009 = vmatmul.bf16.gmra.mxu0 %v996
    %v1010 = vpop.f32.mrf.mxu0
    %v1011 = vadd.f32 0.0, %v1010
    %v1012 = vpop.f32.mrf.mxu0
    %1013 = vdwg.mxu0
    %v1015 = vsel %vm861, %v701, 0
    %v1018 = vsel %vm861, %v773, 0
    %1020 = vmatpush.bf16.xpose.msra.mxu0 0
    %1021 = vmatpush.bf16.xpose.msra.mxu0 0
    %1022 = vmatpush.bf16.xpose.msra.mxu0 0
    %1023 = vmatpush.bf16.xpose.msra.mxu0 0
    %1024 = vmatpush.bf16.xpose.msra.mxu0 0
    %1025 = vmatpush.bf16.xpose.msra.mxu0 0
    %1026 = vmatpush.bf16.xpose.msra.mxu0 0
    %1027 = vmatpush.bf16.xpose.msra.mxu0 %v1018
    %1028 = vmatmul.bf16.gmra.mxu0 %v1015
    %v1029 = vpop.f32.mrf.mxu0
    %v1030 = vadd.f32 0.0, %v1029
    %v1031 = vpop.f32.mrf.mxu0
    %1032 = vdwg.mxu0
    %v1034 = vsel %vm861, %v702, 0
    %v1037 = vsel %vm861, %v774, 0
    %1039 = vmatpush.bf16.xpose.msra.mxu0 0
    %1040 = vmatpush.bf16.xpose.msra.mxu0 0
    %1041 = vmatpush.bf16.xpose.msra.mxu0 0
    %1042 = vmatpush.bf16.xpose.msra.mxu0 0
    %1043 = vmatpush.bf16.xpose.msra.mxu0 0
    %1044 = vmatpush.bf16.xpose.msra.mxu0 0
    %1045 = vmatpush.bf16.xpose.msra.mxu0 0
    %1046 = vmatpush.bf16.xpose.msra.mxu0 %v1037
    %1047 = vmatmul.bf16.gmra.mxu0 %v1034
    %v1048 = vpop.f32.mrf.mxu0
    %v1049 = vadd.f32 0.0, %v1048
    %v1050 = vpop.f32.mrf.mxu0
    %1051 = vdwg.mxu0
    %v1053 = vsel %vm861, %v703, 0
    %v1056 = vsel %vm861, %v775, 0
    %1058 = vmatpush.bf16.xpose.msra.mxu0 0
    %1059 = vmatpush.bf16.xpose.msra.mxu0 0
    %1060 = vmatpush.bf16.xpose.msra.mxu0 0
    %1061 = vmatpush.bf16.xpose.msra.mxu0 0
    %1062 = vmatpush.bf16.xpose.msra.mxu0 0
    %1063 = vmatpush.bf16.xpose.msra.mxu0 0
    %1064 = vmatpush.bf16.xpose.msra.mxu0 0
    %1065 = vmatpush.bf16.xpose.msra.mxu0 %v1056
    %1066 = vmatmul.bf16.gmra.mxu0 %v1053
    %v1067 = vpop.f32.mrf.mxu0
    %v1068 = vadd.f32 0.0, %v1067
    %v1069 = vpop.f32.mrf.mxu0
    %1070 = vdwg.mxu0
    %v1072 = vsel %vm861, %v704, 0
    %v1075 = vsel %vm861, %v776, 0
    %1077 = vmatpush.bf16.xpose.msra.mxu0 0
    %1078 = vmatpush.bf16.xpose.msra.mxu0 0
    %1079 = vmatpush.bf16.xpose.msra.mxu0 0
    %1080 = vmatpush.bf16.xpose.msra.mxu0 0
    %1081 = vmatpush.bf16.xpose.msra.mxu0 0
    %1082 = vmatpush.bf16.xpose.msra.mxu0 0
    %1083 = vmatpush.bf16.xpose.msra.mxu0 0
    %1084 = vmatpush.bf16.xpose.msra.mxu0 %v1075
    %1085 = vmatmul.bf16.gmra.mxu0 %v1072
    %v1086 = vpop.f32.mrf.mxu0
    %v1087 = vadd.f32 0.0, %v1086
    %v1088 = vpop.f32.mrf.mxu0
    %1089 = vdwg.mxu0
    %v1091 = vsel %vm861, %v705, 0
    %v1094 = vsel %vm861, %v777, 0
    %1096 = vmatpush.bf16.xpose.msra.mxu0 0
    %1097 = vmatpush.bf16.xpose.msra.mxu0 0
    %1098 = vmatpush.bf16.xpose.msra.mxu0 0
    %1099 = vmatpush.bf16.xpose.msra.mxu0 0
    %1100 = vmatpush.bf16.xpose.msra.mxu0 0
    %1101 = vmatpush.bf16.xpose.msra.mxu0 0
    %1102 = vmatpush.bf16.xpose.msra.mxu0 0
    %1103 = vmatpush.bf16.xpose.msra.mxu0 %v1094
    %1104 = vmatmul.bf16.gmra.mxu0 %v1091
    %v1105 = vpop.f32.mrf.mxu0
    %v1106 = vadd.f32 0.0, %v1105
    %v1107 = vpop.f32.mrf.mxu0
    %1108 = vdwg.mxu0
    %v1110 = vsel %vm861, %v706, 0
    %v1113 = vsel %vm861, %v778, 0
    %1115 = vmatpush.bf16.xpose.msra.mxu0 0
    %1116 = vmatpush.bf16.xpose.msra.mxu0 0
    %1117 = vmatpush.bf16.xpose.msra.mxu0 0
    %1118 = vmatpush.bf16.xpose.msra.mxu0 0
    %1119 = vmatpush.bf16.xpose.msra.mxu0 0
    %1120 = vmatpush.bf16.xpose.msra.mxu0 0
    %1121 = vmatpush.bf16.xpose.msra.mxu0 0
    %1122 = vmatpush.bf16.xpose.msra.mxu0 %v1113
    %1123 = vmatmul.bf16.gmra.mxu0 %v1110
    %v1124 = vpop.f32.mrf.mxu0
    %v1125 = vadd.f32 0.0, %v1124
    %v1126 = vpop.f32.mrf.mxu0
    %1127 = vdwg.mxu0
    %v1129 = vsel %vm861, %v707, 0
    %v1132 = vsel %vm861, %v779, 0
    %1134 = vmatpush.bf16.xpose.msra.mxu0 0
    %1135 = vmatpush.bf16.xpose.msra.mxu0 0
    %1136 = vmatpush.bf16.xpose.msra.mxu0 0
    %1137 = vmatpush.bf16.xpose.msra.mxu0 0
    %1138 = vmatpush.bf16.xpose.msra.mxu0 0
    %1139 = vmatpush.bf16.xpose.msra.mxu0 0
    %1140 = vmatpush.bf16.xpose.msra.mxu0 0
    %1141 = vmatpush.bf16.xpose.msra.mxu0 %v1132
    %1142 = vmatmul.bf16.gmra.mxu0 %v1129
    %v1143 = vpop.f32.mrf.mxu0
    %v1144 = vadd.f32 0.0, %v1143
    %v1145 = vpop.f32.mrf.mxu0
    %1146 = vdwg.mxu0
    %v1148 = vsel %vm861, %v708, 0
    %v1151 = vsel %vm861, %v780, 0
    %1153 = vmatpush.bf16.xpose.msra.mxu0 0
    %1154 = vmatpush.bf16.xpose.msra.mxu0 0
    %1155 = vmatpush.bf16.xpose.msra.mxu0 0
    %1156 = vmatpush.bf16.xpose.msra.mxu0 0
    %1157 = vmatpush.bf16.xpose.msra.mxu0 0
    %1158 = vmatpush.bf16.xpose.msra.mxu0 0
    %1159 = vmatpush.bf16.xpose.msra.mxu0 0
    %1160 = vmatpush.bf16.xpose.msra.mxu0 %v1151
    %1161 = vmatmul.bf16.gmra.mxu0 %v1148
    %v1162 = vpop.f32.mrf.mxu0
    %v1163 = vadd.f32 0.0, %v1162
    %v1164 = vpop.f32.mrf.mxu0
    %1165 = vdwg.mxu0
    %v1167 = vsel %vm861, %v709, 0
    %v1170 = vsel %vm861, %v781, 0
    %1172 = vmatpush.bf16.xpose.msra.mxu0 0
    %1173 = vmatpush.bf16.xpose.msra.mxu0 0
    %1174 = vmatpush.bf16.xpose.msra.mxu0 0
    %1175 = vmatpush.bf16.xpose.msra.mxu0 0
    %1176 = vmatpush.bf16.xpose.msra.mxu0 0
    %1177 = vmatpush.bf16.xpose.msra.mxu0 0
    %1178 = vmatpush.bf16.xpose.msra.mxu0 0
    %1179 = vmatpush.bf16.xpose.msra.mxu0 %v1170
    %1180 = vmatmul.bf16.gmra.mxu0 %v1167
    %v1181 = vpop.f32.mrf.mxu0
    %v1182 = vadd.f32 0.0, %v1181
    %v1183 = vpop.f32.mrf.mxu0
    %1184 = vdwg.mxu0
    %v1186 = vsel %vm861, %v710, 0
    %v1189 = vsel %vm861, %v782, 0
    %1191 = vmatpush.bf16.xpose.msra.mxu0 0
    %1192 = vmatpush.bf16.xpose.msra.mxu0 0
    %1193 = vmatpush.bf16.xpose.msra.mxu0 0
    %1194 = vmatpush.bf16.xpose.msra.mxu0 0
    %1195 = vmatpush.bf16.xpose.msra.mxu0 0
    %1196 = vmatpush.bf16.xpose.msra.mxu0 0
    %1197 = vmatpush.bf16.xpose.msra.mxu0 0
    %1198 = vmatpush.bf16.xpose.msra.mxu0 %v1189
    %1199 = vmatmul.bf16.gmra.mxu0 %v1186
    %v1200 = vpop.f32.mrf.mxu0
    %v1201 = vadd.f32 0.0, %v1200
    %v1202 = vpop.f32.mrf.mxu0
    %1203 = vdwg.mxu0
    %v1205 = vsel %vm861, %v711, 0
    %v1208 = vsel %vm861, %v783, 0
    %1210 = vmatpush.bf16.xpose.msra.mxu0 0
    %1211 = vmatpush.bf16.xpose.msra.mxu0 0
    %1212 = vmatpush.bf16.xpose.msra.mxu0 0
    %1213 = vmatpush.bf16.xpose.msra.mxu0 0
    %1214 = vmatpush.bf16.xpose.msra.mxu0 0
    %1215 = vmatpush.bf16.xpose.msra.mxu0 0
    %1216 = vmatpush.bf16.xpose.msra.mxu0 0
    %1217 = vmatpush.bf16.xpose.msra.mxu0 %v1208
    %1218 = vmatmul.bf16.gmra.mxu0 %v1205
    %v1219 = vpop.f32.mrf.mxu0
    %v1220 = vadd.f32 0.0, %v1219
    %v1221 = vpop.f32.mrf.mxu0
    %1222 = vdwg.mxu0
    %v1224 = vsel %vm861, %v712, 0
    %v1227 = vsel %vm861, %v784, 0
    %1229 = vmatpush.bf16.xpose.msra.mxu0 0
    %1230 = vmatpush.bf16.xpose.msra.mxu0 0
    %1231 = vmatpush.bf16.xpose.msra.mxu0 0
    %1232 = vmatpush.bf16.xpose.msra.mxu0 0
    %1233 = vmatpush.bf16.xpose.msra.mxu0 0
    %1234 = vmatpush.bf16.xpose.msra.mxu0 0
    %1235 = vmatpush.bf16.xpose.msra.mxu0 0
    %1236 = vmatpush.bf16.xpose.msra.mxu0 %v1227
    %1237 = vmatmul.bf16.gmra.mxu0 %v1224
    %v1238 = vpop.f32.mrf.mxu0
    %v1239 = vadd.f32 0.0, %v1238
    %v1240 = vpop.f32.mrf.mxu0
    %1241 = vdwg.mxu0
    %v1243 = vsel %vm861, %v713, 0
    %v1246 = vsel %vm861, %v785, 0
    %1248 = vmatpush.bf16.xpose.msra.mxu0 0
    %1249 = vmatpush.bf16.xpose.msra.mxu0 0
    %1250 = vmatpush.bf16.xpose.msra.mxu0 0
    %1251 = vmatpush.bf16.xpose.msra.mxu0 0
    %1252 = vmatpush.bf16.xpose.msra.mxu0 0
    %1253 = vmatpush.bf16.xpose.msra.mxu0 0
    %1254 = vmatpush.bf16.xpose.msra.mxu0 0
    %1255 = vmatpush.bf16.xpose.msra.mxu0 %v1246
    %1256 = vmatmul.bf16.gmra.mxu0 %v1243
    %v1257 = vpop.f32.mrf.mxu0
    %v1258 = vadd.f32 0.0, %v1257
    %v1259 = vpop.f32.mrf.mxu0
    %1260 = vdwg.mxu0
    %v1262 = vsel %vm861, %v714, 0
    %v1265 = vsel %vm861, %v786, 0
    %1267 = vmatpush.bf16.xpose.msra.mxu0 0
    %1268 = vmatpush.bf16.xpose.msra.mxu0 0
    %1269 = vmatpush.bf16.xpose.msra.mxu0 0
    %1270 = vmatpush.bf16.xpose.msra.mxu0 0
    %1271 = vmatpush.bf16.xpose.msra.mxu0 0
    %1272 = vmatpush.bf16.xpose.msra.mxu0 0
    %1273 = vmatpush.bf16.xpose.msra.mxu0 0
    %1274 = vmatpush.bf16.xpose.msra.mxu0 %v1265
    %1275 = vmatmul.bf16.gmra.mxu0 %v1262
    %v1276 = vpop.f32.mrf.mxu0
    %v1277 = vadd.f32 0.0, %v1276
    %v1278 = vpop.f32.mrf.mxu0
    %1279 = vdwg.mxu0
    %v1281 = vsel %vm861, %v715, 0
    %v1284 = vsel %vm861, %v787, 0
    %1286 = vmatpush.bf16.xpose.msra.mxu0 0
    %1287 = vmatpush.bf16.xpose.msra.mxu0 0
    %1288 = vmatpush.bf16.xpose.msra.mxu0 0
    %1289 = vmatpush.bf16.xpose.msra.mxu0 0
    %1290 = vmatpush.bf16.xpose.msra.mxu0 0
    %1291 = vmatpush.bf16.xpose.msra.mxu0 0
    %1292 = vmatpush.bf16.xpose.msra.mxu0 0
    %1293 = vmatpush.bf16.xpose.msra.mxu0 %v1284
    %1294 = vmatmul.bf16.gmra.mxu0 %v1281
    %v1295 = vpop.f32.mrf.mxu0
    %v1296 = vadd.f32 0.0, %v1295
    %v1297 = vpop.f32.mrf.mxu0
    %1298 = vdwg.mxu0
    %v1300 = vsel %vm861, %v716, 0
    %v1303 = vsel %vm861, %v788, 0
    %1305 = vmatpush.bf16.xpose.msra.mxu0 0
    %1306 = vmatpush.bf16.xpose.msra.mxu0 0
    %1307 = vmatpush.bf16.xpose.msra.mxu0 0
    %1308 = vmatpush.bf16.xpose.msra.mxu0 0
    %1309 = vmatpush.bf16.xpose.msra.mxu0 0
    %1310 = vmatpush.bf16.xpose.msra.mxu0 0
    %1311 = vmatpush.bf16.xpose.msra.mxu0 0
    %1312 = vmatpush.bf16.xpose.msra.mxu0 %v1303
    %1313 = vmatmul.bf16.gmra.mxu0 %v1300
    %v1314 = vpop.f32.mrf.mxu0
    %v1315 = vadd.f32 0.0, %v1314
    %v1316 = vpop.f32.mrf.mxu0
    %1317 = vdwg.mxu0
    %vm1318 = vcmask 64512
    %v1319 = vsel %vm1318, %v878, -inf
    %1320 = vmax.xlane.f32.xlu0 %v1319
    %v1321 = vpop.xlane.xlu0 %1320
    %v1322 = vsel %vm1318, %v897, -inf
    %1323 = vmax.xlane.f32.xlu0 %v1322
    %v1324 = vpop.xlane.xlu0 %1323
    %v1325 = vsel %vm1318, %v916, -inf
    %1326 = vmax.xlane.f32.xlu0 %v1325
    %v1327 = vpop.xlane.xlu0 %1326
    %v1328 = vsel %vm1318, %v935, -inf
    %1329 = vmax.xlane.f32.xlu0 %v1328
    %v1330 = vpop.xlane.xlu0 %1329
    %v1331 = vsel %vm1318, %v954, -inf
    %1332 = vmax.xlane.f32.xlu0 %v1331
    %v1333 = vpop.xlane.xlu0 %1332
    %v1334 = vsel %vm1318, %v973, -inf
    %1335 = vmax.xlane.f32.xlu0 %v1334
    %v1336 = vpop.xlane.xlu0 %1335
    %v1337 = vsel %vm1318, %v992, -inf
    %1338 = vmax.xlane.f32.xlu0 %v1337
    %v1339 = vpop.xlane.xlu0 %1338
    %v1340 = vsel %vm1318, %v1011, -inf
    %1341 = vmax.xlane.f32.xlu0 %v1340
    %v1342 = vpop.xlane.xlu0 %1341
    %v1343 = vsel %vm1318, %v1030, -inf
    %1344 = vmax.xlane.f32.xlu0 %v1343
    %v1345 = vpop.xlane.xlu0 %1344
    %v1346 = vsel %vm1318, %v1049, -inf
    %1347 = vmax.xlane.f32.xlu0 %v1346
    %v1348 = vpop.xlane.xlu0 %1347
    %v1349 = vsel %vm1318, %v1068, -inf
    %1350 = vmax.xlane.f32.xlu0 %v1349
    %v1351 = vpop.xlane.xlu0 %1350
    %v1352 = vsel %vm1318, %v1087, -inf
    %1353 = vmax.xlane.f32.xlu0 %v1352
    %v1354 = vpop.xlane.xlu0 %1353
    %v1355 = vsel %vm1318, %v1106, -inf
    %1356 = vmax.xlane.f32.xlu0 %v1355
    %v1357 = vpop.xlane.xlu0 %1356
    %v1358 = vsel %vm1318, %v1125, -inf
    %1359 = vmax.xlane.f32.xlu0 %v1358
    %v1360 = vpop.xlane.xlu0 %1359
    %v1361 = vsel %vm1318, %v1144, -inf
    %1362 = vmax.xlane.f32.xlu0 %v1361
    %v1363 = vpop.xlane.xlu0 %1362
    %v1364 = vsel %vm1318, %v1163, -inf
    %1365 = vmax.xlane.f32.xlu0 %v1364
    %v1366 = vpop.xlane.xlu0 %1365
    %v1367 = vsel %vm1318, %v1182, -inf
    %1368 = vmax.xlane.f32.xlu0 %v1367
    %v1369 = vpop.xlane.xlu0 %1368
    %v1370 = vsel %vm1318, %v1201, -inf
    %1371 = vmax.xlane.f32.xlu0 %v1370
    %v1372 = vpop.xlane.xlu0 %1371
    %v1373 = vsel %vm1318, %v1220, -inf
    %1374 = vmax.xlane.f32.xlu0 %v1373
    %v1375 = vpop.xlane.xlu0 %1374
    %v1376 = vsel %vm1318, %v1239, -inf
    %1377 = vmax.xlane.f32.xlu0 %v1376
    %v1378 = vpop.xlane.xlu0 %1377
    %v1379 = vsel %vm1318, %v1258, -inf
    %1380 = vmax.xlane.f32.xlu0 %v1379
    %v1381 = vpop.xlane.xlu0 %1380
    %v1382 = vsel %vm1318, %v1277, -inf
    %1383 = vmax.xlane.f32.xlu0 %v1382
    %v1384 = vpop.xlane.xlu0 %1383
    %v1385 = vsel %vm1318, %v1296, -inf
    %1386 = vmax.xlane.f32.xlu0 %v1385
    %v1387 = vpop.xlane.xlu0 %1386
    %v1388 = vsel %vm1318, %v1315, -inf
    %1389 = vmax.xlane.f32.xlu0 %v1388
    %v1390 = vpop.xlane.xlu0 %1389
    %v1391 = vsub.f32 %v878, %v1321
    %v1392 = vsub.f32 %v897, %v1324
    %v1393 = vsub.f32 %v916, %v1327
    %v1394 = vsub.f32 %v935, %v1330
    %v1395 = vsub.f32 %v954, %v1333
    %v1396 = vsub.f32 %v973, %v1336
    %v1397 = vsub.f32 %v992, %v1339
    %v1398 = vsub.f32 %v1011, %v1342
    %v1399 = vsub.f32 %v1030, %v1345
    %v1400 = vsub.f32 %v1049, %v1348
    %v1401 = vsub.f32 %v1068, %v1351
    %v1402 = vsub.f32 %v1087, %v1354
    %v1403 = vsub.f32 %v1106, %v1357
    %v1404 = vsub.f32 %v1125, %v1360
    %v1405 = vsub.f32 %v1144, %v1363
    %v1406 = vsub.f32 %v1163, %v1366
    %v1407 = vsub.f32 %v1182, %v1369
    %v1408 = vsub.f32 %v1201, %v1372
    %v1409 = vsub.f32 %v1220, %v1375
    %v1410 = vsub.f32 %v1239, %v1378
    %v1411 = vsub.f32 %v1258, %v1381
    %v1412 = vsub.f32 %v1277, %v1384
    %v1413 = vsub.f32 %v1296, %v1387
    %v1414 = vsub.f32 %v1315, %v1390
    %v1415 = vmul.f32 %v1391, 1.442695
    %v1416 = vpow.pop %v1415
    %v1417 = vmul.f32 %v1392, 1.442695
    %v1418 = vpow.pop %v1417
    %v1419 = vmul.f32 %v1393, 1.442695
    %v1420 = vpow.pop %v1419
    %v1421 = vmul.f32 %v1394, 1.442695
    %v1422 = vpow.pop %v1421
    %v1423 = vmul.f32 %v1395, 1.442695
    %v1424 = vpow.pop %v1423
    %v1425 = vmul.f32 %v1396, 1.442695
    %v1426 = vpow.pop %v1425
    %v1427 = vmul.f32 %v1397, 1.442695
    %v1428 = vpow.pop %v1427
    %v1429 = vmul.f32 %v1398, 1.442695
    %v1430 = vpow.pop %v1429
    %v1431 = vmul.f32 %v1399, 1.442695
    %v1432 = vpow.pop %v1431
    %v1433 = vmul.f32 %v1400, 1.442695
    %v1434 = vpow.pop %v1433
    %v1435 = vmul.f32 %v1401, 1.442695
    %v1436 = vpow.pop %v1435
    %v1437 = vmul.f32 %v1402, 1.442695
    %v1438 = vpow.pop %v1437
    %v1439 = vmul.f32 %v1403, 1.442695
    %v1440 = vpow.pop %v1439
    %v1441 = vmul.f32 %v1404, 1.442695
    %v1442 = vpow.pop %v1441
    %v1443 = vmul.f32 %v1405, 1.442695
    %v1444 = vpow.pop %v1443
    %v1445 = vmul.f32 %v1406, 1.442695
    %v1446 = vpow.pop %v1445
    %v1447 = vmul.f32 %v1407, 1.442695
    %v1448 = vpow.pop %v1447
    %v1449 = vmul.f32 %v1408, 1.442695
    %v1450 = vpow.pop %v1449
    %v1451 = vmul.f32 %v1409, 1.442695
    %v1452 = vpow.pop %v1451
    %v1453 = vmul.f32 %v1410, 1.442695
    %v1454 = vpow.pop %v1453
    %v1455 = vmul.f32 %v1411, 1.442695
    %v1456 = vpow.pop %v1455
    %v1457 = vmul.f32 %v1412, 1.442695
    %v1458 = vpow.pop %v1457
    %v1459 = vmul.f32 %v1413, 1.442695
    %v1460 = vpow.pop %v1459
    %v1461 = vmul.f32 %v1414, 1.442695
    %v1462 = vpow.pop %v1461
    %v1463 = vsel %vm1318, %v1416, 0.0
    %1464 = vadd.xlane.f32.xlu0 %v1463
    %v1465 = vpop.xlane.xlu0 %1464
    %v1466 = vsel %vm1318, %v1418, 0.0
    %1467 = vadd.xlane.f32.xlu0 %v1466
    %v1468 = vpop.xlane.xlu0 %1467
    %v1469 = vsel %vm1318, %v1420, 0.0
    %1470 = vadd.xlane.f32.xlu0 %v1469
    %v1471 = vpop.xlane.xlu0 %1470
    %v1472 = vsel %vm1318, %v1422, 0.0
    %1473 = vadd.xlane.f32.xlu0 %v1472
    %v1474 = vpop.xlane.xlu0 %1473
    %v1475 = vsel %vm1318, %v1424, 0.0
    %1476 = vadd.xlane.f32.xlu0 %v1475
    %v1477 = vpop.xlane.xlu0 %1476
    %v1478 = vsel %vm1318, %v1426, 0.0
    %1479 = vadd.xlane.f32.xlu0 %v1478
    %v1480 = vpop.xlane.xlu0 %1479
    %v1481 = vsel %vm1318, %v1428, 0.0
    %1482 = vadd.xlane.f32.xlu0 %v1481
    %v1483 = vpop.xlane.xlu0 %1482
    %v1484 = vsel %vm1318, %v1430, 0.0
    %1485 = vadd.xlane.f32.xlu0 %v1484
    %v1486 = vpop.xlane.xlu0 %1485
    %v1487 = vsel %vm1318, %v1432, 0.0
    %1488 = vadd.xlane.f32.xlu0 %v1487
    %v1489 = vpop.xlane.xlu0 %1488
    %v1490 = vsel %vm1318, %v1434, 0.0
    %1491 = vadd.xlane.f32.xlu0 %v1490
    %v1492 = vpop.xlane.xlu0 %1491
    %v1493 = vsel %vm1318, %v1436, 0.0
    %1494 = vadd.xlane.f32.xlu0 %v1493
    %v1495 = vpop.xlane.xlu0 %1494
    %v1496 = vsel %vm1318, %v1438, 0.0
    %1497 = vadd.xlane.f32.xlu0 %v1496
    %v1498 = vpop.xlane.xlu0 %1497
    %v1499 = vsel %vm1318, %v1440, 0.0
    %1500 = vadd.xlane.f32.xlu0 %v1499
    %v1501 = vpop.xlane.xlu0 %1500
    %v1502 = vsel %vm1318, %v1442, 0.0
    %1503 = vadd.xlane.f32.xlu0 %v1502
    %v1504 = vpop.xlane.xlu0 %1503
    %v1505 = vsel %vm1318, %v1444, 0.0
    %1506 = vadd.xlane.f32.xlu0 %v1505
    %v1507 = vpop.xlane.xlu0 %1506
    %v1508 = vsel %vm1318, %v1446, 0.0
    %1509 = vadd.xlane.f32.xlu0 %v1508
    %v1510 = vpop.xlane.xlu0 %1509
    %v1511 = vsel %vm1318, %v1448, 0.0
    %1512 = vadd.xlane.f32.xlu0 %v1511
    %v1513 = vpop.xlane.xlu0 %1512
    %v1514 = vsel %vm1318, %v1450, 0.0
    %1515 = vadd.xlane.f32.xlu0 %v1514
    %v1516 = vpop.xlane.xlu0 %1515
    %v1517 = vsel %vm1318, %v1452, 0.0
    %1518 = vadd.xlane.f32.xlu0 %v1517
    %v1519 = vpop.xlane.xlu0 %1518
    %v1520 = vsel %vm1318, %v1454, 0.0
    %1521 = vadd.xlane.f32.xlu0 %v1520
    %v1522 = vpop.xlane.xlu0 %1521
    %v1523 = vsel %vm1318, %v1456, 0.0
    %1524 = vadd.xlane.f32.xlu0 %v1523
    %v1525 = vpop.xlane.xlu0 %1524
    %v1526 = vsel %vm1318, %v1458, 0.0
    %1527 = vadd.xlane.f32.xlu0 %v1526
    %v1528 = vpop.xlane.xlu0 %1527
    %v1529 = vsel %vm1318, %v1460, 0.0
    %1530 = vadd.xlane.f32.xlu0 %v1529
    %v1531 = vpop.xlane.xlu0 %1530
    %v1532 = vsel %vm1318, %v1462, 0.0
    %1533 = vadd.xlane.f32.xlu0 %v1532
    %v1534 = vpop.xlane.xlu0 %1533
    %v1535 = vrcp.pop %v1465
    %v1536 = vmul.f32 %v1465, %v1535
    %v1537 = vsub.f32 1.0, %v1536
    %v1538 = vmul.f32 %v1535, %v1537
    %v1539 = vadd.f32 %v1535, %v1538
    %vm1540 = vweird.f32 %v1465
    %vm1541 = vweird.f32 %v1535
    %vm1542 = vmor %vm1540, %vm1541
    %v1543 = vsel %vm1542, %v1535, %v1539
    %v1544 = vand.u32 2147483647, %v1465
    %vm1545 = vcmp.eq.f32.partialorder %v1544, 8.507059e+37
    %v1546 = vand.u32 %v1465, 2147483648
    %v1547 = vor.u32 1.1754944e-38, %v1546
    %v1548 = vsel %vm1545, %v1547, %v1543
    %v1549 = vmul.f32 %v1416, %v1548
    %v1550 = vrcp.pop %v1468
    %v1551 = vmul.f32 %v1468, %v1550
    %v1552 = vsub.f32 1.0, %v1551
    %v1553 = vmul.f32 %v1550, %v1552
    %v1554 = vadd.f32 %v1550, %v1553
    %vm1555 = vweird.f32 %v1468
    %vm1556 = vweird.f32 %v1550
    %vm1557 = vmor %vm1555, %vm1556
    %v1558 = vsel %vm1557, %v1550, %v1554
    %v1559 = vand.u32 2147483647, %v1468
    %vm1560 = vcmp.eq.f32.partialorder %v1559, 8.507059e+37
    %v1561 = vand.u32 %v1468, 2147483648
    %v1562 = vor.u32 1.1754944e-38, %v1561
    %v1563 = vsel %vm1560, %v1562, %v1558
    %v1564 = vmul.f32 %v1418, %v1563
    %v1565 = vrcp.pop %v1471
    %v1566 = vmul.f32 %v1471, %v1565
    %v1567 = vsub.f32 1.0, %v1566
    %v1568 = vmul.f32 %v1565, %v1567
    %v1569 = vadd.f32 %v1565, %v1568
    %vm1570 = vweird.f32 %v1471
    %vm1571 = vweird.f32 %v1565
    %vm1572 = vmor %vm1570, %vm1571
    %v1573 = vsel %vm1572, %v1565, %v1569
    %v1574 = vand.u32 2147483647, %v1471
    %vm1575 = vcmp.eq.f32.partialorder %v1574, 8.507059e+37
    %v1576 = vand.u32 %v1471, 2147483648
    %v1577 = vor.u32 1.1754944e-38, %v1576
    %v1578 = vsel %vm1575, %v1577, %v1573
    %v1579 = vmul.f32 %v1420, %v1578
    %v1580 = vrcp.pop %v1474
    %v1581 = vmul.f32 %v1474, %v1580
    %v1582 = vsub.f32 1.0, %v1581
    %v1583 = vmul.f32 %v1580, %v1582
    %v1584 = vadd.f32 %v1580, %v1583
    %vm1585 = vweird.f32 %v1474
    %vm1586 = vweird.f32 %v1580
    %vm1587 = vmor %vm1585, %vm1586
    %v1588 = vsel %vm1587, %v1580, %v1584
    %v1589 = vand.u32 2147483647, %v1474
    %vm1590 = vcmp.eq.f32.partialorder %v1589, 8.507059e+37
    %v1591 = vand.u32 %v1474, 2147483648
    %v1592 = vor.u32 1.1754944e-38, %v1591
    %v1593 = vsel %vm1590, %v1592, %v1588
    %v1594 = vmul.f32 %v1422, %v1593
    %v1595 = vrcp.pop %v1477
    %v1596 = vmul.f32 %v1477, %v1595
    %v1597 = vsub.f32 1.0, %v1596
    %v1598 = vmul.f32 %v1595, %v1597
    %v1599 = vadd.f32 %v1595, %v1598
    %vm1600 = vweird.f32 %v1477
    %vm1601 = vweird.f32 %v1595
    %vm1602 = vmor %vm1600, %vm1601
    %v1603 = vsel %vm1602, %v1595, %v1599
    %v1604 = vand.u32 2147483647, %v1477
    %vm1605 = vcmp.eq.f32.partialorder %v1604, 8.507059e+37
    %v1606 = vand.u32 %v1477, 2147483648
    %v1607 = vor.u32 1.1754944e-38, %v1606
    %v1608 = vsel %vm1605, %v1607, %v1603
    %v1609 = vmul.f32 %v1424, %v1608
    %v1610 = vrcp.pop %v1480
    %v1611 = vmul.f32 %v1480, %v1610
    %v1612 = vsub.f32 1.0, %v1611
    %v1613 = vmul.f32 %v1610, %v1612
    %v1614 = vadd.f32 %v1610, %v1613
    %vm1615 = vweird.f32 %v1480
    %vm1616 = vweird.f32 %v1610
    %vm1617 = vmor %vm1615, %vm1616
    %v1618 = vsel %vm1617, %v1610, %v1614
    %v1619 = vand.u32 2147483647, %v1480
    %vm1620 = vcmp.eq.f32.partialorder %v1619, 8.507059e+37
    %v1621 = vand.u32 %v1480, 2147483648
    %v1622 = vor.u32 1.1754944e-38, %v1621
    %v1623 = vsel %vm1620, %v1622, %v1618
    %v1624 = vmul.f32 %v1426, %v1623
    %v1625 = vrcp.pop %v1483
    %v1626 = vmul.f32 %v1483, %v1625
    %v1627 = vsub.f32 1.0, %v1626
    %v1628 = vmul.f32 %v1625, %v1627
    %v1629 = vadd.f32 %v1625, %v1628
    %vm1630 = vweird.f32 %v1483
    %vm1631 = vweird.f32 %v1625
    %vm1632 = vmor %vm1630, %vm1631
    %v1633 = vsel %vm1632, %v1625, %v1629
    %v1634 = vand.u32 2147483647, %v1483
    %vm1635 = vcmp.eq.f32.partialorder %v1634, 8.507059e+37
    %v1636 = vand.u32 %v1483, 2147483648
    %v1637 = vor.u32 1.1754944e-38, %v1636
    %v1638 = vsel %vm1635, %v1637, %v1633
    %v1639 = vmul.f32 %v1428, %v1638
    %v1640 = vrcp.pop %v1486
    %v1641 = vmul.f32 %v1486, %v1640
    %v1642 = vsub.f32 1.0, %v1641
    %v1643 = vmul.f32 %v1640, %v1642
    %v1644 = vadd.f32 %v1640, %v1643
    %vm1645 = vweird.f32 %v1486
    %vm1646 = vweird.f32 %v1640
    %vm1647 = vmor %vm1645, %vm1646
    %v1648 = vsel %vm1647, %v1640, %v1644
    %v1649 = vand.u32 2147483647, %v1486
    %vm1650 = vcmp.eq.f32.partialorder %v1649, 8.507059e+37
    %v1651 = vand.u32 %v1486, 2147483648
    %v1652 = vor.u32 1.1754944e-38, %v1651
    %v1653 = vsel %vm1650, %v1652, %v1648
    %v1654 = vmul.f32 %v1430, %v1653
    %v1655 = vrcp.pop %v1489
    %v1656 = vmul.f32 %v1489, %v1655
    %v1657 = vsub.f32 1.0, %v1656
    %v1658 = vmul.f32 %v1655, %v1657
    %v1659 = vadd.f32 %v1655, %v1658
    %vm1660 = vweird.f32 %v1489
    %vm1661 = vweird.f32 %v1655
    %vm1662 = vmor %vm1660, %vm1661
    %v1663 = vsel %vm1662, %v1655, %v1659
    %v1664 = vand.u32 2147483647, %v1489
    %vm1665 = vcmp.eq.f32.partialorder %v1664, 8.507059e+37
    %v1666 = vand.u32 %v1489, 2147483648
    %v1667 = vor.u32 1.1754944e-38, %v1666
    %v1668 = vsel %vm1665, %v1667, %v1663
    %v1669 = vmul.f32 %v1432, %v1668
    %v1670 = vrcp.pop %v1492
    %v1671 = vmul.f32 %v1492, %v1670
    %v1672 = vsub.f32 1.0, %v1671
    %v1673 = vmul.f32 %v1670, %v1672
    %v1674 = vadd.f32 %v1670, %v1673
    %vm1675 = vweird.f32 %v1492
    %vm1676 = vweird.f32 %v1670
    %vm1677 = vmor %vm1675, %vm1676
    %v1678 = vsel %vm1677, %v1670, %v1674
    %v1679 = vand.u32 2147483647, %v1492
    %vm1680 = vcmp.eq.f32.partialorder %v1679, 8.507059e+37
    %v1681 = vand.u32 %v1492, 2147483648
    %v1682 = vor.u32 1.1754944e-38, %v1681
    %v1683 = vsel %vm1680, %v1682, %v1678
    %v1684 = vmul.f32 %v1434, %v1683
    %v1685 = vrcp.pop %v1495
    %v1686 = vmul.f32 %v1495, %v1685
    %v1687 = vsub.f32 1.0, %v1686
    %v1688 = vmul.f32 %v1685, %v1687
    %v1689 = vadd.f32 %v1685, %v1688
    %vm1690 = vweird.f32 %v1495
    %vm1691 = vweird.f32 %v1685
    %vm1692 = vmor %vm1690, %vm1691
    %v1693 = vsel %vm1692, %v1685, %v1689
    %v1694 = vand.u32 2147483647, %v1495
    %vm1695 = vcmp.eq.f32.partialorder %v1694, 8.507059e+37
    %v1696 = vand.u32 %v1495, 2147483648
    %v1697 = vor.u32 1.1754944e-38, %v1696
    %v1698 = vsel %vm1695, %v1697, %v1693
    %v1699 = vmul.f32 %v1436, %v1698
    %v1700 = vrcp.pop %v1498
    %v1701 = vmul.f32 %v1498, %v1700
    %v1702 = vsub.f32 1.0, %v1701
    %v1703 = vmul.f32 %v1700, %v1702
    %v1704 = vadd.f32 %v1700, %v1703
    %vm1705 = vweird.f32 %v1498
    %vm1706 = vweird.f32 %v1700
    %vm1707 = vmor %vm1705, %vm1706
    %v1708 = vsel %vm1707, %v1700, %v1704
    %v1709 = vand.u32 2147483647, %v1498
    %vm1710 = vcmp.eq.f32.partialorder %v1709, 8.507059e+37
    %v1711 = vand.u32 %v1498, 2147483648
    %v1712 = vor.u32 1.1754944e-38, %v1711
    %v1713 = vsel %vm1710, %v1712, %v1708
    %v1714 = vmul.f32 %v1438, %v1713
    %v1715 = vrcp.pop %v1501
    %v1716 = vmul.f32 %v1501, %v1715
    %v1717 = vsub.f32 1.0, %v1716
    %v1718 = vmul.f32 %v1715, %v1717
    %v1719 = vadd.f32 %v1715, %v1718
    %vm1720 = vweird.f32 %v1501
    %vm1721 = vweird.f32 %v1715
    %vm1722 = vmor %vm1720, %vm1721
    %v1723 = vsel %vm1722, %v1715, %v1719
    %v1724 = vand.u32 2147483647, %v1501
    %vm1725 = vcmp.eq.f32.partialorder %v1724, 8.507059e+37
    %v1726 = vand.u32 %v1501, 2147483648
    %v1727 = vor.u32 1.1754944e-38, %v1726
    %v1728 = vsel %vm1725, %v1727, %v1723
    %v1729 = vmul.f32 %v1440, %v1728
    %v1730 = vrcp.pop %v1504
    %v1731 = vmul.f32 %v1504, %v1730
    %v1732 = vsub.f32 1.0, %v1731
    %v1733 = vmul.f32 %v1730, %v1732
    %v1734 = vadd.f32 %v1730, %v1733
    %vm1735 = vweird.f32 %v1504
    %vm1736 = vweird.f32 %v1730
    %vm1737 = vmor %vm1735, %vm1736
    %v1738 = vsel %vm1737, %v1730, %v1734
    %v1739 = vand.u32 2147483647, %v1504
    %vm1740 = vcmp.eq.f32.partialorder %v1739, 8.507059e+37
    %v1741 = vand.u32 %v1504, 2147483648
    %v1742 = vor.u32 1.1754944e-38, %v1741
    %v1743 = vsel %vm1740, %v1742, %v1738
    %v1744 = vmul.f32 %v1442, %v1743
    %v1745 = vrcp.pop %v1507
    %v1746 = vmul.f32 %v1507, %v1745
    %v1747 = vsub.f32 1.0, %v1746
    %v1748 = vmul.f32 %v1745, %v1747
    %v1749 = vadd.f32 %v1745, %v1748
    %vm1750 = vweird.f32 %v1507
    %vm1751 = vweird.f32 %v1745
    %vm1752 = vmor %vm1750, %vm1751
    %v1753 = vsel %vm1752, %v1745, %v1749
    %v1754 = vand.u32 2147483647, %v1507
    %vm1755 = vcmp.eq.f32.partialorder %v1754, 8.507059e+37
    %v1756 = vand.u32 %v1507, 2147483648
    %v1757 = vor.u32 1.1754944e-38, %v1756
    %v1758 = vsel %vm1755, %v1757, %v1753
    %v1759 = vmul.f32 %v1444, %v1758
    %v1760 = vrcp.pop %v1510
    %v1761 = vmul.f32 %v1510, %v1760
    %v1762 = vsub.f32 1.0, %v1761
    %v1763 = vmul.f32 %v1760, %v1762
    %v1764 = vadd.f32 %v1760, %v1763
    %vm1765 = vweird.f32 %v1510
    %vm1766 = vweird.f32 %v1760
    %vm1767 = vmor %vm1765, %vm1766
    %v1768 = vsel %vm1767, %v1760, %v1764
    %v1769 = vand.u32 2147483647, %v1510
    %vm1770 = vcmp.eq.f32.partialorder %v1769, 8.507059e+37
    %v1771 = vand.u32 %v1510, 2147483648
    %v1772 = vor.u32 1.1754944e-38, %v1771
    %v1773 = vsel %vm1770, %v1772, %v1768
    %v1774 = vmul.f32 %v1446, %v1773
    %v1775 = vrcp.pop %v1513
    %v1776 = vmul.f32 %v1513, %v1775
    %v1777 = vsub.f32 1.0, %v1776
    %v1778 = vmul.f32 %v1775, %v1777
    %v1779 = vadd.f32 %v1775, %v1778
    %vm1780 = vweird.f32 %v1513
    %vm1781 = vweird.f32 %v1775
    %vm1782 = vmor %vm1780, %vm1781
    %v1783 = vsel %vm1782, %v1775, %v1779
    %v1784 = vand.u32 2147483647, %v1513
    %vm1785 = vcmp.eq.f32.partialorder %v1784, 8.507059e+37
    %v1786 = vand.u32 %v1513, 2147483648
    %v1787 = vor.u32 1.1754944e-38, %v1786
    %v1788 = vsel %vm1785, %v1787, %v1783
    %v1789 = vmul.f32 %v1448, %v1788
    %v1790 = vrcp.pop %v1516
    %v1791 = vmul.f32 %v1516, %v1790
    %v1792 = vsub.f32 1.0, %v1791
    %v1793 = vmul.f32 %v1790, %v1792
    %v1794 = vadd.f32 %v1790, %v1793
    %vm1795 = vweird.f32 %v1516
    %vm1796 = vweird.f32 %v1790
    %vm1797 = vmor %vm1795, %vm1796
    %v1798 = vsel %vm1797, %v1790, %v1794
    %v1799 = vand.u32 2147483647, %v1516
    %vm1800 = vcmp.eq.f32.partialorder %v1799, 8.507059e+37
    %v1801 = vand.u32 %v1516, 2147483648
    %v1802 = vor.u32 1.1754944e-38, %v1801
    %v1803 = vsel %vm1800, %v1802, %v1798
    %v1804 = vmul.f32 %v1450, %v1803
    %v1805 = vrcp.pop %v1519
    %v1806 = vmul.f32 %v1519, %v1805
    %v1807 = vsub.f32 1.0, %v1806
    %v1808 = vmul.f32 %v1805, %v1807
    %v1809 = vadd.f32 %v1805, %v1808
    %vm1810 = vweird.f32 %v1519
    %vm1811 = vweird.f32 %v1805
    %vm1812 = vmor %vm1810, %vm1811
    %v1813 = vsel %vm1812, %v1805, %v1809
    %v1814 = vand.u32 2147483647, %v1519
    %vm1815 = vcmp.eq.f32.partialorder %v1814, 8.507059e+37
    %v1816 = vand.u32 %v1519, 2147483648
    %v1817 = vor.u32 1.1754944e-38, %v1816
    %v1818 = vsel %vm1815, %v1817, %v1813
    %v1819 = vmul.f32 %v1452, %v1818
    %v1820 = vrcp.pop %v1522
    %v1821 = vmul.f32 %v1522, %v1820
    %v1822 = vsub.f32 1.0, %v1821
    %v1823 = vmul.f32 %v1820, %v1822
    %v1824 = vadd.f32 %v1820, %v1823
    %vm1825 = vweird.f32 %v1522
    %vm1826 = vweird.f32 %v1820
    %vm1827 = vmor %vm1825, %vm1826
    %v1828 = vsel %vm1827, %v1820, %v1824
    %v1829 = vand.u32 2147483647, %v1522
    %vm1830 = vcmp.eq.f32.partialorder %v1829, 8.507059e+37
    %v1831 = vand.u32 %v1522, 2147483648
    %v1832 = vor.u32 1.1754944e-38, %v1831
    %v1833 = vsel %vm1830, %v1832, %v1828
    %v1834 = vmul.f32 %v1454, %v1833
    %v1835 = vrcp.pop %v1525
    %v1836 = vmul.f32 %v1525, %v1835
    %v1837 = vsub.f32 1.0, %v1836
    %v1838 = vmul.f32 %v1835, %v1837
    %v1839 = vadd.f32 %v1835, %v1838
    %vm1840 = vweird.f32 %v1525
    %vm1841 = vweird.f32 %v1835
    %vm1842 = vmor %vm1840, %vm1841
    %v1843 = vsel %vm1842, %v1835, %v1839
    %v1844 = vand.u32 2147483647, %v1525
    %vm1845 = vcmp.eq.f32.partialorder %v1844, 8.507059e+37
    %v1846 = vand.u32 %v1525, 2147483648
    %v1847 = vor.u32 1.1754944e-38, %v1846
    %v1848 = vsel %vm1845, %v1847, %v1843
    %v1849 = vmul.f32 %v1456, %v1848
    %v1850 = vrcp.pop %v1528
    %v1851 = vmul.f32 %v1528, %v1850
    %v1852 = vsub.f32 1.0, %v1851
    %v1853 = vmul.f32 %v1850, %v1852
    %v1854 = vadd.f32 %v1850, %v1853
    %vm1855 = vweird.f32 %v1528
    %vm1856 = vweird.f32 %v1850
    %vm1857 = vmor %vm1855, %vm1856
    %v1858 = vsel %vm1857, %v1850, %v1854
    %v1859 = vand.u32 2147483647, %v1528
    %vm1860 = vcmp.eq.f32.partialorder %v1859, 8.507059e+37
    %v1861 = vand.u32 %v1528, 2147483648
    %v1862 = vor.u32 1.1754944e-38, %v1861
    %v1863 = vsel %vm1860, %v1862, %v1858
    %v1864 = vmul.f32 %v1458, %v1863
    %v1865 = vrcp.pop %v1531
    %v1866 = vmul.f32 %v1531, %v1865
    %v1867 = vsub.f32 1.0, %v1866
    %v1868 = vmul.f32 %v1865, %v1867
    %v1869 = vadd.f32 %v1865, %v1868
    %vm1870 = vweird.f32 %v1531
    %vm1871 = vweird.f32 %v1865
    %vm1872 = vmor %vm1870, %vm1871
    %v1873 = vsel %vm1872, %v1865, %v1869
    %v1874 = vand.u32 2147483647, %v1531
    %vm1875 = vcmp.eq.f32.partialorder %v1874, 8.507059e+37
    %v1876 = vand.u32 %v1531, 2147483648
    %v1877 = vor.u32 1.1754944e-38, %v1876
    %v1878 = vsel %vm1875, %v1877, %v1873
    %v1879 = vmul.f32 %v1460, %v1878
    %v1880 = vrcp.pop %v1534
    %v1881 = vmul.f32 %v1534, %v1880
    %v1882 = vsub.f32 1.0, %v1881
    %v1883 = vmul.f32 %v1880, %v1882
    %v1884 = vadd.f32 %v1880, %v1883
    %vm1885 = vweird.f32 %v1534
    %vm1886 = vweird.f32 %v1880
    %vm1887 = vmor %vm1885, %vm1886
    %v1888 = vsel %vm1887, %v1880, %v1884
    %v1889 = vand.u32 2147483647, %v1534
    %vm1890 = vcmp.eq.f32.partialorder %v1889, 8.507059e+37
    %v1891 = vand.u32 %v1534, 2147483648
    %v1892 = vor.u32 1.1754944e-38, %v1891
    %v1893 = vsel %vm1890, %v1892, %v1888
    %v1894 = vmul.f32 %v1462, %v1893
    %v1895 = vpack.c.bf16 %v1549, %v1549
    %v1896 = vpack.c.bf16 %v1564, %v1564
    %v1897 = vpack.c.bf16 %v1579, %v1579
    %v1898 = vpack.c.bf16 %v1594, %v1594
    %v1899 = vpack.c.bf16 %v1609, %v1609
    %v1900 = vpack.c.bf16 %v1624, %v1624
    %v1901 = vpack.c.bf16 %v1639, %v1639
    %v1902 = vpack.c.bf16 %v1654, %v1654
    %v1903 = vpack.c.bf16 %v1669, %v1669
    %v1904 = vpack.c.bf16 %v1684, %v1684
    %v1905 = vpack.c.bf16 %v1699, %v1699
    %v1906 = vpack.c.bf16 %v1714, %v1714
    %v1907 = vpack.c.bf16 %v1729, %v1729
    %v1908 = vpack.c.bf16 %v1744, %v1744
    %v1909 = vpack.c.bf16 %v1759, %v1759
    %v1910 = vpack.c.bf16 %v1774, %v1774
    %v1911 = vpack.c.bf16 %v1789, %v1789
    %v1912 = vpack.c.bf16 %v1804, %v1804
    %v1913 = vpack.c.bf16 %v1819, %v1819
    %v1914 = vpack.c.bf16 %v1834, %v1834
    %v1915 = vpack.c.bf16 %v1849, %v1849
    %v1916 = vpack.c.bf16 %v1864, %v1864
    %v1917 = vpack.c.bf16 %v1879, %v1879
    %v1918 = vpack.c.bf16 %v1894, %v1894
    %v1920 = vsel %vm1318, %v1895, 0
    %vm1922 = vcmask 1043456
    %v1924 = vsel %vm1922, %v837, 0
    %1926 = vmatpush.bf16.msra.mxu0 0
    %1927 = vmatpush.bf16.msra.mxu0 0
    %1928 = vmatpush.bf16.msra.mxu0 0
    %1929 = vmatpush.bf16.msra.mxu0 0
    %1930 = vmatpush.bf16.msra.mxu0 0
    %1931 = vmatpush.bf16.msra.mxu0 0
    %1932 = vmatpush.bf16.msra.mxu0 0
    %1933 = vmatpush.bf16.msra.mxu0 %v1924
    %1934 = vmatmul.bf16.gmra.mxu0 %v1920
    %v1935 = vpop.f32.mrf.mxu0
    %v1936 = vadd.f32 0.0, %v1935
    %v1937 = vpop.f32.mrf.mxu0
    %1938 = vdwg.mxu0
    %v1940 = vsel %vm1318, %v1896, 0
    %v1943 = vsel %vm1922, %v838, 0
    %1945 = vmatpush.bf16.msra.mxu0 0
    %1946 = vmatpush.bf16.msra.mxu0 0
    %1947 = vmatpush.bf16.msra.mxu0 0
    %1948 = vmatpush.bf16.msra.mxu0 0
    %1949 = vmatpush.bf16.msra.mxu0 0
    %1950 = vmatpush.bf16.msra.mxu0 0
    %1951 = vmatpush.bf16.msra.mxu0 0
    %1952 = vmatpush.bf16.msra.mxu0 %v1943
    %1953 = vmatmul.bf16.gmra.mxu0 %v1940
    %v1954 = vpop.f32.mrf.mxu0
    %v1955 = vadd.f32 0.0, %v1954
    %v1956 = vpop.f32.mrf.mxu0
    %1957 = vdwg.mxu0
    %v1959 = vsel %vm1318, %v1897, 0
    %v1962 = vsel %vm1922, %v839, 0
    %1964 = vmatpush.bf16.msra.mxu0 0
    %1965 = vmatpush.bf16.msra.mxu0 0
    %1966 = vmatpush.bf16.msra.mxu0 0
    %1967 = vmatpush.bf16.msra.mxu0 0
    %1968 = vmatpush.bf16.msra.mxu0 0
    %1969 = vmatpush.bf16.msra.mxu0 0
    %1970 = vmatpush.bf16.msra.mxu0 0
    %1971 = vmatpush.bf16.msra.mxu0 %v1962
    %1972 = vmatmul.bf16.gmra.mxu0 %v1959
    %v1973 = vpop.f32.mrf.mxu0
    %v1974 = vadd.f32 0.0, %v1973
    %v1975 = vpop.f32.mrf.mxu0
    %1976 = vdwg.mxu0
    %v1978 = vsel %vm1318, %v1898, 0
    %v1981 = vsel %vm1922, %v840, 0
    %1983 = vmatpush.bf16.msra.mxu0 0
    %1984 = vmatpush.bf16.msra.mxu0 0
    %1985 = vmatpush.bf16.msra.mxu0 0
    %1986 = vmatpush.bf16.msra.mxu0 0
    %1987 = vmatpush.bf16.msra.mxu0 0
    %1988 = vmatpush.bf16.msra.mxu0 0
    %1989 = vmatpush.bf16.msra.mxu0 0
    %1990 = vmatpush.bf16.msra.mxu0 %v1981
    %1991 = vmatmul.bf16.gmra.mxu0 %v1978
    %v1992 = vpop.f32.mrf.mxu0
    %v1993 = vadd.f32 0.0, %v1992
    %v1994 = vpop.f32.mrf.mxu0
    %1995 = vdwg.mxu0
    %v1997 = vsel %vm1318, %v1899, 0
    %v2000 = vsel %vm1922, %v841, 0
    %2002 = vmatpush.bf16.msra.mxu0 0
    %2003 = vmatpush.bf16.msra.mxu0 0
    %2004 = vmatpush.bf16.msra.mxu0 0
    %2005 = vmatpush.bf16.msra.mxu0 0
    %2006 = vmatpush.bf16.msra.mxu0 0
    %2007 = vmatpush.bf16.msra.mxu0 0
    %2008 = vmatpush.bf16.msra.mxu0 0
    %2009 = vmatpush.bf16.msra.mxu0 %v2000
    %2010 = vmatmul.bf16.gmra.mxu0 %v1997
    %v2011 = vpop.f32.mrf.mxu0
    %v2012 = vadd.f32 0.0, %v2011
    %v2013 = vpop.f32.mrf.mxu0
    %2014 = vdwg.mxu0
    %v2016 = vsel %vm1318, %v1900, 0
    %v2019 = vsel %vm1922, %v842, 0
    %2021 = vmatpush.bf16.msra.mxu0 0
    %2022 = vmatpush.bf16.msra.mxu0 0
    %2023 = vmatpush.bf16.msra.mxu0 0
    %2024 = vmatpush.bf16.msra.mxu0 0
    %2025 = vmatpush.bf16.msra.mxu0 0
    %2026 = vmatpush.bf16.msra.mxu0 0
    %2027 = vmatpush.bf16.msra.mxu0 0
    %2028 = vmatpush.bf16.msra.mxu0 %v2019
    %2029 = vmatmul.bf16.gmra.mxu0 %v2016
    %v2030 = vpop.f32.mrf.mxu0
    %v2031 = vadd.f32 0.0, %v2030
    %v2032 = vpop.f32.mrf.mxu0
    %2033 = vdwg.mxu0
    %v2035 = vsel %vm1318, %v1901, 0
    %v2038 = vsel %vm1922, %v843, 0
    %2040 = vmatpush.bf16.msra.mxu0 0
    %2041 = vmatpush.bf16.msra.mxu0 0
    %2042 = vmatpush.bf16.msra.mxu0 0
    %2043 = vmatpush.bf16.msra.mxu0 0
    %2044 = vmatpush.bf16.msra.mxu0 0
    %2045 = vmatpush.bf16.msra.mxu0 0
    %2046 = vmatpush.bf16.msra.mxu0 0
    %2047 = vmatpush.bf16.msra.mxu0 %v2038
    %2048 = vmatmul.bf16.gmra.mxu0 %v2035
    %v2049 = vpop.f32.mrf.mxu0
    %v2050 = vadd.f32 0.0, %v2049
    %v2051 = vpop.f32.mrf.mxu0
    %2052 = vdwg.mxu0
    %v2054 = vsel %vm1318, %v1902, 0
    %v2057 = vsel %vm1922, %v844, 0
    %2059 = vmatpush.bf16.msra.mxu0 0
    %2060 = vmatpush.bf16.msra.mxu0 0
    %2061 = vmatpush.bf16.msra.mxu0 0
    %2062 = vmatpush.bf16.msra.mxu0 0
    %2063 = vmatpush.bf16.msra.mxu0 0
    %2064 = vmatpush.bf16.msra.mxu0 0
    %2065 = vmatpush.bf16.msra.mxu0 0
    %2066 = vmatpush.bf16.msra.mxu0 %v2057
    %2067 = vmatmul.bf16.gmra.mxu0 %v2054
    %v2068 = vpop.f32.mrf.mxu0
    %v2069 = vadd.f32 0.0, %v2068
    %v2070 = vpop.f32.mrf.mxu0
    %2071 = vdwg.mxu0
    %v2073 = vsel %vm1318, %v1903, 0
    %v2076 = vsel %vm1922, %v845, 0
    %2078 = vmatpush.bf16.msra.mxu0 0
    %2079 = vmatpush.bf16.msra.mxu0 0
    %2080 = vmatpush.bf16.msra.mxu0 0
    %2081 = vmatpush.bf16.msra.mxu0 0
    %2082 = vmatpush.bf16.msra.mxu0 0
    %2083 = vmatpush.bf16.msra.mxu0 0
    %2084 = vmatpush.bf16.msra.mxu0 0
    %2085 = vmatpush.bf16.msra.mxu0 %v2076
    %2086 = vmatmul.bf16.gmra.mxu0 %v2073
    %v2087 = vpop.f32.mrf.mxu0
    %v2088 = vadd.f32 0.0, %v2087
    %v2089 = vpop.f32.mrf.mxu0
    %2090 = vdwg.mxu0
    %v2092 = vsel %vm1318, %v1904, 0
    %v2095 = vsel %vm1922, %v846, 0
    %2097 = vmatpush.bf16.msra.mxu0 0
    %2098 = vmatpush.bf16.msra.mxu0 0
    %2099 = vmatpush.bf16.msra.mxu0 0
    %2100 = vmatpush.bf16.msra.mxu0 0
    %2101 = vmatpush.bf16.msra.mxu0 0
    %2102 = vmatpush.bf16.msra.mxu0 0
    %2103 = vmatpush.bf16.msra.mxu0 0
    %2104 = vmatpush.bf16.msra.mxu0 %v2095
    %2105 = vmatmul.bf16.gmra.mxu0 %v2092
    %v2106 = vpop.f32.mrf.mxu0
    %v2107 = vadd.f32 0.0, %v2106
    %v2108 = vpop.f32.mrf.mxu0
    %2109 = vdwg.mxu0
    %v2111 = vsel %vm1318, %v1905, 0
    %v2114 = vsel %vm1922, %v847, 0
    %2116 = vmatpush.bf16.msra.mxu0 0
    %2117 = vmatpush.bf16.msra.mxu0 0
    %2118 = vmatpush.bf16.msra.mxu0 0
    %2119 = vmatpush.bf16.msra.mxu0 0
    %2120 = vmatpush.bf16.msra.mxu0 0
    %2121 = vmatpush.bf16.msra.mxu0 0
    %2122 = vmatpush.bf16.msra.mxu0 0
    %2123 = vmatpush.bf16.msra.mxu0 %v2114
    %2124 = vmatmul.bf16.gmra.mxu0 %v2111
    %v2125 = vpop.f32.mrf.mxu0
    %v2126 = vadd.f32 0.0, %v2125
    %v2127 = vpop.f32.mrf.mxu0
    %2128 = vdwg.mxu0
    %v2130 = vsel %vm1318, %v1906, 0
    %v2133 = vsel %vm1922, %v848, 0
    %2135 = vmatpush.bf16.msra.mxu0 0
    %2136 = vmatpush.bf16.msra.mxu0 0
    %2137 = vmatpush.bf16.msra.mxu0 0
    %2138 = vmatpush.bf16.msra.mxu0 0
    %2139 = vmatpush.bf16.msra.mxu0 0
    %2140 = vmatpush.bf16.msra.mxu0 0
    %2141 = vmatpush.bf16.msra.mxu0 0
    %2142 = vmatpush.bf16.msra.mxu0 %v2133
    %2143 = vmatmul.bf16.gmra.mxu0 %v2130
    %v2144 = vpop.f32.mrf.mxu0
    %v2145 = vadd.f32 0.0, %v2144
    %v2146 = vpop.f32.mrf.mxu0
    %2147 = vdwg.mxu0
    %v2149 = vsel %vm1318, %v1907, 0
    %v2152 = vsel %vm1922, %v849, 0
    %2154 = vmatpush.bf16.msra.mxu0 0
    %2155 = vmatpush.bf16.msra.mxu0 0
    %2156 = vmatpush.bf16.msra.mxu0 0
    %2157 = vmatpush.bf16.msra.mxu0 0
    %2158 = vmatpush.bf16.msra.mxu0 0
    %2159 = vmatpush.bf16.msra.mxu0 0
    %2160 = vmatpush.bf16.msra.mxu0 0
    %2161 = vmatpush.bf16.msra.mxu0 %v2152
    %2162 = vmatmul.bf16.gmra.mxu0 %v2149
    %v2163 = vpop.f32.mrf.mxu0
    %v2164 = vadd.f32 0.0, %v2163
    %v2165 = vpop.f32.mrf.mxu0
    %2166 = vdwg.mxu0
    %v2168 = vsel %vm1318, %v1908, 0
    %v2171 = vsel %vm1922, %v850, 0
    %2173 = vmatpush.bf16.msra.mxu0 0
    %2174 = vmatpush.bf16.msra.mxu0 0
    %2175 = vmatpush.bf16.msra.mxu0 0
    %2176 = vmatpush.bf16.msra.mxu0 0
    %2177 = vmatpush.bf16.msra.mxu0 0
    %2178 = vmatpush.bf16.msra.mxu0 0
    %2179 = vmatpush.bf16.msra.mxu0 0
    %2180 = vmatpush.bf16.msra.mxu0 %v2171
    %2181 = vmatmul.bf16.gmra.mxu0 %v2168
    %v2182 = vpop.f32.mrf.mxu0
    %v2183 = vadd.f32 0.0, %v2182
    %v2184 = vpop.f32.mrf.mxu0
    %2185 = vdwg.mxu0
    %v2187 = vsel %vm1318, %v1909, 0
    %v2190 = vsel %vm1922, %v851, 0
    %2192 = vmatpush.bf16.msra.mxu0 0
    %2193 = vmatpush.bf16.msra.mxu0 0
    %2194 = vmatpush.bf16.msra.mxu0 0
    %2195 = vmatpush.bf16.msra.mxu0 0
    %2196 = vmatpush.bf16.msra.mxu0 0
    %2197 = vmatpush.bf16.msra.mxu0 0
    %2198 = vmatpush.bf16.msra.mxu0 0
    %2199 = vmatpush.bf16.msra.mxu0 %v2190
    %2200 = vmatmul.bf16.gmra.mxu0 %v2187
    %v2201 = vpop.f32.mrf.mxu0
    %v2202 = vadd.f32 0.0, %v2201
    %v2203 = vpop.f32.mrf.mxu0
    %2204 = vdwg.mxu0
    %v2206 = vsel %vm1318, %v1910, 0
    %v2209 = vsel %vm1922, %v852, 0
    %2211 = vmatpush.bf16.msra.mxu0 0
    %2212 = vmatpush.bf16.msra.mxu0 0
    %2213 = vmatpush.bf16.msra.mxu0 0
    %2214 = vmatpush.bf16.msra.mxu0 0
    %2215 = vmatpush.bf16.msra.mxu0 0
    %2216 = vmatpush.bf16.msra.mxu0 0
    %2217 = vmatpush.bf16.msra.mxu0 0
    %2218 = vmatpush.bf16.msra.mxu0 %v2209
    %2219 = vmatmul.bf16.gmra.mxu0 %v2206
    %v2220 = vpop.f32.mrf.mxu0
    %v2221 = vadd.f32 0.0, %v2220
    %v2222 = vpop.f32.mrf.mxu0
    %2223 = vdwg.mxu0
    %v2225 = vsel %vm1318, %v1911, 0
    %v2228 = vsel %vm1922, %v853, 0
    %2230 = vmatpush.bf16.msra.mxu0 0
    %2231 = vmatpush.bf16.msra.mxu0 0
    %2232 = vmatpush.bf16.msra.mxu0 0
    %2233 = vmatpush.bf16.msra.mxu0 0
    %2234 = vmatpush.bf16.msra.mxu0 0
    %2235 = vmatpush.bf16.msra.mxu0 0
    %2236 = vmatpush.bf16.msra.mxu0 0
    %2237 = vmatpush.bf16.msra.mxu0 %v2228
    %2238 = vmatmul.bf16.gmra.mxu0 %v2225
    %v2239 = vpop.f32.mrf.mxu0
    %v2240 = vadd.f32 0.0, %v2239
    %v2241 = vpop.f32.mrf.mxu0
    %2242 = vdwg.mxu0
    %v2244 = vsel %vm1318, %v1912, 0
    %v2247 = vsel %vm1922, %v854, 0
    %2249 = vmatpush.bf16.msra.mxu0 0
    %2250 = vmatpush.bf16.msra.mxu0 0
    %2251 = vmatpush.bf16.msra.mxu0 0
    %2252 = vmatpush.bf16.msra.mxu0 0
    %2253 = vmatpush.bf16.msra.mxu0 0
    %2254 = vmatpush.bf16.msra.mxu0 0
    %2255 = vmatpush.bf16.msra.mxu0 0
    %2256 = vmatpush.bf16.msra.mxu0 %v2247
    %2257 = vmatmul.bf16.gmra.mxu0 %v2244
    %v2258 = vpop.f32.mrf.mxu0
    %v2259 = vadd.f32 0.0, %v2258
    %v2260 = vpop.f32.mrf.mxu0
    %2261 = vdwg.mxu0
    %v2263 = vsel %vm1318, %v1913, 0
    %v2266 = vsel %vm1922, %v855, 0
    %2268 = vmatpush.bf16.msra.mxu0 0
    %2269 = vmatpush.bf16.msra.mxu0 0
    %2270 = vmatpush.bf16.msra.mxu0 0
    %2271 = vmatpush.bf16.msra.mxu0 0
    %2272 = vmatpush.bf16.msra.mxu0 0
    %2273 = vmatpush.bf16.msra.mxu0 0
    %2274 = vmatpush.bf16.msra.mxu0 0
    %2275 = vmatpush.bf16.msra.mxu0 %v2266
    %2276 = vmatmul.bf16.gmra.mxu0 %v2263
    %v2277 = vpop.f32.mrf.mxu0
    %v2278 = vadd.f32 0.0, %v2277
    %v2279 = vpop.f32.mrf.mxu0
    %2280 = vdwg.mxu0
    %v2282 = vsel %vm1318, %v1914, 0
    %v2285 = vsel %vm1922, %v856, 0
    %2287 = vmatpush.bf16.msra.mxu0 0
    %2288 = vmatpush.bf16.msra.mxu0 0
    %2289 = vmatpush.bf16.msra.mxu0 0
    %2290 = vmatpush.bf16.msra.mxu0 0
    %2291 = vmatpush.bf16.msra.mxu0 0
    %2292 = vmatpush.bf16.msra.mxu0 0
    %2293 = vmatpush.bf16.msra.mxu0 0
    %2294 = vmatpush.bf16.msra.mxu0 %v2285
    %2295 = vmatmul.bf16.gmra.mxu0 %v2282
    %v2296 = vpop.f32.mrf.mxu0
    %v2297 = vadd.f32 0.0, %v2296
    %v2298 = vpop.f32.mrf.mxu0
    %2299 = vdwg.mxu0
    %v2301 = vsel %vm1318, %v1915, 0
    %v2304 = vsel %vm1922, %v857, 0
    %2306 = vmatpush.bf16.msra.mxu0 0
    %2307 = vmatpush.bf16.msra.mxu0 0
    %2308 = vmatpush.bf16.msra.mxu0 0
    %2309 = vmatpush.bf16.msra.mxu0 0
    %2310 = vmatpush.bf16.msra.mxu0 0
    %2311 = vmatpush.bf16.msra.mxu0 0
    %2312 = vmatpush.bf16.msra.mxu0 0
    %2313 = vmatpush.bf16.msra.mxu0 %v2304
    %2314 = vmatmul.bf16.gmra.mxu0 %v2301
    %v2315 = vpop.f32.mrf.mxu0
    %v2316 = vadd.f32 0.0, %v2315
    %v2317 = vpop.f32.mrf.mxu0
    %2318 = vdwg.mxu0
    %v2320 = vsel %vm1318, %v1916, 0
    %v2323 = vsel %vm1922, %v858, 0
    %2325 = vmatpush.bf16.msra.mxu0 0
    %2326 = vmatpush.bf16.msra.mxu0 0
    %2327 = vmatpush.bf16.msra.mxu0 0
    %2328 = vmatpush.bf16.msra.mxu0 0
    %2329 = vmatpush.bf16.msra.mxu0 0
    %2330 = vmatpush.bf16.msra.mxu0 0
    %2331 = vmatpush.bf16.msra.mxu0 0
    %2332 = vmatpush.bf16.msra.mxu0 %v2323
    %2333 = vmatmul.bf16.gmra.mxu0 %v2320
    %v2334 = vpop.f32.mrf.mxu0
    %v2335 = vadd.f32 0.0, %v2334
    %v2336 = vpop.f32.mrf.mxu0
    %2337 = vdwg.mxu0
    %v2339 = vsel %vm1318, %v1917, 0
    %v2342 = vsel %vm1922, %v859, 0
    %2344 = vmatpush.bf16.msra.mxu0 0
    %2345 = vmatpush.bf16.msra.mxu0 0
    %2346 = vmatpush.bf16.msra.mxu0 0
    %2347 = vmatpush.bf16.msra.mxu0 0
    %2348 = vmatpush.bf16.msra.mxu0 0
    %2349 = vmatpush.bf16.msra.mxu0 0
    %2350 = vmatpush.bf16.msra.mxu0 0
    %2351 = vmatpush.bf16.msra.mxu0 %v2342
    %2352 = vmatmul.bf16.gmra.mxu0 %v2339
    %v2353 = vpop.f32.mrf.mxu0
    %v2354 = vadd.f32 0.0, %v2353
    %v2355 = vpop.f32.mrf.mxu0
    %2356 = vdwg.mxu0
    %v2358 = vsel %vm1318, %v1918, 0
    %v2361 = vsel %vm1922, %v860, 0
    %2363 = vmatpush.bf16.msra.mxu0 0
    %2364 = vmatpush.bf16.msra.mxu0 0
    %2365 = vmatpush.bf16.msra.mxu0 0
    %2366 = vmatpush.bf16.msra.mxu0 0
    %2367 = vmatpush.bf16.msra.mxu0 0
    %2368 = vmatpush.bf16.msra.mxu0 0
    %2369 = vmatpush.bf16.msra.mxu0 0
    %2370 = vmatpush.bf16.msra.mxu0 %v2361
    %2371 = vmatmul.bf16.gmra.mxu0 %v2358
    %v2372 = vpop.f32.mrf.mxu0
    %v2373 = vadd.f32 0.0, %v2372
    %v2374 = vpop.f32.mrf.mxu0
    %2375 = vdwg.mxu0
    %2378 = vrot.lane.b32.xlu0 %v1974, 64
    %v2379 = vpop.permute.xlu0 %2378
    %2380 = vrot.lane.b32.xlu0 %v1993, 64
    %v2381 = vpop.permute.xlu0 %2380
    %2386 = vrot.lane.b32.xlu0 %v2050, 64
    %v2387 = vpop.permute.xlu0 %2386
    %2388 = vrot.lane.b32.xlu0 %v2069, 64
    %v2389 = vpop.permute.xlu0 %2388
    %2394 = vrot.lane.b32.xlu0 %v2126, 64
    %v2395 = vpop.permute.xlu0 %2394
    %2396 = vrot.lane.b32.xlu0 %v2145, 64
    %v2397 = vpop.permute.xlu0 %2396
    %2402 = vrot.lane.b32.xlu0 %v2202, 64
    %v2403 = vpop.permute.xlu0 %2402
    %2404 = vrot.lane.b32.xlu0 %v2221, 64
    %v2405 = vpop.permute.xlu0 %2404
    %2410 = vrot.lane.b32.xlu0 %v2278, 64
    %v2411 = vpop.permute.xlu0 %2410
    %2412 = vrot.lane.b32.xlu0 %v2297, 64
    %v2413 = vpop.permute.xlu0 %2412
    %2418 = vrot.lane.b32.xlu0 %v2354, 64
    %v2419 = vpop.permute.xlu0 %2418
    %2420 = vrot.lane.b32.xlu0 %v2373, 64
    %v2421 = vpop.permute.xlu0 %2420
    %v2424 = vsel %vm861, %v1936, %v2379
    %v2425 = vsel %vm861, %v1955, %v2381
    %v2426 = vsel %vm861, %v2012, %v2387
    %v2427 = vsel %vm861, %v2031, %v2389
    %v2428 = vsel %vm861, %v2088, %v2395
    %v2429 = vsel %vm861, %v2107, %v2397
    %v2430 = vsel %vm861, %v2164, %v2403
    %v2431 = vsel %vm861, %v2183, %v2405
    %v2432 = vsel %vm861, %v2240, %v2411
    %v2433 = vsel %vm861, %v2259, %v2413
    %v2434 = vsel %vm861, %v2316, %v2419
    %v2435 = vsel %vm861, %v2335, %v2421
    %v2436 = vpack.c.bf16 %v2425, %v2424
    %v2437 = vpack.c.bf16 %v2427, %v2426
    %v2438 = vpack.c.bf16 %v2429, %v2428
    %v2439 = vpack.c.bf16 %v2431, %v2430
    %v2440 = vpack.c.bf16 %v2433, %v2432
    %v2441 = vpack.c.bf16 %v2435, %v2434
    %v2442 = vld [vmem:[%s6] sm:$0xf]
    %v2443 = vld [vmem:[%s6 + $0x4] sm:$0xf]
    %v2444 = vld [vmem:[%s6 + $0x8] sm:$0xf]
    %v2445 = vld [vmem:[%s6 + $0xc] sm:$0xf]
    %v2446 = vld [vmem:[%s6 + $0x10] sm:$0xf]
    %v2447 = vld [vmem:[%s6 + $0x14] sm:$0xf]
    %v2448 = vld [vmem:[%s6 + $0x18] sm:$0xf]
    %v2449 = vld [vmem:[%s6 + $0x1c] sm:$0xf]
    %v2450 = vld [vmem:[%s6 + $0x20] sm:$0xf]
    %v2451 = vld [vmem:[%s6 + $0x24] sm:$0xf]
    %v2452 = vld [vmem:[%s6 + $0x28] sm:$0xf]
    %v2453 = vld [vmem:[%s6 + $0x2c] sm:$0xf]
    %v2454 = vld [vmem:[%s6 + $0x30] sm:$0xf]
    %v2455 = vld [vmem:[%s6 + $0x34] sm:$0xf]
    %v2456 = vld [vmem:[%s6 + $0x38] sm:$0xf]
    %v2457 = vld [vmem:[%s6 + $0x3c] sm:$0xf]
    %v2458 = vld [vmem:[%s6 + $0x40] sm:$0xf]
    %v2459 = vld [vmem:[%s6 + $0x44] sm:$0xf]
    %v2460 = vld [vmem:[%s6 + $0x48] sm:$0xf]
    %v2461 = vld [vmem:[%s6 + $0x4c] sm:$0xf]
    %v2462 = vld [vmem:[%s6 + $0x50] sm:$0xf]
    %v2463 = vld [vmem:[%s6 + $0x54] sm:$0xf]
    %v2464 = vld [vmem:[%s6 + $0x58] sm:$0xf]
    %v2465 = vld [vmem:[%s6 + $0x5c] sm:$0xf]
    %v2466 = vld [vmem:[%s6 + $0x60] sm:$0xf]
    %v2467 = vld [vmem:[%s6 + $0x64] sm:$0xf]
    %v2468 = vld [vmem:[%s6 + $0x68] sm:$0xf]
    %v2469 = vld [vmem:[%s6 + $0x6c] sm:$0xf]
    %v2470 = vld [vmem:[%s6 + $0x70] sm:$0xf]
    %v2471 = vld [vmem:[%s6 + $0x74] sm:$0xf]
    %v2472 = vld [vmem:[%s6 + $0x78] sm:$0xf]
    %v2473 = vld [vmem:[%s6 + $0x7c] sm:$0xf]
    %v2474 = vld [vmem:[%s6 + $0x80] sm:$0xf]
    %v2475 = vld [vmem:[%s6 + $0x84] sm:$0xf]
    %v2476 = vld [vmem:[%s6 + $0x88] sm:$0xf]
    %v2477 = vld [vmem:[%s6 + $0x8c] sm:$0xf]
    %v2478 = vld [vmem:[%s6 + $0x90] sm:$0xf]
    %v2479 = vld [vmem:[%s6 + $0x94] sm:$0xf]
    %v2480 = vld [vmem:[%s6 + $0x98] sm:$0xf]
    %v2481 = vld [vmem:[%s6 + $0x9c] sm:$0xf]
    %v2482 = vld [vmem:[%s6 + $0xa0] sm:$0xf]
    %v2483 = vld [vmem:[%s6 + $0xa4] sm:$0xf]
    %v2484 = vld [vmem:[%s6 + $0xa8] sm:$0xf]
    %v2485 = vld [vmem:[%s6 + $0xac] sm:$0xf]
    %v2486 = vld [vmem:[%s6 + $0xb0] sm:$0xf]
    %v2487 = vld [vmem:[%s6 + $0xb4] sm:$0xf]
    %v2488 = vld [vmem:[%s6 + $0xb8] sm:$0xf]
    %v2489 = vld [vmem:[%s6 + $0xbc] sm:$0xf]
    %v2490 = vld [vmem:[%s6 + $0xc0] sm:$0xf]
    %v2491 = vld [vmem:[%s6 + $0xc4] sm:$0xf]
    %v2492 = vld [vmem:[%s6 + $0xc8] sm:$0xf]
    %v2493 = vld [vmem:[%s6 + $0xcc] sm:$0xf]
    %v2494 = vld [vmem:[%s6 + $0xd0] sm:$0xf]
    %v2495 = vld [vmem:[%s6 + $0xd4] sm:$0xf]
    %v2496 = vld [vmem:[%s6 + $0xd8] sm:$0xf]
    %v2497 = vld [vmem:[%s6 + $0xdc] sm:$0xf]
    %v2498 = vld [vmem:[%s6 + $0xe0] sm:$0xf]
    %v2499 = vld [vmem:[%s6 + $0xe4] sm:$0xf]
    %v2500 = vld [vmem:[%s6 + $0xe8] sm:$0xf]
    %v2501 = vld [vmem:[%s6 + $0xec] sm:$0xf]
    %v2502 = vld [vmem:[%s6 + $0xf0] sm:$0xf]
    %v2503 = vld [vmem:[%s6 + $0xf4] sm:$0xf]
    %v2504 = vld [vmem:[%s6 + $0xf8] sm:$0xf]
    %v2505 = vld [vmem:[%s6 + $0xfc] sm:$0xf]
    %v2506 = vld [vmem:[%s6 + $0x100] sm:$0xf]
    %v2507 = vld [vmem:[%s6 + $0x104] sm:$0xf]
    %v2508 = vld [vmem:[%s6 + $0x108] sm:$0xf]
    %v2509 = vld [vmem:[%s6 + $0x10c] sm:$0xf]
    %v2510 = vld [vmem:[%s6 + $0x110] sm:$0xf]
    %v2511 = vld [vmem:[%s6 + $0x114] sm:$0xf]
    %v2512 = vld [vmem:[%s6 + $0x118] sm:$0xf]
    %v2513 = vld [vmem:[%s6 + $0x11c] sm:$0xf]
    %v2514 = vld [vmem:[%s6 + $0x120] sm:$0xf]
    %v2515 = vld [vmem:[%s6 + $0x124] sm:$0xf]
    %v2516 = vld [vmem:[%s6 + $0x128] sm:$0xf]
    %v2517 = vld [vmem:[%s6 + $0x12c] sm:$0xf]
    %v2518 = vld [vmem:[%s6 + $0x130] sm:$0xf]
    %v2519 = vld [vmem:[%s6 + $0x134] sm:$0xf]
    %v2520 = vld [vmem:[%s6 + $0x138] sm:$0xf]
    %v2521 = vld [vmem:[%s6 + $0x13c] sm:$0xf]
    %v2522 = vld [vmem:[%s6 + $0x140] sm:$0xf]
    %v2523 = vld [vmem:[%s6 + $0x144] sm:$0xf]
    %v2524 = vld [vmem:[%s6 + $0x148] sm:$0xf]
    %v2525 = vld [vmem:[%s6 + $0x14c] sm:$0xf]
    %v2526 = vld [vmem:[%s6 + $0x150] sm:$0xf]
    %v2527 = vld [vmem:[%s6 + $0x154] sm:$0xf]
    %v2528 = vld [vmem:[%s6 + $0x158] sm:$0xf]
    %v2529 = vld [vmem:[%s6 + $0x15c] sm:$0xf]
    %v2530 = vld [vmem:[%s6 + $0x160] sm:$0xf]
    %v2531 = vld [vmem:[%s6 + $0x164] sm:$0xf]
    %v2532 = vld [vmem:[%s6 + $0x168] sm:$0xf]
    %v2533 = vld [vmem:[%s6 + $0x16c] sm:$0xf]
    %v2534 = vld [vmem:[%s6 + $0x170] sm:$0xf]
    %v2535 = vld [vmem:[%s6 + $0x174] sm:$0xf]
    %v2536 = vld [vmem:[%s6 + $0x178] sm:$0xf]
    %v2537 = vld [vmem:[%s6 + $0x17c] sm:$0xf]
    %v2538 = vld [vmem:[%s7] sm:$0x1]
    %v2540 = vperm.slane %v2538, 0
    %v2638 = vunpack.c.l.b16 %v2442
    %v2639 = vunpack.c.l.b16 %v2443
    %v2640 = vunpack.c.l.b16 %v2444
    %v2641 = vunpack.c.l.b16 %v2445
    %v2642 = vunpack.c.l.b16 %v2446
    %v2643 = vunpack.c.l.b16 %v2447
    %v2644 = vunpack.c.l.b16 %v2448
    %v2645 = vunpack.c.l.b16 %v2449
    %v2646 = vunpack.c.l.b16 %v2450
    %v2647 = vunpack.c.l.b16 %v2451
    %v2648 = vunpack.c.l.b16 %v2452
    %v2649 = vunpack.c.l.b16 %v2453
    %v2650 = vunpack.c.l.b16 %v2454
    %v2651 = vunpack.c.l.b16 %v2455
    %v2652 = vunpack.c.l.b16 %v2456
    %v2653 = vunpack.c.l.b16 %v2457
    %v2654 = vunpack.c.l.b16 %v2458
    %v2655 = vunpack.c.l.b16 %v2459
    %v2656 = vunpack.c.l.b16 %v2460
    %v2657 = vunpack.c.l.b16 %v2461
    %v2658 = vunpack.c.l.b16 %v2462
    %v2659 = vunpack.c.l.b16 %v2463
    %v2660 = vunpack.c.l.b16 %v2464
    %v2661 = vunpack.c.l.b16 %v2465
    %v2662 = vunpack.c.l.b16 %v2466
    %v2663 = vunpack.c.l.b16 %v2467
    %v2664 = vunpack.c.l.b16 %v2468
    %v2665 = vunpack.c.l.b16 %v2469
    %v2666 = vunpack.c.l.b16 %v2470
    %v2667 = vunpack.c.l.b16 %v2471
    %v2668 = vunpack.c.l.b16 %v2472
    %v2669 = vunpack.c.l.b16 %v2473
    %v2670 = vunpack.c.l.b16 %v2474
    %v2671 = vunpack.c.l.b16 %v2475
    %v2672 = vunpack.c.l.b16 %v2476
    %v2673 = vunpack.c.l.b16 %v2477
    %v2674 = vunpack.c.l.b16 %v2478
    %v2675 = vunpack.c.l.b16 %v2479
    %v2676 = vunpack.c.l.b16 %v2480
    %v2677 = vunpack.c.l.b16 %v2481
    %v2678 = vunpack.c.l.b16 %v2482
    %v2679 = vunpack.c.l.b16 %v2483
    %v2680 = vunpack.c.l.b16 %v2484
    %v2681 = vunpack.c.l.b16 %v2485
    %v2682 = vunpack.c.l.b16 %v2486
    %v2683 = vunpack.c.l.b16 %v2487
    %v2684 = vunpack.c.l.b16 %v2488
    %v2685 = vunpack.c.l.b16 %v2489
    %v2686 = vunpack.c.l.b16 %v2490
    %v2687 = vunpack.c.l.b16 %v2491
    %v2688 = vunpack.c.l.b16 %v2492
    %v2689 = vunpack.c.l.b16 %v2493
    %v2690 = vunpack.c.l.b16 %v2494
    %v2691 = vunpack.c.l.b16 %v2495
    %v2692 = vunpack.c.l.b16 %v2496
    %v2693 = vunpack.c.l.b16 %v2497
    %v2694 = vunpack.c.l.b16 %v2498
    %v2695 = vunpack.c.l.b16 %v2499
    %v2696 = vunpack.c.l.b16 %v2500
    %v2697 = vunpack.c.l.b16 %v2501
    %v2698 = vunpack.c.l.b16 %v2502
    %v2699 = vunpack.c.l.b16 %v2503
    %v2700 = vunpack.c.l.b16 %v2504
    %v2701 = vunpack.c.l.b16 %v2505
    %v2702 = vunpack.c.l.b16 %v2506
    %v2703 = vunpack.c.l.b16 %v2507
    %v2704 = vunpack.c.l.b16 %v2508
    %v2705 = vunpack.c.l.b16 %v2509
    %v2706 = vunpack.c.l.b16 %v2510
    %v2707 = vunpack.c.l.b16 %v2511
    %v2708 = vunpack.c.l.b16 %v2512
    %v2709 = vunpack.c.l.b16 %v2513
    %v2710 = vunpack.c.l.b16 %v2514
    %v2711 = vunpack.c.l.b16 %v2515
    %v2712 = vunpack.c.l.b16 %v2516
    %v2713 = vunpack.c.l.b16 %v2517
    %v2714 = vunpack.c.l.b16 %v2518
    %v2715 = vunpack.c.l.b16 %v2519
    %v2716 = vunpack.c.l.b16 %v2520
    %v2717 = vunpack.c.l.b16 %v2521
    %v2718 = vunpack.c.l.b16 %v2522
    %v2719 = vunpack.c.l.b16 %v2523
    %v2720 = vunpack.c.l.b16 %v2524
    %v2721 = vunpack.c.l.b16 %v2525
    %v2722 = vunpack.c.l.b16 %v2526
    %v2723 = vunpack.c.l.b16 %v2527
    %v2724 = vunpack.c.l.b16 %v2528
    %v2725 = vunpack.c.l.b16 %v2529
    %v2726 = vunpack.c.l.b16 %v2530
    %v2727 = vunpack.c.l.b16 %v2531
    %v2728 = vunpack.c.l.b16 %v2532
    %v2729 = vunpack.c.l.b16 %v2533
    %v2730 = vunpack.c.l.b16 %v2534
    %v2731 = vunpack.c.l.b16 %v2535
    %v2732 = vunpack.c.l.b16 %v2536
    %v2733 = vunpack.c.l.b16 %v2537
    %v2734 = vpack.c.b16 %v2639, %v2638
    %v2735 = vpack.c.b16 %v2641, %v2640
    %v2736 = vpack.c.b16 %v2643, %v2642
    %v2737 = vpack.c.b16 %v2645, %v2644
    %v2738 = vpack.c.b16 %v2647, %v2646
    %v2739 = vpack.c.b16 %v2649, %v2648
    %v2740 = vpack.c.b16 %v2651, %v2650
    %v2741 = vpack.c.b16 %v2653, %v2652
    %v2742 = vpack.c.b16 %v2655, %v2654
    %v2743 = vpack.c.b16 %v2657, %v2656
    %v2744 = vpack.c.b16 %v2659, %v2658
    %v2745 = vpack.c.b16 %v2661, %v2660
    %v2746 = vpack.c.b16 %v2663, %v2662
    %v2747 = vpack.c.b16 %v2665, %v2664
    %v2748 = vpack.c.b16 %v2667, %v2666
    %v2749 = vpack.c.b16 %v2669, %v2668
    %v2750 = vpack.c.b16 %v2671, %v2670
    %v2751 = vpack.c.b16 %v2673, %v2672
    %v2752 = vpack.c.b16 %v2675, %v2674
    %v2753 = vpack.c.b16 %v2677, %v2676
    %v2754 = vpack.c.b16 %v2679, %v2678
    %v2755 = vpack.c.b16 %v2681, %v2680
    %v2756 = vpack.c.b16 %v2683, %v2682
    %v2757 = vpack.c.b16 %v2685, %v2684
    %v2758 = vpack.c.b16 %v2687, %v2686
    %v2759 = vpack.c.b16 %v2689, %v2688
    %v2760 = vpack.c.b16 %v2691, %v2690
    %v2761 = vpack.c.b16 %v2693, %v2692
    %v2762 = vpack.c.b16 %v2695, %v2694
    %v2763 = vpack.c.b16 %v2697, %v2696
    %v2764 = vpack.c.b16 %v2699, %v2698
    %v2765 = vpack.c.b16 %v2701, %v2700
    %v2766 = vpack.c.b16 %v2703, %v2702
    %v2767 = vpack.c.b16 %v2705, %v2704
    %v2768 = vpack.c.b16 %v2707, %v2706
    %v2769 = vpack.c.b16 %v2709, %v2708
    %v2770 = vpack.c.b16 %v2711, %v2710
    %v2771 = vpack.c.b16 %v2713, %v2712
    %v2772 = vpack.c.b16 %v2715, %v2714
    %v2773 = vpack.c.b16 %v2717, %v2716
    %v2774 = vpack.c.b16 %v2719, %v2718
    %v2775 = vpack.c.b16 %v2721, %v2720
    %v2776 = vpack.c.b16 %v2723, %v2722
    %v2777 = vpack.c.b16 %v2725, %v2724
    %v2778 = vpack.c.b16 %v2727, %v2726
    %v2779 = vpack.c.b16 %v2729, %v2728
    %v2780 = vpack.c.b16 %v2731, %v2730
    %v2781 = vpack.c.b16 %v2733, %v2732
    %2830 = vmatpush.bf16.msra.mxu0 %v2741
    %2831 = vmatpush.bf16.msra.mxu0 %v2740
    %2832 = vmatpush.bf16.msra.mxu0 %v2739
    %2833 = vmatpush.bf16.msra.mxu0 %v2738
    %2834 = vmatpush.bf16.msra.mxu0 %v2737
    %2835 = vmatpush.bf16.msra.mxu0 %v2736
    %2836 = vmatpush.bf16.msra.mxu0 %v2735
    %2837 = vmatpush.bf16.msra.mxu0 %v2734
    %2838 = vmatmul.bf16.gmra.mxu0 %v2436
    %v2839 = vpop.f32.mrf.mxu0
    %v2840 = vadd.f32 %v2540, %v2839
    %v2841 = vpop.f32.mrf.mxu0
    %v2842 = vadd.f32 %v2540, %v2841
    %2843 = vdwg.mxu0
    %2844 = vmatpush.bf16.msra.mxu0 %v2749
    %2845 = vmatpush.bf16.msra.mxu0 %v2748
    %2846 = vmatpush.bf16.msra.mxu0 %v2747
    %2847 = vmatpush.bf16.msra.mxu0 %v2746
    %2848 = vmatpush.bf16.msra.mxu0 %v2745
    %2849 = vmatpush.bf16.msra.mxu0 %v2744
    %2850 = vmatpush.bf16.msra.mxu0 %v2743
    %2851 = vmatpush.bf16.msra.mxu0 %v2742
    %2852 = vmatmul.bf16.gmra.mxu0 %v2437
    %v2853 = vpop.f32.mrf.mxu0
    %v2854 = vadd.f32 %v2840, %v2853
    %v2855 = vpop.f32.mrf.mxu0
    %v2856 = vadd.f32 %v2842, %v2855
    %2857 = vdwg.mxu0
    %2858 = vmatpush.bf16.msra.mxu0 %v2757
    %2859 = vmatpush.bf16.msra.mxu0 %v2756
    %2860 = vmatpush.bf16.msra.mxu0 %v2755
    %2861 = vmatpush.bf16.msra.mxu0 %v2754
    %2862 = vmatpush.bf16.msra.mxu0 %v2753
    %2863 = vmatpush.bf16.msra.mxu0 %v2752
    %2864 = vmatpush.bf16.msra.mxu0 %v2751
    %2865 = vmatpush.bf16.msra.mxu0 %v2750
    %2866 = vmatmul.bf16.gmra.mxu0 %v2438
    %v2867 = vpop.f32.mrf.mxu0
    %v2868 = vadd.f32 %v2854, %v2867
    %v2869 = vpop.f32.mrf.mxu0
    %v2870 = vadd.f32 %v2856, %v2869
    %2871 = vdwg.mxu0
    %2872 = vmatpush.bf16.msra.mxu0 %v2765
    %2873 = vmatpush.bf16.msra.mxu0 %v2764
    %2874 = vmatpush.bf16.msra.mxu0 %v2763
    %2875 = vmatpush.bf16.msra.mxu0 %v2762
    %2876 = vmatpush.bf16.msra.mxu0 %v2761
    %2877 = vmatpush.bf16.msra.mxu0 %v2760
    %2878 = vmatpush.bf16.msra.mxu0 %v2759
    %2879 = vmatpush.bf16.msra.mxu0 %v2758
    %2880 = vmatmul.bf16.gmra.mxu0 %v2439
    %v2881 = vpop.f32.mrf.mxu0
    %v2882 = vadd.f32 %v2868, %v2881
    %v2883 = vpop.f32.mrf.mxu0
    %v2884 = vadd.f32 %v2870, %v2883
    %2885 = vdwg.mxu0
    %2886 = vmatpush.bf16.msra.mxu0 %v2773
    %2887 = vmatpush.bf16.msra.mxu0 %v2772
    %2888 = vmatpush.bf16.msra.mxu0 %v2771
    %2889 = vmatpush.bf16.msra.mxu0 %v2770
    %2890 = vmatpush.bf16.msra.mxu0 %v2769
    %2891 = vmatpush.bf16.msra.mxu0 %v2768
    %2892 = vmatpush.bf16.msra.mxu0 %v2767
    %2893 = vmatpush.bf16.msra.mxu0 %v2766
    %2894 = vmatmul.bf16.gmra.mxu0 %v2440
    %v2895 = vpop.f32.mrf.mxu0
    %v2896 = vadd.f32 %v2882, %v2895
    %v2897 = vpop.f32.mrf.mxu0
    %v2898 = vadd.f32 %v2884, %v2897
    %2899 = vdwg.mxu0
    %2900 = vmatpush.bf16.msra.mxu0 %v2781
    %2901 = vmatpush.bf16.msra.mxu0 %v2780
    %2902 = vmatpush.bf16.msra.mxu0 %v2779
    %2903 = vmatpush.bf16.msra.mxu0 %v2778
    %2904 = vmatpush.bf16.msra.mxu0 %v2777
    %2905 = vmatpush.bf16.msra.mxu0 %v2776
    %2906 = vmatpush.bf16.msra.mxu0 %v2775
    %2907 = vmatpush.bf16.msra.mxu0 %v2774
    %2908 = vmatmul.bf16.gmra.mxu0 %v2441
    %v2909 = vpop.f32.mrf.mxu0
    %v2910 = vadd.f32 %v2896, %v2909
    %v2911 = vpop.f32.mrf.mxu0
    %v2912 = vadd.f32 %v2898, %v2911
    %2913 = vdwg.mxu0
    %v2914 = vadd.f32 %v107, %v2910
    %v2915 = vadd.f32 %v108, %v2912
    %v2916 = vld [vmem:[%s8] sm:$0x1]
    %v2917 = vld [vmem:[%s9] sm:$0x1]
    %v2918 = vsel %vm111, %v2914, 0.0
    %2919 = vadd.xlane.f32.xlu0 %v2918
    %v2920 = vpop.xlane.xlu0 %2919
    %v2921 = vsel %vm111, %v2915, 0.0
    %2922 = vadd.xlane.f32.xlu0 %v2921
    %v2923 = vpop.xlane.xlu0 %2922
    %v2924 = vmul.f32 %v2920, %v124
    %v2925 = vmul.f32 %v2923, %v124
    %v2926 = vsub.f32 %v2914, %v2924
    %v2927 = vsub.f32 %v2915, %v2925
    %v2928 = vmul.f32 %v2926, %v2926
    %v2929 = vmul.f32 %v2927, %v2927
    %v2930 = vsel %vm111, %v2928, 0.0
    %2931 = vadd.xlane.f32.xlu0 %v2930
    %v2932 = vpop.xlane.xlu0 %2931
    %v2933 = vsel %vm111, %v2929, 0.0
    %2934 = vadd.xlane.f32.xlu0 %v2933
    %v2935 = vpop.xlane.xlu0 %2934
    %v2936 = vmul.f32 %v2932, %v124
    %v2937 = vmul.f32 %v2935, %v124
    %v2938 = vadd.f32 %v2936, 1e-05
    %v2939 = vadd.f32 %v2937, 1e-05
    %v2940 = vrsqrt.pop %v2938
    %v2941 = vmul.f32 %v2940, %v2938
    %v2942 = vmul.f32 %v2941, %v2940
    %v2943 = vmul.f32 0.5, %v2942
    %v2944 = vsub.f32 1.5, %v2943
    %v2945 = vmul.f32 %v2940, %v2944
    %vm2946 = vweird.f32 %v2938
    %vm2947 = vweird.f32 %v2940
    %vm2948 = vmor %vm2946, %vm2947
    %v2949 = vsel %vm2948, %v2940, %v2945
    %v2950 = vrsqrt.pop %v2939
    %v2951 = vmul.f32 %v2950, %v2939
    %v2952 = vmul.f32 %v2951, %v2950
    %v2953 = vmul.f32 0.5, %v2952
    %v2954 = vsub.f32 1.5, %v2953
    %v2955 = vmul.f32 %v2950, %v2954
    %vm2956 = vweird.f32 %v2939
    %vm2957 = vweird.f32 %v2950
    %vm2958 = vmor %vm2956, %vm2957
    %v2959 = vsel %vm2958, %v2950, %v2955
    %v2960 = vmul.f32 %v2926, %v2949
    %v2961 = vmul.f32 %v2927, %v2959
    %v2963 = vperm.slane %v2916, 0
    %v2965 = vmul.f32 %v2960, %v2963
    %v2966 = vmul.f32 %v2961, %v2963
    %v2968 = vperm.slane %v2917, 0
    %v2970 = vadd.f32 %v2965, %v2968
    %v2971 = vadd.f32 %v2966, %v2968
    %v2972 = vpack.c.bf16 %v2971, %v2970
    %v2973 = vld [vmem:[%s10] sm:$0xff]
    %v2974 = vld [vmem:[%s10 + $0x8] sm:$0xff]
    %v2975 = vld [vmem:[%s10 + $0x10] sm:$0xff]
    %v2976 = vld [vmem:[%s10 + $0x18] sm:$0xff]
    %v2977 = vld [vmem:[%s10 + $0x20] sm:$0xff]
    %v2978 = vld [vmem:[%s10 + $0x28] sm:$0xff]
    %v2979 = vld [vmem:[%s10 + $0x30] sm:$0xff]
    %v2980 = vld [vmem:[%s10 + $0x38] sm:$0xff]
    %v2981 = vld [vmem:[%s10 + $0x40] sm:$0xff]
    %v2982 = vld [vmem:[%s10 + $0x48] sm:$0xff]
    %v2983 = vld [vmem:[%s10 + $0x50] sm:$0xff]
    %v2984 = vld [vmem:[%s10 + $0x58] sm:$0xff]
    %v2985 = vld [vmem:[%s10 + $0x60] sm:$0xff]
    %v2986 = vld [vmem:[%s10 + $0x68] sm:$0xff]
    %v2987 = vld [vmem:[%s10 + $0x70] sm:$0xff]
    %v2988 = vld [vmem:[%s10 + $0x78] sm:$0xff]
    %v2989 = vld [vmem:[%s10 + $0x80] sm:$0xff]
    %v2990 = vld [vmem:[%s10 + $0x88] sm:$0xff]
    %v2991 = vld [vmem:[%s10 + $0x90] sm:$0xff]
    %v2992 = vld [vmem:[%s10 + $0x98] sm:$0xff]
    %v2993 = vld [vmem:[%s10 + $0xa0] sm:$0xff]
    %v2994 = vld [vmem:[%s10 + $0xa8] sm:$0xff]
    %v2995 = vld [vmem:[%s10 + $0xb0] sm:$0xff]
    %v2996 = vld [vmem:[%s10 + $0xb8] sm:$0xff]
    %v2997 = vld [vmem:[%s10 + $0xc0] sm:$0xff]
    %v2998 = vld [vmem:[%s10 + $0xc8] sm:$0xff]
    %v2999 = vld [vmem:[%s10 + $0xd0] sm:$0xff]
    %v3000 = vld [vmem:[%s10 + $0xd8] sm:$0xff]
    %v3001 = vld [vmem:[%s10 + $0xe0] sm:$0xff]
    %v3002 = vld [vmem:[%s10 + $0xe8] sm:$0xff]
    %v3003 = vld [vmem:[%s10 + $0xf0] sm:$0xff]
    %v3004 = vld [vmem:[%s10 + $0xf8] sm:$0xff]
    %v3005 = vld [vmem:[%s10 + $0x100] sm:$0xff]
    %v3006 = vld [vmem:[%s10 + $0x108] sm:$0xff]
    %v3007 = vld [vmem:[%s10 + $0x110] sm:$0xff]
    %v3008 = vld [vmem:[%s10 + $0x118] sm:$0xff]
    %v3009 = vld [vmem:[%s10 + $0x120] sm:$0xff]
    %v3010 = vld [vmem:[%s10 + $0x128] sm:$0xff]
    %v3011 = vld [vmem:[%s10 + $0x130] sm:$0xff]
    %v3012 = vld [vmem:[%s10 + $0x138] sm:$0xff]
    %v3013 = vld [vmem:[%s10 + $0x140] sm:$0xff]
    %v3014 = vld [vmem:[%s10 + $0x148] sm:$0xff]
    %v3015 = vld [vmem:[%s10 + $0x150] sm:$0xff]
    %v3016 = vld [vmem:[%s10 + $0x158] sm:$0xff]
    %v3017 = vld [vmem:[%s10 + $0x160] sm:$0xff]
    %v3018 = vld [vmem:[%s10 + $0x168] sm:$0xff]
    %v3019 = vld [vmem:[%s10 + $0x170] sm:$0xff]
    %v3020 = vld [vmem:[%s10 + $0x178] sm:$0xff]
    %v3021 = vld [vmem:[%s11] sm:$0xff]
    %v3022 = vld [vmem:[%s11 + $0x8] sm:$0xff]
    %v3023 = vld [vmem:[%s11 + $0x10] sm:$0xff]
    %v3027 = vperm.slane %v3021, 0
    %v3028 = vperm.slane %v3021, 1
    %v3029 = vperm.slane %v3021, 2
    %v3030 = vperm.slane %v3021, 3
    %v3031 = vperm.slane %v3021, 4
    %v3032 = vperm.slane %v3021, 5
    %v3033 = vperm.slane %v3021, 6
    %v3034 = vperm.slane %v3021, 7
    %v3035 = vperm.slane %v3022, 0
    %v3036 = vperm.slane %v3022, 1
    %v3037 = vperm.slane %v3022, 2
    %v3038 = vperm.slane %v3022, 3
    %v3039 = vperm.slane %v3022, 4
    %v3040 = vperm.slane %v3022, 5
    %v3041 = vperm.slane %v3022, 6
    %v3042 = vperm.slane %v3022, 7
    %v3043 = vperm.slane %v3023, 0
    %v3044 = vperm.slane %v3023, 1
    %v3045 = vperm.slane %v3023, 2
    %v3046 = vperm.slane %v3023, 3
    %v3047 = vperm.slane %v3023, 4
    %v3048 = vperm.slane %v3023, 5
    %v3049 = vperm.slane %v3023, 6
    %v3050 = vperm.slane %v3023, 7
    %v3123 = vunpack.c.l.b16 %v2973
    %v3124 = vunpack.c.h.b16 %v2973
    %v3125 = vunpack.c.l.b16 %v2974
    %v3126 = vunpack.c.h.b16 %v2974
    %v3127 = vunpack.c.l.b16 %v2975
    %v3128 = vunpack.c.h.b16 %v2975
    %v3129 = vunpack.c.l.b16 %v2976
    %v3130 = vunpack.c.h.b16 %v2976
    %v3131 = vunpack.c.l.b16 %v2977
    %v3132 = vunpack.c.h.b16 %v2977
    %v3133 = vunpack.c.l.b16 %v2978
    %v3134 = vunpack.c.h.b16 %v2978
    %v3135 = vunpack.c.l.b16 %v2979
    %v3136 = vunpack.c.h.b16 %v2979
    %v3137 = vunpack.c.l.b16 %v2980
    %v3138 = vunpack.c.h.b16 %v2980
    %v3139 = vunpack.c.l.b16 %v2981
    %v3140 = vunpack.c.h.b16 %v2981
    %v3141 = vunpack.c.l.b16 %v2982
    %v3142 = vunpack.c.h.b16 %v2982
    %v3143 = vunpack.c.l.b16 %v2983
    %v3144 = vunpack.c.h.b16 %v2983
    %v3145 = vunpack.c.l.b16 %v2984
    %v3146 = vunpack.c.h.b16 %v2984
    %v3147 = vunpack.c.l.b16 %v2985
    %v3148 = vunpack.c.h.b16 %v2985
    %v3149 = vunpack.c.l.b16 %v2986
    %v3150 = vunpack.c.h.b16 %v2986
    %v3151 = vunpack.c.l.b16 %v2987
    %v3152 = vunpack.c.h.b16 %v2987
    %v3153 = vunpack.c.l.b16 %v2988
    %v3154 = vunpack.c.h.b16 %v2988
    %v3155 = vunpack.c.l.b16 %v2989
    %v3156 = vunpack.c.h.b16 %v2989
    %v3157 = vunpack.c.l.b16 %v2990
    %v3158 = vunpack.c.h.b16 %v2990
    %v3159 = vunpack.c.l.b16 %v2991
    %v3160 = vunpack.c.h.b16 %v2991
    %v3161 = vunpack.c.l.b16 %v2992
    %v3162 = vunpack.c.h.b16 %v2992
    %v3163 = vunpack.c.l.b16 %v2993
    %v3164 = vunpack.c.h.b16 %v2993
    %v3165 = vunpack.c.l.b16 %v2994
    %v3166 = vunpack.c.h.b16 %v2994
    %v3167 = vunpack.c.l.b16 %v2995
    %v3168 = vunpack.c.h.b16 %v2995
    %v3169 = vunpack.c.l.b16 %v2996
    %v3170 = vunpack.c.h.b16 %v2996
    %v3171 = vunpack.c.l.b16 %v2997
    %v3172 = vunpack.c.h.b16 %v2997
    %v3173 = vunpack.c.l.b16 %v2998
    %v3174 = vunpack.c.h.b16 %v2998
    %v3175 = vunpack.c.l.b16 %v2999
    %v3176 = vunpack.c.h.b16 %v2999
    %v3177 = vunpack.c.l.b16 %v3000
    %v3178 = vunpack.c.h.b16 %v3000
    %v3179 = vunpack.c.l.b16 %v3001
    %v3180 = vunpack.c.h.b16 %v3001
    %v3181 = vunpack.c.l.b16 %v3002
    %v3182 = vunpack.c.h.b16 %v3002
    %v3183 = vunpack.c.l.b16 %v3003
    %v3184 = vunpack.c.h.b16 %v3003
    %v3185 = vunpack.c.l.b16 %v3004
    %v3186 = vunpack.c.h.b16 %v3004
    %v3187 = vunpack.c.l.b16 %v3005
    %v3188 = vunpack.c.h.b16 %v3005
    %v3189 = vunpack.c.l.b16 %v3006
    %v3190 = vunpack.c.h.b16 %v3006
    %v3191 = vunpack.c.l.b16 %v3007
    %v3192 = vunpack.c.h.b16 %v3007
    %v3193 = vunpack.c.l.b16 %v3008
    %v3194 = vunpack.c.h.b16 %v3008
    %v3195 = vunpack.c.l.b16 %v3009
    %v3196 = vunpack.c.h.b16 %v3009
    %v3197 = vunpack.c.l.b16 %v3010
    %v3198 = vunpack.c.h.b16 %v3010
    %v3199 = vunpack.c.l.b16 %v3011
    %v3200 = vunpack.c.h.b16 %v3011
    %v3201 = vunpack.c.l.b16 %v3012
    %v3202 = vunpack.c.h.b16 %v3012
    %v3203 = vunpack.c.l.b16 %v3013
    %v3204 = vunpack.c.h.b16 %v3013
    %v3205 = vunpack.c.l.b16 %v3014
    %v3206 = vunpack.c.h.b16 %v3014
    %v3207 = vunpack.c.l.b16 %v3015
    %v3208 = vunpack.c.h.b16 %v3015
    %v3209 = vunpack.c.l.b16 %v3016
    %v3210 = vunpack.c.h.b16 %v3016
    %v3211 = vunpack.c.l.b16 %v3017
    %v3212 = vunpack.c.h.b16 %v3017
    %v3213 = vunpack.c.l.b16 %v3018
    %v3214 = vunpack.c.h.b16 %v3018
    %v3215 = vunpack.c.l.b16 %v3019
    %v3216 = vunpack.c.h.b16 %v3019
    %v3217 = vunpack.c.l.b16 %v3020
    %v3218 = vunpack.c.h.b16 %v3020
    %v3219 = vpack.c.b16 %v3147, %v3123
    %v3220 = vpack.c.b16 %v3148, %v3124
    %v3221 = vpack.c.b16 %v3149, %v3125
    %v3222 = vpack.c.b16 %v3150, %v3126
    %v3223 = vpack.c.b16 %v3151, %v3127
    %v3224 = vpack.c.b16 %v3152, %v3128
    %v3225 = vpack.c.b16 %v3153, %v3129
    %v3226 = vpack.c.b16 %v3154, %v3130
    %v3227 = vpack.c.b16 %v3155, %v3131
    %v3228 = vpack.c.b16 %v3156, %v3132
    %v3229 = vpack.c.b16 %v3157, %v3133
    %v3230 = vpack.c.b16 %v3158, %v3134
    %v3231 = vpack.c.b16 %v3159, %v3135
    %v3232 = vpack.c.b16 %v3160, %v3136
    %v3233 = vpack.c.b16 %v3161, %v3137
    %v3234 = vpack.c.b16 %v3162, %v3138
    %v3235 = vpack.c.b16 %v3163, %v3139
    %v3236 = vpack.c.b16 %v3164, %v3140
    %v3237 = vpack.c.b16 %v3165, %v3141
    %v3238 = vpack.c.b16 %v3166, %v3142
    %v3239 = vpack.c.b16 %v3167, %v3143
    %v3240 = vpack.c.b16 %v3168, %v3144
    %v3241 = vpack.c.b16 %v3169, %v3145
    %v3242 = vpack.c.b16 %v3170, %v3146
    %v3243 = vpack.c.b16 %v3195, %v3171
    %v3244 = vpack.c.b16 %v3196, %v3172
    %v3245 = vpack.c.b16 %v3197, %v3173
    %v3246 = vpack.c.b16 %v3198, %v3174
    %v3247 = vpack.c.b16 %v3199, %v3175
    %v3248 = vpack.c.b16 %v3200, %v3176
    %v3249 = vpack.c.b16 %v3201, %v3177
    %v3250 = vpack.c.b16 %v3202, %v3178
    %v3251 = vpack.c.b16 %v3203, %v3179
    %v3252 = vpack.c.b16 %v3204, %v3180
    %v3253 = vpack.c.b16 %v3205, %v3181
    %v3254 = vpack.c.b16 %v3206, %v3182
    %v3255 = vpack.c.b16 %v3207, %v3183
    %v3256 = vpack.c.b16 %v3208, %v3184
    %v3257 = vpack.c.b16 %v3209, %v3185
    %v3258 = vpack.c.b16 %v3210, %v3186
    %v3259 = vpack.c.b16 %v3211, %v3187
    %v3260 = vpack.c.b16 %v3212, %v3188
    %v3261 = vpack.c.b16 %v3213, %v3189
    %v3262 = vpack.c.b16 %v3214, %v3190
    %v3263 = vpack.c.b16 %v3215, %v3191
    %v3264 = vpack.c.b16 %v3216, %v3192
    %v3265 = vpack.c.b16 %v3217, %v3193
    %v3266 = vpack.c.b16 %v3218, %v3194
    %v3316 = vsel %vm111, %v2972, 0
    %3318 = vmatpush.bf16.msra.mxu0 0
    %3319 = vmatpush.bf16.msra.mxu0 0
    %3320 = vmatpush.bf16.msra.mxu0 0
    %3321 = vmatpush.bf16.msra.mxu0 0
    %3322 = vmatpush.bf16.msra.mxu0 0
    %3323 = vmatpush.bf16.msra.mxu0 0
    %3324 = vmatpush.bf16.msra.mxu0 %v3243
    %3325 = vmatpush.bf16.msra.mxu0 %v3219
    %3326 = vmatmul.bf16.gmra.mxu0 %v3316
    %v3327 = vpop.f32.mrf.mxu0
    %v3328 = vadd.f32 %v3027, %v3327
    %v3329 = vpop.f32.mrf.mxu0
    %v3330 = vadd.f32 %v3027, %v3329
    %3331 = vdwg.mxu0
    %3332 = vmatpush.bf16.msra.mxu0 0
    %3333 = vmatpush.bf16.msra.mxu0 0
    %3334 = vmatpush.bf16.msra.mxu0 0
    %3335 = vmatpush.bf16.msra.mxu0 0
    %3336 = vmatpush.bf16.msra.mxu0 0
    %3337 = vmatpush.bf16.msra.mxu0 0
    %3338 = vmatpush.bf16.msra.mxu0 %v3244
    %3339 = vmatpush.bf16.msra.mxu0 %v3220
    %3340 = vmatmul.bf16.gmra.mxu0 %v3316
    %v3341 = vpop.f32.mrf.mxu0
    %v3342 = vadd.f32 %v3028, %v3341
    %v3343 = vpop.f32.mrf.mxu0
    %v3344 = vadd.f32 %v3028, %v3343
    %3345 = vdwg.mxu0
    %3346 = vmatpush.bf16.msra.mxu0 0
    %3347 = vmatpush.bf16.msra.mxu0 0
    %3348 = vmatpush.bf16.msra.mxu0 0
    %3349 = vmatpush.bf16.msra.mxu0 0
    %3350 = vmatpush.bf16.msra.mxu0 0
    %3351 = vmatpush.bf16.msra.mxu0 0
    %3352 = vmatpush.bf16.msra.mxu0 %v3245
    %3353 = vmatpush.bf16.msra.mxu0 %v3221
    %3354 = vmatmul.bf16.gmra.mxu0 %v3316
    %v3355 = vpop.f32.mrf.mxu0
    %v3356 = vadd.f32 %v3029, %v3355
    %v3357 = vpop.f32.mrf.mxu0
    %v3358 = vadd.f32 %v3029, %v3357
    %3359 = vdwg.mxu0
    %3360 = vmatpush.bf16.msra.mxu0 0
    %3361 = vmatpush.bf16.msra.mxu0 0
    %3362 = vmatpush.bf16.msra.mxu0 0
    %3363 = vmatpush.bf16.msra.mxu0 0
    %3364 = vmatpush.bf16.msra.mxu0 0
    %3365 = vmatpush.bf16.msra.mxu0 0
    %3366 = vmatpush.bf16.msra.mxu0 %v3246
    %3367 = vmatpush.bf16.msra.mxu0 %v3222
    %3368 = vmatmul.bf16.gmra.mxu0 %v3316
    %v3369 = vpop.f32.mrf.mxu0
    %v3370 = vadd.f32 %v3030, %v3369
    %v3371 = vpop.f32.mrf.mxu0
    %v3372 = vadd.f32 %v3030, %v3371
    %3373 = vdwg.mxu0
    %3374 = vmatpush.bf16.msra.mxu0 0
    %3375 = vmatpush.bf16.msra.mxu0 0
    %3376 = vmatpush.bf16.msra.mxu0 0
    %3377 = vmatpush.bf16.msra.mxu0 0
    %3378 = vmatpush.bf16.msra.mxu0 0
    %3379 = vmatpush.bf16.msra.mxu0 0
    %3380 = vmatpush.bf16.msra.mxu0 %v3247
    %3381 = vmatpush.bf16.msra.mxu0 %v3223
    %3382 = vmatmul.bf16.gmra.mxu0 %v3316
    %v3383 = vpop.f32.mrf.mxu0
    %v3384 = vadd.f32 %v3031, %v3383
    %v3385 = vpop.f32.mrf.mxu0
    %v3386 = vadd.f32 %v3031, %v3385
    %3387 = vdwg.mxu0
    %3388 = vmatpush.bf16.msra.mxu0 0
    %3389 = vmatpush.bf16.msra.mxu0 0
    %3390 = vmatpush.bf16.msra.mxu0 0
    %3391 = vmatpush.bf16.msra.mxu0 0
    %3392 = vmatpush.bf16.msra.mxu0 0
    %3393 = vmatpush.bf16.msra.mxu0 0
    %3394 = vmatpush.bf16.msra.mxu0 %v3248
    %3395 = vmatpush.bf16.msra.mxu0 %v3224
    %3396 = vmatmul.bf16.gmra.mxu0 %v3316
    %v3397 = vpop.f32.mrf.mxu0
    %v3398 = vadd.f32 %v3032, %v3397
    %v3399 = vpop.f32.mrf.mxu0
    %v3400 = vadd.f32 %v3032, %v3399
    %3401 = vdwg.mxu0
    %3402 = vmatpush.bf16.msra.mxu0 0
    %3403 = vmatpush.bf16.msra.mxu0 0
    %3404 = vmatpush.bf16.msra.mxu0 0
    %3405 = vmatpush.bf16.msra.mxu0 0
    %3406 = vmatpush.bf16.msra.mxu0 0
    %3407 = vmatpush.bf16.msra.mxu0 0
    %3408 = vmatpush.bf16.msra.mxu0 %v3249
    %3409 = vmatpush.bf16.msra.mxu0 %v3225
    %3410 = vmatmul.bf16.gmra.mxu0 %v3316
    %v3411 = vpop.f32.mrf.mxu0
    %v3412 = vadd.f32 %v3033, %v3411
    %v3413 = vpop.f32.mrf.mxu0
    %v3414 = vadd.f32 %v3033, %v3413
    %3415 = vdwg.mxu0
    %3416 = vmatpush.bf16.msra.mxu0 0
    %3417 = vmatpush.bf16.msra.mxu0 0
    %3418 = vmatpush.bf16.msra.mxu0 0
    %3419 = vmatpush.bf16.msra.mxu0 0
    %3420 = vmatpush.bf16.msra.mxu0 0
    %3421 = vmatpush.bf16.msra.mxu0 0
    %3422 = vmatpush.bf16.msra.mxu0 %v3250
    %3423 = vmatpush.bf16.msra.mxu0 %v3226
    %3424 = vmatmul.bf16.gmra.mxu0 %v3316
    %v3425 = vpop.f32.mrf.mxu0
    %v3426 = vadd.f32 %v3034, %v3425
    %v3427 = vpop.f32.mrf.mxu0
    %v3428 = vadd.f32 %v3034, %v3427
    %3429 = vdwg.mxu0
    %3430 = vmatpush.bf16.msra.mxu0 0
    %3431 = vmatpush.bf16.msra.mxu0 0
    %3432 = vmatpush.bf16.msra.mxu0 0
    %3433 = vmatpush.bf16.msra.mxu0 0
    %3434 = vmatpush.bf16.msra.mxu0 0
    %3435 = vmatpush.bf16.msra.mxu0 0
    %3436 = vmatpush.bf16.msra.mxu0 %v3251
    %3437 = vmatpush.bf16.msra.mxu0 %v3227
    %3438 = vmatmul.bf16.gmra.mxu0 %v3316
    %v3439 = vpop.f32.mrf.mxu0
    %v3440 = vadd.f32 %v3035, %v3439
    %v3441 = vpop.f32.mrf.mxu0
    %v3442 = vadd.f32 %v3035, %v3441
    %3443 = vdwg.mxu0
    %3444 = vmatpush.bf16.msra.mxu0 0
    %3445 = vmatpush.bf16.msra.mxu0 0
    %3446 = vmatpush.bf16.msra.mxu0 0
    %3447 = vmatpush.bf16.msra.mxu0 0
    %3448 = vmatpush.bf16.msra.mxu0 0
    %3449 = vmatpush.bf16.msra.mxu0 0
    %3450 = vmatpush.bf16.msra.mxu0 %v3252
    %3451 = vmatpush.bf16.msra.mxu0 %v3228
    %3452 = vmatmul.bf16.gmra.mxu0 %v3316
    %v3453 = vpop.f32.mrf.mxu0
    %v3454 = vadd.f32 %v3036, %v3453
    %v3455 = vpop.f32.mrf.mxu0
    %v3456 = vadd.f32 %v3036, %v3455
    %3457 = vdwg.mxu0
    %3458 = vmatpush.bf16.msra.mxu0 0
    %3459 = vmatpush.bf16.msra.mxu0 0
    %3460 = vmatpush.bf16.msra.mxu0 0
    %3461 = vmatpush.bf16.msra.mxu0 0
    %3462 = vmatpush.bf16.msra.mxu0 0
    %3463 = vmatpush.bf16.msra.mxu0 0
    %3464 = vmatpush.bf16.msra.mxu0 %v3253
    %3465 = vmatpush.bf16.msra.mxu0 %v3229
    %3466 = vmatmul.bf16.gmra.mxu0 %v3316
    %v3467 = vpop.f32.mrf.mxu0
    %v3468 = vadd.f32 %v3037, %v3467
    %v3469 = vpop.f32.mrf.mxu0
    %v3470 = vadd.f32 %v3037, %v3469
    %3471 = vdwg.mxu0
    %3472 = vmatpush.bf16.msra.mxu0 0
    %3473 = vmatpush.bf16.msra.mxu0 0
    %3474 = vmatpush.bf16.msra.mxu0 0
    %3475 = vmatpush.bf16.msra.mxu0 0
    %3476 = vmatpush.bf16.msra.mxu0 0
    %3477 = vmatpush.bf16.msra.mxu0 0
    %3478 = vmatpush.bf16.msra.mxu0 %v3254
    %3479 = vmatpush.bf16.msra.mxu0 %v3230
    %3480 = vmatmul.bf16.gmra.mxu0 %v3316
    %v3481 = vpop.f32.mrf.mxu0
    %v3482 = vadd.f32 %v3038, %v3481
    %v3483 = vpop.f32.mrf.mxu0
    %v3484 = vadd.f32 %v3038, %v3483
    %3485 = vdwg.mxu0
    %3486 = vmatpush.bf16.msra.mxu0 0
    %3487 = vmatpush.bf16.msra.mxu0 0
    %3488 = vmatpush.bf16.msra.mxu0 0
    %3489 = vmatpush.bf16.msra.mxu0 0
    %3490 = vmatpush.bf16.msra.mxu0 0
    %3491 = vmatpush.bf16.msra.mxu0 0
    %3492 = vmatpush.bf16.msra.mxu0 %v3255
    %3493 = vmatpush.bf16.msra.mxu0 %v3231
    %3494 = vmatmul.bf16.gmra.mxu0 %v3316
    %v3495 = vpop.f32.mrf.mxu0
    %v3496 = vadd.f32 %v3039, %v3495
    %v3497 = vpop.f32.mrf.mxu0
    %v3498 = vadd.f32 %v3039, %v3497
    %3499 = vdwg.mxu0
    %3500 = vmatpush.bf16.msra.mxu0 0
    %3501 = vmatpush.bf16.msra.mxu0 0
    %3502 = vmatpush.bf16.msra.mxu0 0
    %3503 = vmatpush.bf16.msra.mxu0 0
    %3504 = vmatpush.bf16.msra.mxu0 0
    %3505 = vmatpush.bf16.msra.mxu0 0
    %3506 = vmatpush.bf16.msra.mxu0 %v3256
    %3507 = vmatpush.bf16.msra.mxu0 %v3232
    %3508 = vmatmul.bf16.gmra.mxu0 %v3316
    %v3509 = vpop.f32.mrf.mxu0
    %v3510 = vadd.f32 %v3040, %v3509
    %v3511 = vpop.f32.mrf.mxu0
    %v3512 = vadd.f32 %v3040, %v3511
    %3513 = vdwg.mxu0
    %3514 = vmatpush.bf16.msra.mxu0 0
    %3515 = vmatpush.bf16.msra.mxu0 0
    %3516 = vmatpush.bf16.msra.mxu0 0
    %3517 = vmatpush.bf16.msra.mxu0 0
    %3518 = vmatpush.bf16.msra.mxu0 0
    %3519 = vmatpush.bf16.msra.mxu0 0
    %3520 = vmatpush.bf16.msra.mxu0 %v3257
    %3521 = vmatpush.bf16.msra.mxu0 %v3233
    %3522 = vmatmul.bf16.gmra.mxu0 %v3316
    %v3523 = vpop.f32.mrf.mxu0
    %v3524 = vadd.f32 %v3041, %v3523
    %v3525 = vpop.f32.mrf.mxu0
    %v3526 = vadd.f32 %v3041, %v3525
    %3527 = vdwg.mxu0
    %3528 = vmatpush.bf16.msra.mxu0 0
    %3529 = vmatpush.bf16.msra.mxu0 0
    %3530 = vmatpush.bf16.msra.mxu0 0
    %3531 = vmatpush.bf16.msra.mxu0 0
    %3532 = vmatpush.bf16.msra.mxu0 0
    %3533 = vmatpush.bf16.msra.mxu0 0
    %3534 = vmatpush.bf16.msra.mxu0 %v3258
    %3535 = vmatpush.bf16.msra.mxu0 %v3234
    %3536 = vmatmul.bf16.gmra.mxu0 %v3316
    %v3537 = vpop.f32.mrf.mxu0
    %v3538 = vadd.f32 %v3042, %v3537
    %v3539 = vpop.f32.mrf.mxu0
    %v3540 = vadd.f32 %v3042, %v3539
    %3541 = vdwg.mxu0
    %3542 = vmatpush.bf16.msra.mxu0 0
    %3543 = vmatpush.bf16.msra.mxu0 0
    %3544 = vmatpush.bf16.msra.mxu0 0
    %3545 = vmatpush.bf16.msra.mxu0 0
    %3546 = vmatpush.bf16.msra.mxu0 0
    %3547 = vmatpush.bf16.msra.mxu0 0
    %3548 = vmatpush.bf16.msra.mxu0 %v3259
    %3549 = vmatpush.bf16.msra.mxu0 %v3235
    %3550 = vmatmul.bf16.gmra.mxu0 %v3316
    %v3551 = vpop.f32.mrf.mxu0
    %v3552 = vadd.f32 %v3043, %v3551
    %v3553 = vpop.f32.mrf.mxu0
    %v3554 = vadd.f32 %v3043, %v3553
    %3555 = vdwg.mxu0
    %3556 = vmatpush.bf16.msra.mxu0 0
    %3557 = vmatpush.bf16.msra.mxu0 0
    %3558 = vmatpush.bf16.msra.mxu0 0
    %3559 = vmatpush.bf16.msra.mxu0 0
    %3560 = vmatpush.bf16.msra.mxu0 0
    %3561 = vmatpush.bf16.msra.mxu0 0
    %3562 = vmatpush.bf16.msra.mxu0 %v3260
    %3563 = vmatpush.bf16.msra.mxu0 %v3236
    %3564 = vmatmul.bf16.gmra.mxu0 %v3316
    %v3565 = vpop.f32.mrf.mxu0
    %v3566 = vadd.f32 %v3044, %v3565
    %v3567 = vpop.f32.mrf.mxu0
    %v3568 = vadd.f32 %v3044, %v3567
    %3569 = vdwg.mxu0
    %3570 = vmatpush.bf16.msra.mxu0 0
    %3571 = vmatpush.bf16.msra.mxu0 0
    %3572 = vmatpush.bf16.msra.mxu0 0
    %3573 = vmatpush.bf16.msra.mxu0 0
    %3574 = vmatpush.bf16.msra.mxu0 0
    %3575 = vmatpush.bf16.msra.mxu0 0
    %3576 = vmatpush.bf16.msra.mxu0 %v3261
    %3577 = vmatpush.bf16.msra.mxu0 %v3237
    %3578 = vmatmul.bf16.gmra.mxu0 %v3316
    %v3579 = vpop.f32.mrf.mxu0
    %v3580 = vadd.f32 %v3045, %v3579
    %v3581 = vpop.f32.mrf.mxu0
    %v3582 = vadd.f32 %v3045, %v3581
    %3583 = vdwg.mxu0
    %3584 = vmatpush.bf16.msra.mxu0 0
    %3585 = vmatpush.bf16.msra.mxu0 0
    %3586 = vmatpush.bf16.msra.mxu0 0
    %3587 = vmatpush.bf16.msra.mxu0 0
    %3588 = vmatpush.bf16.msra.mxu0 0
    %3589 = vmatpush.bf16.msra.mxu0 0
    %3590 = vmatpush.bf16.msra.mxu0 %v3262
    %3591 = vmatpush.bf16.msra.mxu0 %v3238
    %3592 = vmatmul.bf16.gmra.mxu0 %v3316
    %v3593 = vpop.f32.mrf.mxu0
    %v3594 = vadd.f32 %v3046, %v3593
    %v3595 = vpop.f32.mrf.mxu0
    %v3596 = vadd.f32 %v3046, %v3595
    %3597 = vdwg.mxu0
    %3598 = vmatpush.bf16.msra.mxu0 0
    %3599 = vmatpush.bf16.msra.mxu0 0
    %3600 = vmatpush.bf16.msra.mxu0 0
    %3601 = vmatpush.bf16.msra.mxu0 0
    %3602 = vmatpush.bf16.msra.mxu0 0
    %3603 = vmatpush.bf16.msra.mxu0 0
    %3604 = vmatpush.bf16.msra.mxu0 %v3263
    %3605 = vmatpush.bf16.msra.mxu0 %v3239
    %3606 = vmatmul.bf16.gmra.mxu0 %v3316
    %v3607 = vpop.f32.mrf.mxu0
    %v3608 = vadd.f32 %v3047, %v3607
    %v3609 = vpop.f32.mrf.mxu0
    %v3610 = vadd.f32 %v3047, %v3609
    %3611 = vdwg.mxu0
    %3612 = vmatpush.bf16.msra.mxu0 0
    %3613 = vmatpush.bf16.msra.mxu0 0
    %3614 = vmatpush.bf16.msra.mxu0 0
    %3615 = vmatpush.bf16.msra.mxu0 0
    %3616 = vmatpush.bf16.msra.mxu0 0
    %3617 = vmatpush.bf16.msra.mxu0 0
    %3618 = vmatpush.bf16.msra.mxu0 %v3264
    %3619 = vmatpush.bf16.msra.mxu0 %v3240
    %3620 = vmatmul.bf16.gmra.mxu0 %v3316
    %v3621 = vpop.f32.mrf.mxu0
    %v3622 = vadd.f32 %v3048, %v3621
    %v3623 = vpop.f32.mrf.mxu0
    %v3624 = vadd.f32 %v3048, %v3623
    %3625 = vdwg.mxu0
    %3626 = vmatpush.bf16.msra.mxu0 0
    %3627 = vmatpush.bf16.msra.mxu0 0
    %3628 = vmatpush.bf16.msra.mxu0 0
    %3629 = vmatpush.bf16.msra.mxu0 0
    %3630 = vmatpush.bf16.msra.mxu0 0
    %3631 = vmatpush.bf16.msra.mxu0 0
    %3632 = vmatpush.bf16.msra.mxu0 %v3265
    %3633 = vmatpush.bf16.msra.mxu0 %v3241
    %3634 = vmatmul.bf16.gmra.mxu0 %v3316
    %v3635 = vpop.f32.mrf.mxu0
    %v3636 = vadd.f32 %v3049, %v3635
    %v3637 = vpop.f32.mrf.mxu0
    %v3638 = vadd.f32 %v3049, %v3637
    %3639 = vdwg.mxu0
    %3640 = vmatpush.bf16.msra.mxu0 0
    %3641 = vmatpush.bf16.msra.mxu0 0
    %3642 = vmatpush.bf16.msra.mxu0 0
    %3643 = vmatpush.bf16.msra.mxu0 0
    %3644 = vmatpush.bf16.msra.mxu0 0
    %3645 = vmatpush.bf16.msra.mxu0 0
    %3646 = vmatpush.bf16.msra.mxu0 %v3266
    %3647 = vmatpush.bf16.msra.mxu0 %v3242
    %3648 = vmatmul.bf16.gmra.mxu0 %v3316
    %v3649 = vpop.f32.mrf.mxu0
    %v3650 = vadd.f32 %v3050, %v3649
    %v3651 = vpop.f32.mrf.mxu0
    %v3652 = vadd.f32 %v3050, %v3651
    %3653 = vdwg.mxu0
    %v3654 = vmul.f32 %v3328, %v3328
    %v3655 = vmul.f32 %v3342, %v3342
    %v3656 = vmul.f32 %v3356, %v3356
    %v3657 = vmul.f32 %v3370, %v3370
    %v3658 = vmul.f32 %v3384, %v3384
    %v3659 = vmul.f32 %v3398, %v3398
    %v3660 = vmul.f32 %v3412, %v3412
    %v3661 = vmul.f32 %v3426, %v3426
    %v3662 = vmul.f32 %v3440, %v3440
    %v3663 = vmul.f32 %v3454, %v3454
    %v3664 = vmul.f32 %v3468, %v3468
    %v3665 = vmul.f32 %v3482, %v3482
    %v3666 = vmul.f32 %v3496, %v3496
    %v3667 = vmul.f32 %v3510, %v3510
    %v3668 = vmul.f32 %v3524, %v3524
    %v3669 = vmul.f32 %v3538, %v3538
    %v3670 = vmul.f32 %v3552, %v3552
    %v3671 = vmul.f32 %v3566, %v3566
    %v3672 = vmul.f32 %v3580, %v3580
    %v3673 = vmul.f32 %v3594, %v3594
    %v3674 = vmul.f32 %v3608, %v3608
    %v3675 = vmul.f32 %v3622, %v3622
    %v3676 = vmul.f32 %v3636, %v3636
    %v3677 = vmul.f32 %v3650, %v3650
    %v3678 = vmul.f32 %v3330, %v3330
    %v3679 = vmul.f32 %v3344, %v3344
    %v3680 = vmul.f32 %v3358, %v3358
    %v3681 = vmul.f32 %v3372, %v3372
    %v3682 = vmul.f32 %v3386, %v3386
    %v3683 = vmul.f32 %v3400, %v3400
    %v3684 = vmul.f32 %v3414, %v3414
    %v3685 = vmul.f32 %v3428, %v3428
    %v3686 = vmul.f32 %v3442, %v3442
    %v3687 = vmul.f32 %v3456, %v3456
    %v3688 = vmul.f32 %v3470, %v3470
    %v3689 = vmul.f32 %v3484, %v3484
    %v3690 = vmul.f32 %v3498, %v3498
    %v3691 = vmul.f32 %v3512, %v3512
    %v3692 = vmul.f32 %v3526, %v3526
    %v3693 = vmul.f32 %v3540, %v3540
    %v3694 = vmul.f32 %v3554, %v3554
    %v3695 = vmul.f32 %v3568, %v3568
    %v3696 = vmul.f32 %v3582, %v3582
    %v3697 = vmul.f32 %v3596, %v3596
    %v3698 = vmul.f32 %v3610, %v3610
    %v3699 = vmul.f32 %v3624, %v3624
    %v3700 = vmul.f32 %v3638, %v3638
    %v3701 = vmul.f32 %v3652, %v3652
    %v3702 = vmul.f32 %v3328, %v3654
    %v3703 = vmul.f32 %v3342, %v3655
    %v3704 = vmul.f32 %v3356, %v3656
    %v3705 = vmul.f32 %v3370, %v3657
    %v3706 = vmul.f32 %v3384, %v3658
    %v3707 = vmul.f32 %v3398, %v3659
    %v3708 = vmul.f32 %v3412, %v3660
    %v3709 = vmul.f32 %v3426, %v3661
    %v3710 = vmul.f32 %v3440, %v3662
    %v3711 = vmul.f32 %v3454, %v3663
    %v3712 = vmul.f32 %v3468, %v3664
    %v3713 = vmul.f32 %v3482, %v3665
    %v3714 = vmul.f32 %v3496, %v3666
    %v3715 = vmul.f32 %v3510, %v3667
    %v3716 = vmul.f32 %v3524, %v3668
    %v3717 = vmul.f32 %v3538, %v3669
    %v3718 = vmul.f32 %v3552, %v3670
    %v3719 = vmul.f32 %v3566, %v3671
    %v3720 = vmul.f32 %v3580, %v3672
    %v3721 = vmul.f32 %v3594, %v3673
    %v3722 = vmul.f32 %v3608, %v3674
    %v3723 = vmul.f32 %v3622, %v3675
    %v3724 = vmul.f32 %v3636, %v3676
    %v3725 = vmul.f32 %v3650, %v3677
    %v3726 = vmul.f32 %v3330, %v3678
    %v3727 = vmul.f32 %v3344, %v3679
    %v3728 = vmul.f32 %v3358, %v3680
    %v3729 = vmul.f32 %v3372, %v3681
    %v3730 = vmul.f32 %v3386, %v3682
    %v3731 = vmul.f32 %v3400, %v3683
    %v3732 = vmul.f32 %v3414, %v3684
    %v3733 = vmul.f32 %v3428, %v3685
    %v3734 = vmul.f32 %v3442, %v3686
    %v3735 = vmul.f32 %v3456, %v3687
    %v3736 = vmul.f32 %v3470, %v3688
    %v3737 = vmul.f32 %v3484, %v3689
    %v3738 = vmul.f32 %v3498, %v3690
    %v3739 = vmul.f32 %v3512, %v3691
    %v3740 = vmul.f32 %v3526, %v3692
    %v3741 = vmul.f32 %v3540, %v3693
    %v3742 = vmul.f32 %v3554, %v3694
    %v3743 = vmul.f32 %v3568, %v3695
    %v3744 = vmul.f32 %v3582, %v3696
    %v3745 = vmul.f32 %v3596, %v3697
    %v3746 = vmul.f32 %v3610, %v3698
    %v3747 = vmul.f32 %v3624, %v3699
    %v3748 = vmul.f32 %v3638, %v3700
    %v3749 = vmul.f32 %v3652, %v3701
    %v3750 = vmul.f32 %v3702, 0.044715
    %v3751 = vmul.f32 %v3703, 0.044715
    %v3752 = vmul.f32 %v3704, 0.044715
    %v3753 = vmul.f32 %v3705, 0.044715
    %v3754 = vmul.f32 %v3706, 0.044715
    %v3755 = vmul.f32 %v3707, 0.044715
    %v3756 = vmul.f32 %v3708, 0.044715
    %v3757 = vmul.f32 %v3709, 0.044715
    %v3758 = vmul.f32 %v3710, 0.044715
    %v3759 = vmul.f32 %v3711, 0.044715
    %v3760 = vmul.f32 %v3712, 0.044715
    %v3761 = vmul.f32 %v3713, 0.044715
    %v3762 = vmul.f32 %v3714, 0.044715
    %v3763 = vmul.f32 %v3715, 0.044715
    %v3764 = vmul.f32 %v3716, 0.044715
    %v3765 = vmul.f32 %v3717, 0.044715
    %v3766 = vmul.f32 %v3718, 0.044715
    %v3767 = vmul.f32 %v3719, 0.044715
    %v3768 = vmul.f32 %v3720, 0.044715
    %v3769 = vmul.f32 %v3721, 0.044715
    %v3770 = vmul.f32 %v3722, 0.044715
    %v3771 = vmul.f32 %v3723, 0.044715
    %v3772 = vmul.f32 %v3724, 0.044715
    %v3773 = vmul.f32 %v3725, 0.044715
    %v3774 = vmul.f32 %v3726, 0.044715
    %v3775 = vmul.f32 %v3727, 0.044715
    %v3776 = vmul.f32 %v3728, 0.044715
    %v3777 = vmul.f32 %v3729, 0.044715
    %v3778 = vmul.f32 %v3730, 0.044715
    %v3779 = vmul.f32 %v3731, 0.044715
    %v3780 = vmul.f32 %v3732, 0.044715
    %v3781 = vmul.f32 %v3733, 0.044715
    %v3782 = vmul.f32 %v3734, 0.044715
    %v3783 = vmul.f32 %v3735, 0.044715
    %v3784 = vmul.f32 %v3736, 0.044715
    %v3785 = vmul.f32 %v3737, 0.044715
    %v3786 = vmul.f32 %v3738, 0.044715
    %v3787 = vmul.f32 %v3739, 0.044715
    %v3788 = vmul.f32 %v3740, 0.044715
    %v3789 = vmul.f32 %v3741, 0.044715
    %v3790 = vmul.f32 %v3742, 0.044715
    %v3791 = vmul.f32 %v3743, 0.044715
    %v3792 = vmul.f32 %v3744, 0.044715
    %v3793 = vmul.f32 %v3745, 0.044715
    %v3794 = vmul.f32 %v3746, 0.044715
    %v3795 = vmul.f32 %v3747, 0.044715
    %v3796 = vmul.f32 %v3748, 0.044715
    %v3797 = vmul.f32 %v3749, 0.044715
    %v3798 = vadd.f32 %v3328, %v3750
    %v3799 = vadd.f32 %v3342, %v3751
    %v3800 = vadd.f32 %v3356, %v3752
    %v3801 = vadd.f32 %v3370, %v3753
    %v3802 = vadd.f32 %v3384, %v3754
    %v3803 = vadd.f32 %v3398, %v3755
    %v3804 = vadd.f32 %v3412, %v3756
    %v3805 = vadd.f32 %v3426, %v3757
    %v3806 = vadd.f32 %v3440, %v3758
    %v3807 = vadd.f32 %v3454, %v3759
    %v3808 = vadd.f32 %v3468, %v3760
    %v3809 = vadd.f32 %v3482, %v3761
    %v3810 = vadd.f32 %v3496, %v3762
    %v3811 = vadd.f32 %v3510, %v3763
    %v3812 = vadd.f32 %v3524, %v3764
    %v3813 = vadd.f32 %v3538, %v3765
    %v3814 = vadd.f32 %v3552, %v3766
    %v3815 = vadd.f32 %v3566, %v3767
    %v3816 = vadd.f32 %v3580, %v3768
    %v3817 = vadd.f32 %v3594, %v3769
    %v3818 = vadd.f32 %v3608, %v3770
    %v3819 = vadd.f32 %v3622, %v3771
    %v3820 = vadd.f32 %v3636, %v3772
    %v3821 = vadd.f32 %v3650, %v3773
    %v3822 = vadd.f32 %v3330, %v3774
    %v3823 = vadd.f32 %v3344, %v3775
    %v3824 = vadd.f32 %v3358, %v3776
    %v3825 = vadd.f32 %v3372, %v3777
    %v3826 = vadd.f32 %v3386, %v3778
    %v3827 = vadd.f32 %v3400, %v3779
    %v3828 = vadd.f32 %v3414, %v3780
    %v3829 = vadd.f32 %v3428, %v3781
    %v3830 = vadd.f32 %v3442, %v3782
    %v3831 = vadd.f32 %v3456, %v3783
    %v3832 = vadd.f32 %v3470, %v3784
    %v3833 = vadd.f32 %v3484, %v3785
    %v3834 = vadd.f32 %v3498, %v3786
    %v3835 = vadd.f32 %v3512, %v3787
    %v3836 = vadd.f32 %v3526, %v3788
    %v3837 = vadd.f32 %v3540, %v3789
    %v3838 = vadd.f32 %v3554, %v3790
    %v3839 = vadd.f32 %v3568, %v3791
    %v3840 = vadd.f32 %v3582, %v3792
    %v3841 = vadd.f32 %v3596, %v3793
    %v3842 = vadd.f32 %v3610, %v3794
    %v3843 = vadd.f32 %v3624, %v3795
    %v3844 = vadd.f32 %v3638, %v3796
    %v3845 = vadd.f32 %v3652, %v3797
    %v3846 = vmul.f32 %v3798, 0.7978846
    %v3847 = vmul.f32 %v3799, 0.7978846
    %v3848 = vmul.f32 %v3800, 0.7978846
    %v3849 = vmul.f32 %v3801, 0.7978846
    %v3850 = vmul.f32 %v3802, 0.7978846
    %v3851 = vmul.f32 %v3803, 0.7978846
    %v3852 = vmul.f32 %v3804, 0.7978846
    %v3853 = vmul.f32 %v3805, 0.7978846
    %v3854 = vmul.f32 %v3806, 0.7978846
    %v3855 = vmul.f32 %v3807, 0.7978846
    %v3856 = vmul.f32 %v3808, 0.7978846
    %v3857 = vmul.f32 %v3809, 0.7978846
    %v3858 = vmul.f32 %v3810, 0.7978846
    %v3859 = vmul.f32 %v3811, 0.7978846
    %v3860 = vmul.f32 %v3812, 0.7978846
    %v3861 = vmul.f32 %v3813, 0.7978846
    %v3862 = vmul.f32 %v3814, 0.7978846
    %v3863 = vmul.f32 %v3815, 0.7978846
    %v3864 = vmul.f32 %v3816, 0.7978846
    %v3865 = vmul.f32 %v3817, 0.7978846
    %v3866 = vmul.f32 %v3818, 0.7978846
    %v3867 = vmul.f32 %v3819, 0.7978846
    %v3868 = vmul.f32 %v3820, 0.7978846
    %v3869 = vmul.f32 %v3821, 0.7978846
    %v3870 = vmul.f32 %v3822, 0.7978846
    %v3871 = vmul.f32 %v3823, 0.7978846
    %v3872 = vmul.f32 %v3824, 0.7978846
    %v3873 = vmul.f32 %v3825, 0.7978846
    %v3874 = vmul.f32 %v3826, 0.7978846
    %v3875 = vmul.f32 %v3827, 0.7978846
    %v3876 = vmul.f32 %v3828, 0.7978846
    %v3877 = vmul.f32 %v3829, 0.7978846
    %v3878 = vmul.f32 %v3830, 0.7978846
    %v3879 = vmul.f32 %v3831, 0.7978846
    %v3880 = vmul.f32 %v3832, 0.7978846
    %v3881 = vmul.f32 %v3833, 0.7978846
    %v3882 = vmul.f32 %v3834, 0.7978846
    %v3883 = vmul.f32 %v3835, 0.7978846
    %v3884 = vmul.f32 %v3836, 0.7978846
    %v3885 = vmul.f32 %v3837, 0.7978846
    %v3886 = vmul.f32 %v3838, 0.7978846
    %v3887 = vmul.f32 %v3839, 0.7978846
    %v3888 = vmul.f32 %v3840, 0.7978846
    %v3889 = vmul.f32 %v3841, 0.7978846
    %v3890 = vmul.f32 %v3842, 0.7978846
    %v3891 = vmul.f32 %v3843, 0.7978846
    %v3892 = vmul.f32 %v3844, 0.7978846
    %v3893 = vmul.f32 %v3845, 0.7978846
    %v3894 = vtanh.pop %v3846
    %v3895 = vtanh.pop %v3847
    %v3896 = vtanh.pop %v3848
    %v3897 = vtanh.pop %v3849
    %v3898 = vtanh.pop %v3850
    %v3899 = vtanh.pop %v3851
    %v3900 = vtanh.pop %v3852
    %v3901 = vtanh.pop %v3853
    %v3902 = vtanh.pop %v3854
    %v3903 = vtanh.pop %v3855
    %v3904 = vtanh.pop %v3856
    %v3905 = vtanh.pop %v3857
    %v3906 = vtanh.pop %v3858
    %v3907 = vtanh.pop %v3859
    %v3908 = vtanh.pop %v3860
    %v3909 = vtanh.pop %v3861
    %v3910 = vtanh.pop %v3862
    %v3911 = vtanh.pop %v3863
    %v3912 = vtanh.pop %v3864
    %v3913 = vtanh.pop %v3865
    %v3914 = vtanh.pop %v3866
    %v3915 = vtanh.pop %v3867
    %v3916 = vtanh.pop %v3868
    %v3917 = vtanh.pop %v3869
    %v3918 = vtanh.pop %v3870
    %v3919 = vtanh.pop %v3871
    %v3920 = vtanh.pop %v3872
    %v3921 = vtanh.pop %v3873
    %v3922 = vtanh.pop %v3874
    %v3923 = vtanh.pop %v3875
    %v3924 = vtanh.pop %v3876
    %v3925 = vtanh.pop %v3877
    %v3926 = vtanh.pop %v3878
    %v3927 = vtanh.pop %v3879
    %v3928 = vtanh.pop %v3880
    %v3929 = vtanh.pop %v3881
    %v3930 = vtanh.pop %v3882
    %v3931 = vtanh.pop %v3883
    %v3932 = vtanh.pop %v3884
    %v3933 = vtanh.pop %v3885
    %v3934 = vtanh.pop %v3886
    %v3935 = vtanh.pop %v3887
    %v3936 = vtanh.pop %v3888
    %v3937 = vtanh.pop %v3889
    %v3938 = vtanh.pop %v3890
    %v3939 = vtanh.pop %v3891
    %v3940 = vtanh.pop %v3892
    %v3941 = vtanh.pop %v3893
    %v3942 = vadd.f32 %v3894, 1.0
    %v3943 = vadd.f32 %v3895, 1.0
    %v3944 = vadd.f32 %v3896, 1.0
    %v3945 = vadd.f32 %v3897, 1.0
    %v3946 = vadd.f32 %v3898, 1.0
    %v3947 = vadd.f32 %v3899, 1.0
    %v3948 = vadd.f32 %v3900, 1.0
    %v3949 = vadd.f32 %v3901, 1.0
    %v3950 = vadd.f32 %v3902, 1.0
    %v3951 = vadd.f32 %v3903, 1.0
    %v3952 = vadd.f32 %v3904, 1.0
    %v3953 = vadd.f32 %v3905, 1.0
    %v3954 = vadd.f32 %v3906, 1.0
    %v3955 = vadd.f32 %v3907, 1.0
    %v3956 = vadd.f32 %v3908, 1.0
    %v3957 = vadd.f32 %v3909, 1.0
    %v3958 = vadd.f32 %v3910, 1.0
    %v3959 = vadd.f32 %v3911, 1.0
    %v3960 = vadd.f32 %v3912, 1.0
    %v3961 = vadd.f32 %v3913, 1.0
    %v3962 = vadd.f32 %v3914, 1.0
    %v3963 = vadd.f32 %v3915, 1.0
    %v3964 = vadd.f32 %v3916, 1.0
    %v3965 = vadd.f32 %v3917, 1.0
    %v3966 = vadd.f32 %v3918, 1.0
    %v3967 = vadd.f32 %v3919, 1.0
    %v3968 = vadd.f32 %v3920, 1.0
    %v3969 = vadd.f32 %v3921, 1.0
    %v3970 = vadd.f32 %v3922, 1.0
    %v3971 = vadd.f32 %v3923, 1.0
    %v3972 = vadd.f32 %v3924, 1.0
    %v3973 = vadd.f32 %v3925, 1.0
    %v3974 = vadd.f32 %v3926, 1.0
    %v3975 = vadd.f32 %v3927, 1.0
    %v3976 = vadd.f32 %v3928, 1.0
    %v3977 = vadd.f32 %v3929, 1.0
    %v3978 = vadd.f32 %v3930, 1.0
    %v3979 = vadd.f32 %v3931, 1.0
    %v3980 = vadd.f32 %v3932, 1.0
    %v3981 = vadd.f32 %v3933, 1.0
    %v3982 = vadd.f32 %v3934, 1.0
    %v3983 = vadd.f32 %v3935, 1.0
    %v3984 = vadd.f32 %v3936, 1.0
    %v3985 = vadd.f32 %v3937, 1.0
    %v3986 = vadd.f32 %v3938, 1.0
    %v3987 = vadd.f32 %v3939, 1.0
    %v3988 = vadd.f32 %v3940, 1.0
    %v3989 = vadd.f32 %v3941, 1.0
    %v3990 = vmul.f32 %v3942, 0.5
    %v3991 = vmul.f32 %v3943, 0.5
    %v3992 = vmul.f32 %v3944, 0.5
    %v3993 = vmul.f32 %v3945, 0.5
    %v3994 = vmul.f32 %v3946, 0.5
    %v3995 = vmul.f32 %v3947, 0.5
    %v3996 = vmul.f32 %v3948, 0.5
    %v3997 = vmul.f32 %v3949, 0.5
    %v3998 = vmul.f32 %v3950, 0.5
    %v3999 = vmul.f32 %v3951, 0.5
    %v4000 = vmul.f32 %v3952, 0.5
    %v4001 = vmul.f32 %v3953, 0.5
    %v4002 = vmul.f32 %v3954, 0.5
    %v4003 = vmul.f32 %v3955, 0.5
    %v4004 = vmul.f32 %v3956, 0.5
    %v4005 = vmul.f32 %v3957, 0.5
    %v4006 = vmul.f32 %v3958, 0.5
    %v4007 = vmul.f32 %v3959, 0.5
    %v4008 = vmul.f32 %v3960, 0.5
    %v4009 = vmul.f32 %v3961, 0.5
    %v4010 = vmul.f32 %v3962, 0.5
    %v4011 = vmul.f32 %v3963, 0.5
    %v4012 = vmul.f32 %v3964, 0.5
    %v4013 = vmul.f32 %v3965, 0.5
    %v4014 = vmul.f32 %v3966, 0.5
    %v4015 = vmul.f32 %v3967, 0.5
    %v4016 = vmul.f32 %v3968, 0.5
    %v4017 = vmul.f32 %v3969, 0.5
    %v4018 = vmul.f32 %v3970, 0.5
    %v4019 = vmul.f32 %v3971, 0.5
    %v4020 = vmul.f32 %v3972, 0.5
    %v4021 = vmul.f32 %v3973, 0.5
    %v4022 = vmul.f32 %v3974, 0.5
    %v4023 = vmul.f32 %v3975, 0.5
    %v4024 = vmul.f32 %v3976, 0.5
    %v4025 = vmul.f32 %v3977, 0.5
    %v4026 = vmul.f32 %v3978, 0.5
    %v4027 = vmul.f32 %v3979, 0.5
    %v4028 = vmul.f32 %v3980, 0.5
    %v4029 = vmul.f32 %v3981, 0.5
    %v4030 = vmul.f32 %v3982, 0.5
    %v4031 = vmul.f32 %v3983, 0.5
    %v4032 = vmul.f32 %v3984, 0.5
    %v4033 = vmul.f32 %v3985, 0.5
    %v4034 = vmul.f32 %v3986, 0.5
    %v4035 = vmul.f32 %v3987, 0.5
    %v4036 = vmul.f32 %v3988, 0.5
    %v4037 = vmul.f32 %v3989, 0.5
    %v4038 = vmul.f32 %v3328, %v3990
    %v4039 = vmul.f32 %v3342, %v3991
    %v4040 = vmul.f32 %v3356, %v3992
    %v4041 = vmul.f32 %v3370, %v3993
    %v4042 = vmul.f32 %v3384, %v3994
    %v4043 = vmul.f32 %v3398, %v3995
    %v4044 = vmul.f32 %v3412, %v3996
    %v4045 = vmul.f32 %v3426, %v3997
    %v4046 = vmul.f32 %v3440, %v3998
    %v4047 = vmul.f32 %v3454, %v3999
    %v4048 = vmul.f32 %v3468, %v4000
    %v4049 = vmul.f32 %v3482, %v4001
    %v4050 = vmul.f32 %v3496, %v4002
    %v4051 = vmul.f32 %v3510, %v4003
    %v4052 = vmul.f32 %v3524, %v4004
    %v4053 = vmul.f32 %v3538, %v4005
    %v4054 = vmul.f32 %v3552, %v4006
    %v4055 = vmul.f32 %v3566, %v4007
    %v4056 = vmul.f32 %v3580, %v4008
    %v4057 = vmul.f32 %v3594, %v4009
    %v4058 = vmul.f32 %v3608, %v4010
    %v4059 = vmul.f32 %v3622, %v4011
    %v4060 = vmul.f32 %v3636, %v4012
    %v4061 = vmul.f32 %v3650, %v4013
    %v4062 = vmul.f32 %v3330, %v4014
    %v4063 = vmul.f32 %v3344, %v4015
    %v4064 = vmul.f32 %v3358, %v4016
    %v4065 = vmul.f32 %v3372, %v4017
    %v4066 = vmul.f32 %v3386, %v4018
    %v4067 = vmul.f32 %v3400, %v4019
    %v4068 = vmul.f32 %v3414, %v4020
    %v4069 = vmul.f32 %v3428, %v4021
    %v4070 = vmul.f32 %v3442, %v4022
    %v4071 = vmul.f32 %v3456, %v4023
    %v4072 = vmul.f32 %v3470, %v4024
    %v4073 = vmul.f32 %v3484, %v4025
    %v4074 = vmul.f32 %v3498, %v4026
    %v4075 = vmul.f32 %v3512, %v4027
    %v4076 = vmul.f32 %v3526, %v4028
    %v4077 = vmul.f32 %v3540, %v4029
    %v4078 = vmul.f32 %v3554, %v4030
    %v4079 = vmul.f32 %v3568, %v4031
    %v4080 = vmul.f32 %v3582, %v4032
    %v4081 = vmul.f32 %v3596, %v4033
    %v4082 = vmul.f32 %v3610, %v4034
    %v4083 = vmul.f32 %v3624, %v4035
    %v4084 = vmul.f32 %v3638, %v4036
    %v4085 = vmul.f32 %v3652, %v4037
    %v4086 = vpack.c.bf16 %v4062, %v4038
    %v4087 = vpack.c.bf16 %v4063, %v4039
    %v4088 = vpack.c.bf16 %v4064, %v4040
    %v4089 = vpack.c.bf16 %v4065, %v4041
    %v4090 = vpack.c.bf16 %v4066, %v4042
    %v4091 = vpack.c.bf16 %v4067, %v4043
    %v4092 = vpack.c.bf16 %v4068, %v4044
    %v4093 = vpack.c.bf16 %v4069, %v4045
    %v4094 = vpack.c.bf16 %v4070, %v4046
    %v4095 = vpack.c.bf16 %v4071, %v4047
    %v4096 = vpack.c.bf16 %v4072, %v4048
    %v4097 = vpack.c.bf16 %v4073, %v4049
    %v4098 = vpack.c.bf16 %v4074, %v4050
    %v4099 = vpack.c.bf16 %v4075, %v4051
    %v4100 = vpack.c.bf16 %v4076, %v4052
    %v4101 = vpack.c.bf16 %v4077, %v4053
    %v4102 = vpack.c.bf16 %v4078, %v4054
    %v4103 = vpack.c.bf16 %v4079, %v4055
    %v4104 = vpack.c.bf16 %v4080, %v4056
    %v4105 = vpack.c.bf16 %v4081, %v4057
    %v4106 = vpack.c.bf16 %v4082, %v4058
    %v4107 = vpack.c.bf16 %v4083, %v4059
    %v4108 = vpack.c.bf16 %v4084, %v4060
    %v4109 = vpack.c.bf16 %v4085, %v4061
    %v4110 = vld [vmem:[%s12] sm:$0xf]
    %v4111 = vld [vmem:[%s12 + $0x4] sm:$0xf]
    %v4112 = vld [vmem:[%s12 + $0x8] sm:$0xf]
    %v4113 = vld [vmem:[%s12 + $0xc] sm:$0xf]
    %v4114 = vld [vmem:[%s12 + $0x10] sm:$0xf]
    %v4115 = vld [vmem:[%s12 + $0x14] sm:$0xf]
    %v4116 = vld [vmem:[%s12 + $0x18] sm:$0xf]
    %v4117 = vld [vmem:[%s12 + $0x1c] sm:$0xf]
    %v4118 = vld [vmem:[%s12 + $0x20] sm:$0xf]
    %v4119 = vld [vmem:[%s12 + $0x24] sm:$0xf]
    %v4120 = vld [vmem:[%s12 + $0x28] sm:$0xf]
    %v4121 = vld [vmem:[%s12 + $0x2c] sm:$0xf]
    %v4122 = vld [vmem:[%s12 + $0x30] sm:$0xf]
    %v4123 = vld [vmem:[%s12 + $0x34] sm:$0xf]
    %v4124 = vld [vmem:[%s12 + $0x38] sm:$0xf]
    %v4125 = vld [vmem:[%s12 + $0x3c] sm:$0xf]
    %v4126 = vld [vmem:[%s12 + $0x40] sm:$0xf]
    %v4127 = vld [vmem:[%s12 + $0x44] sm:$0xf]
    %v4128 = vld [vmem:[%s12 + $0x48] sm:$0xf]
    %v4129 = vld [vmem:[%s12 + $0x4c] sm:$0xf]
    %v4130 = vld [vmem:[%s12 + $0x50] sm:$0xf]
    %v4131 = vld [vmem:[%s12 + $0x54] sm:$0xf]
    %v4132 = vld [vmem:[%s12 + $0x58] sm:$0xf]
    %v4133 = vld [vmem:[%s12 + $0x5c] sm:$0xf]
    %v4134 = vld [vmem:[%s12 + $0x60] sm:$0xf]
    %v4135 = vld [vmem:[%s12 + $0x64] sm:$0xf]
    %v4136 = vld [vmem:[%s12 + $0x68] sm:$0xf]
    %v4137 = vld [vmem:[%s12 + $0x6c] sm:$0xf]
    %v4138 = vld [vmem:[%s12 + $0x70] sm:$0xf]
    %v4139 = vld [vmem:[%s12 + $0x74] sm:$0xf]
    %v4140 = vld [vmem:[%s12 + $0x78] sm:$0xf]
    %v4141 = vld [vmem:[%s12 + $0x7c] sm:$0xf]
    %v4142 = vld [vmem:[%s12 + $0x80] sm:$0xf]
    %v4143 = vld [vmem:[%s12 + $0x84] sm:$0xf]
    %v4144 = vld [vmem:[%s12 + $0x88] sm:$0xf]
    %v4145 = vld [vmem:[%s12 + $0x8c] sm:$0xf]
    %v4146 = vld [vmem:[%s12 + $0x90] sm:$0xf]
    %v4147 = vld [vmem:[%s12 + $0x94] sm:$0xf]
    %v4148 = vld [vmem:[%s12 + $0x98] sm:$0xf]
    %v4149 = vld [vmem:[%s12 + $0x9c] sm:$0xf]
    %v4150 = vld [vmem:[%s12 + $0xa0] sm:$0xf]
    %v4151 = vld [vmem:[%s12 + $0xa4] sm:$0xf]
    %v4152 = vld [vmem:[%s12 + $0xa8] sm:$0xf]
    %v4153 = vld [vmem:[%s12 + $0xac] sm:$0xf]
    %v4154 = vld [vmem:[%s12 + $0xb0] sm:$0xf]
    %v4155 = vld [vmem:[%s12 + $0xb4] sm:$0xf]
    %v4156 = vld [vmem:[%s12 + $0xb8] sm:$0xf]
    %v4157 = vld [vmem:[%s12 + $0xbc] sm:$0xf]
    %v4158 = vld [vmem:[%s12 + $0xc0] sm:$0xf]
    %v4159 = vld [vmem:[%s12 + $0xc4] sm:$0xf]
    %v4160 = vld [vmem:[%s12 + $0xc8] sm:$0xf]
    %v4161 = vld [vmem:[%s12 + $0xcc] sm:$0xf]
    %v4162 = vld [vmem:[%s12 + $0xd0] sm:$0xf]
    %v4163 = vld [vmem:[%s12 + $0xd4] sm:$0xf]
    %v4164 = vld [vmem:[%s12 + $0xd8] sm:$0xf]
    %v4165 = vld [vmem:[%s12 + $0xdc] sm:$0xf]
    %v4166 = vld [vmem:[%s12 + $0xe0] sm:$0xf]
    %v4167 = vld [vmem:[%s12 + $0xe4] sm:$0xf]
    %v4168 = vld [vmem:[%s12 + $0xe8] sm:$0xf]
    %v4169 = vld [vmem:[%s12 + $0xec] sm:$0xf]
    %v4170 = vld [vmem:[%s12 + $0xf0] sm:$0xf]
    %v4171 = vld [vmem:[%s12 + $0xf4] sm:$0xf]
    %v4172 = vld [vmem:[%s12 + $0xf8] sm:$0xf]
    %v4173 = vld [vmem:[%s12 + $0xfc] sm:$0xf]
    %v4174 = vld [vmem:[%s12 + $0x100] sm:$0xf]
    %v4175 = vld [vmem:[%s12 + $0x104] sm:$0xf]
    %v4176 = vld [vmem:[%s12 + $0x108] sm:$0xf]
    %v4177 = vld [vmem:[%s12 + $0x10c] sm:$0xf]
    %v4178 = vld [vmem:[%s12 + $0x110] sm:$0xf]
    %v4179 = vld [vmem:[%s12 + $0x114] sm:$0xf]
    %v4180 = vld [vmem:[%s12 + $0x118] sm:$0xf]
    %v4181 = vld [vmem:[%s12 + $0x11c] sm:$0xf]
    %v4182 = vld [vmem:[%s12 + $0x120] sm:$0xf]
    %v4183 = vld [vmem:[%s12 + $0x124] sm:$0xf]
    %v4184 = vld [vmem:[%s12 + $0x128] sm:$0xf]
    %v4185 = vld [vmem:[%s12 + $0x12c] sm:$0xf]
    %v4186 = vld [vmem:[%s12 + $0x130] sm:$0xf]
    %v4187 = vld [vmem:[%s12 + $0x134] sm:$0xf]
    %v4188 = vld [vmem:[%s12 + $0x138] sm:$0xf]
    %v4189 = vld [vmem:[%s12 + $0x13c] sm:$0xf]
    %v4190 = vld [vmem:[%s12 + $0x140] sm:$0xf]
    %v4191 = vld [vmem:[%s12 + $0x144] sm:$0xf]
    %v4192 = vld [vmem:[%s12 + $0x148] sm:$0xf]
    %v4193 = vld [vmem:[%s12 + $0x14c] sm:$0xf]
    %v4194 = vld [vmem:[%s12 + $0x150] sm:$0xf]
    %v4195 = vld [vmem:[%s12 + $0x154] sm:$0xf]
    %v4196 = vld [vmem:[%s12 + $0x158] sm:$0xf]
    %v4197 = vld [vmem:[%s12 + $0x15c] sm:$0xf]
    %v4198 = vld [vmem:[%s12 + $0x160] sm:$0xf]
    %v4199 = vld [vmem:[%s12 + $0x164] sm:$0xf]
    %v4200 = vld [vmem:[%s12 + $0x168] sm:$0xf]
    %v4201 = vld [vmem:[%s12 + $0x16c] sm:$0xf]
    %v4202 = vld [vmem:[%s12 + $0x170] sm:$0xf]
    %v4203 = vld [vmem:[%s12 + $0x174] sm:$0xf]
    %v4204 = vld [vmem:[%s12 + $0x178] sm:$0xf]
    %v4205 = vld [vmem:[%s12 + $0x17c] sm:$0xf]
    %v4206 = vld [vmem:[%s12 + $0x180] sm:$0xf]
    %v4207 = vld [vmem:[%s12 + $0x184] sm:$0xf]
    %v4208 = vld [vmem:[%s12 + $0x188] sm:$0xf]
    %v4209 = vld [vmem:[%s12 + $0x18c] sm:$0xf]
    %v4210 = vld [vmem:[%s12 + $0x190] sm:$0xf]
    %v4211 = vld [vmem:[%s12 + $0x194] sm:$0xf]
    %v4212 = vld [vmem:[%s12 + $0x198] sm:$0xf]
    %v4213 = vld [vmem:[%s12 + $0x19c] sm:$0xf]
    %v4214 = vld [vmem:[%s12 + $0x1a0] sm:$0xf]
    %v4215 = vld [vmem:[%s12 + $0x1a4] sm:$0xf]
    %v4216 = vld [vmem:[%s12 + $0x1a8] sm:$0xf]
    %v4217 = vld [vmem:[%s12 + $0x1ac] sm:$0xf]
    %v4218 = vld [vmem:[%s12 + $0x1b0] sm:$0xf]
    %v4219 = vld [vmem:[%s12 + $0x1b4] sm:$0xf]
    %v4220 = vld [vmem:[%s12 + $0x1b8] sm:$0xf]
    %v4221 = vld [vmem:[%s12 + $0x1bc] sm:$0xf]
    %v4222 = vld [vmem:[%s12 + $0x1c0] sm:$0xf]
    %v4223 = vld [vmem:[%s12 + $0x1c4] sm:$0xf]
    %v4224 = vld [vmem:[%s12 + $0x1c8] sm:$0xf]
    %v4225 = vld [vmem:[%s12 + $0x1cc] sm:$0xf]
    %v4226 = vld [vmem:[%s12 + $0x1d0] sm:$0xf]
    %v4227 = vld [vmem:[%s12 + $0x1d4] sm:$0xf]
    %v4228 = vld [vmem:[%s12 + $0x1d8] sm:$0xf]
    %v4229 = vld [vmem:[%s12 + $0x1dc] sm:$0xf]
    %v4230 = vld [vmem:[%s12 + $0x1e0] sm:$0xf]
    %v4231 = vld [vmem:[%s12 + $0x1e4] sm:$0xf]
    %v4232 = vld [vmem:[%s12 + $0x1e8] sm:$0xf]
    %v4233 = vld [vmem:[%s12 + $0x1ec] sm:$0xf]
    %v4234 = vld [vmem:[%s12 + $0x1f0] sm:$0xf]
    %v4235 = vld [vmem:[%s12 + $0x1f4] sm:$0xf]
    %v4236 = vld [vmem:[%s12 + $0x1f8] sm:$0xf]
    %v4237 = vld [vmem:[%s12 + $0x1fc] sm:$0xf]
    %v4238 = vld [vmem:[%s12 + $0x200] sm:$0xf]
    %v4239 = vld [vmem:[%s12 + $0x204] sm:$0xf]
    %v4240 = vld [vmem:[%s12 + $0x208] sm:$0xf]
    %v4241 = vld [vmem:[%s12 + $0x20c] sm:$0xf]
    %v4242 = vld [vmem:[%s12 + $0x210] sm:$0xf]
    %v4243 = vld [vmem:[%s12 + $0x214] sm:$0xf]
    %v4244 = vld [vmem:[%s12 + $0x218] sm:$0xf]
    %v4245 = vld [vmem:[%s12 + $0x21c] sm:$0xf]
    %v4246 = vld [vmem:[%s12 + $0x220] sm:$0xf]
    %v4247 = vld [vmem:[%s12 + $0x224] sm:$0xf]
    %v4248 = vld [vmem:[%s12 + $0x228] sm:$0xf]
    %v4249 = vld [vmem:[%s12 + $0x22c] sm:$0xf]
    %v4250 = vld [vmem:[%s12 + $0x230] sm:$0xf]
    %v4251 = vld [vmem:[%s12 + $0x234] sm:$0xf]
    %v4252 = vld [vmem:[%s12 + $0x238] sm:$0xf]
    %v4253 = vld [vmem:[%s12 + $0x23c] sm:$0xf]
    %v4254 = vld [vmem:[%s12 + $0x240] sm:$0xf]
    %v4255 = vld [vmem:[%s12 + $0x244] sm:$0xf]
    %v4256 = vld [vmem:[%s12 + $0x248] sm:$0xf]
    %v4257 = vld [vmem:[%s12 + $0x24c] sm:$0xf]
    %v4258 = vld [vmem:[%s12 + $0x250] sm:$0xf]
    %v4259 = vld [vmem:[%s12 + $0x254] sm:$0xf]
    %v4260 = vld [vmem:[%s12 + $0x258] sm:$0xf]
    %v4261 = vld [vmem:[%s12 + $0x25c] sm:$0xf]
    %v4262 = vld [vmem:[%s12 + $0x260] sm:$0xf]
    %v4263 = vld [vmem:[%s12 + $0x264] sm:$0xf]
    %v4264 = vld [vmem:[%s12 + $0x268] sm:$0xf]
    %v4265 = vld [vmem:[%s12 + $0x26c] sm:$0xf]
    %v4266 = vld [vmem:[%s12 + $0x270] sm:$0xf]
    %v4267 = vld [vmem:[%s12 + $0x274] sm:$0xf]
    %v4268 = vld [vmem:[%s12 + $0x278] sm:$0xf]
    %v4269 = vld [vmem:[%s12 + $0x27c] sm:$0xf]
    %v4270 = vld [vmem:[%s12 + $0x280] sm:$0xf]
    %v4271 = vld [vmem:[%s12 + $0x284] sm:$0xf]
    %v4272 = vld [vmem:[%s12 + $0x288] sm:$0xf]
    %v4273 = vld [vmem:[%s12 + $0x28c] sm:$0xf]
    %v4274 = vld [vmem:[%s12 + $0x290] sm:$0xf]
    %v4275 = vld [vmem:[%s12 + $0x294] sm:$0xf]
    %v4276 = vld [vmem:[%s12 + $0x298] sm:$0xf]
    %v4277 = vld [vmem:[%s12 + $0x29c] sm:$0xf]
    %v4278 = vld [vmem:[%s12 + $0x2a0] sm:$0xf]
    %v4279 = vld [vmem:[%s12 + $0x2a4] sm:$0xf]
    %v4280 = vld [vmem:[%s12 + $0x2a8] sm:$0xf]
    %v4281 = vld [vmem:[%s12 + $0x2ac] sm:$0xf]
    %v4282 = vld [vmem:[%s12 + $0x2b0] sm:$0xf]
    %v4283 = vld [vmem:[%s12 + $0x2b4] sm:$0xf]
    %v4284 = vld [vmem:[%s12 + $0x2b8] sm:$0xf]
    %v4285 = vld [vmem:[%s12 + $0x2bc] sm:$0xf]
    %v4286 = vld [vmem:[%s12 + $0x2c0] sm:$0xf]
    %v4287 = vld [vmem:[%s12 + $0x2c4] sm:$0xf]
    %v4288 = vld [vmem:[%s12 + $0x2c8] sm:$0xf]
    %v4289 = vld [vmem:[%s12 + $0x2cc] sm:$0xf]
    %v4290 = vld [vmem:[%s12 + $0x2d0] sm:$0xf]
    %v4291 = vld [vmem:[%s12 + $0x2d4] sm:$0xf]
    %v4292 = vld [vmem:[%s12 + $0x2d8] sm:$0xf]
    %v4293 = vld [vmem:[%s12 + $0x2dc] sm:$0xf]
    %v4294 = vld [vmem:[%s12 + $0x2e0] sm:$0xf]
    %v4295 = vld [vmem:[%s12 + $0x2e4] sm:$0xf]
    %v4296 = vld [vmem:[%s12 + $0x2e8] sm:$0xf]
    %v4297 = vld [vmem:[%s12 + $0x2ec] sm:$0xf]
    %v4298 = vld [vmem:[%s12 + $0x2f0] sm:$0xf]
    %v4299 = vld [vmem:[%s12 + $0x2f4] sm:$0xf]
    %v4300 = vld [vmem:[%s12 + $0x2f8] sm:$0xf]
    %v4301 = vld [vmem:[%s12 + $0x2fc] sm:$0xf]
    %v4302 = vld [vmem:[%s12 + $0x300] sm:$0xf]
    %v4303 = vld [vmem:[%s12 + $0x304] sm:$0xf]
    %v4304 = vld [vmem:[%s12 + $0x308] sm:$0xf]
    %v4305 = vld [vmem:[%s12 + $0x30c] sm:$0xf]
    %v4306 = vld [vmem:[%s12 + $0x310] sm:$0xf]
    %v4307 = vld [vmem:[%s12 + $0x314] sm:$0xf]
    %v4308 = vld [vmem:[%s12 + $0x318] sm:$0xf]
    %v4309 = vld [vmem:[%s12 + $0x31c] sm:$0xf]
    %v4310 = vld [vmem:[%s12 + $0x320] sm:$0xf]
    %v4311 = vld [vmem:[%s12 + $0x324] sm:$0xf]
    %v4312 = vld [vmem:[%s12 + $0x328] sm:$0xf]
    %v4313 = vld [vmem:[%s12 + $0x32c] sm:$0xf]
    %v4314 = vld [vmem:[%s12 + $0x330] sm:$0xf]
    %v4315 = vld [vmem:[%s12 + $0x334] sm:$0xf]
    %v4316 = vld [vmem:[%s12 + $0x338] sm:$0xf]
    %v4317 = vld [vmem:[%s12 + $0x33c] sm:$0xf]
    %v4318 = vld [vmem:[%s12 + $0x340] sm:$0xf]
    %v4319 = vld [vmem:[%s12 + $0x344] sm:$0xf]
    %v4320 = vld [vmem:[%s12 + $0x348] sm:$0xf]
    %v4321 = vld [vmem:[%s12 + $0x34c] sm:$0xf]
    %v4322 = vld [vmem:[%s12 + $0x350] sm:$0xf]
    %v4323 = vld [vmem:[%s12 + $0x354] sm:$0xf]
    %v4324 = vld [vmem:[%s12 + $0x358] sm:$0xf]
    %v4325 = vld [vmem:[%s12 + $0x35c] sm:$0xf]
    %v4326 = vld [vmem:[%s12 + $0x360] sm:$0xf]
    %v4327 = vld [vmem:[%s12 + $0x364] sm:$0xf]
    %v4328 = vld [vmem:[%s12 + $0x368] sm:$0xf]
    %v4329 = vld [vmem:[%s12 + $0x36c] sm:$0xf]
    %v4330 = vld [vmem:[%s12 + $0x370] sm:$0xf]
    %v4331 = vld [vmem:[%s12 + $0x374] sm:$0xf]
    %v4332 = vld [vmem:[%s12 + $0x378] sm:$0xf]
    %v4333 = vld [vmem:[%s12 + $0x37c] sm:$0xf]
    %v4334 = vld [vmem:[%s12 + $0x380] sm:$0xf]
    %v4335 = vld [vmem:[%s12 + $0x384] sm:$0xf]
    %v4336 = vld [vmem:[%s12 + $0x388] sm:$0xf]
    %v4337 = vld [vmem:[%s12 + $0x38c] sm:$0xf]
    %v4338 = vld [vmem:[%s12 + $0x390] sm:$0xf]
    %v4339 = vld [vmem:[%s12 + $0x394] sm:$0xf]
    %v4340 = vld [vmem:[%s12 + $0x398] sm:$0xf]
    %v4341 = vld [vmem:[%s12 + $0x39c] sm:$0xf]
    %v4342 = vld [vmem:[%s12 + $0x3a0] sm:$0xf]
    %v4343 = vld [vmem:[%s12 + $0x3a4] sm:$0xf]
    %v4344 = vld [vmem:[%s12 + $0x3a8] sm:$0xf]
    %v4345 = vld [vmem:[%s12 + $0x3ac] sm:$0xf]
    %v4346 = vld [vmem:[%s12 + $0x3b0] sm:$0xf]
    %v4347 = vld [vmem:[%s12 + $0x3b4] sm:$0xf]
    %v4348 = vld [vmem:[%s12 + $0x3b8] sm:$0xf]
    %v4349 = vld [vmem:[%s12 + $0x3bc] sm:$0xf]
    %v4350 = vld [vmem:[%s12 + $0x3c0] sm:$0xf]
    %v4351 = vld [vmem:[%s12 + $0x3c4] sm:$0xf]
    %v4352 = vld [vmem:[%s12 + $0x3c8] sm:$0xf]
    %v4353 = vld [vmem:[%s12 + $0x3cc] sm:$0xf]
    %v4354 = vld [vmem:[%s12 + $0x3d0] sm:$0xf]
    %v4355 = vld [vmem:[%s12 + $0x3d4] sm:$0xf]
    %v4356 = vld [vmem:[%s12 + $0x3d8] sm:$0xf]
    %v4357 = vld [vmem:[%s12 + $0x3dc] sm:$0xf]
    %v4358 = vld [vmem:[%s12 + $0x3e0] sm:$0xf]
    %v4359 = vld [vmem:[%s12 + $0x3e4] sm:$0xf]
    %v4360 = vld [vmem:[%s12 + $0x3e8] sm:$0xf]
    %v4361 = vld [vmem:[%s12 + $0x3ec] sm:$0xf]
    %v4362 = vld [vmem:[%s12 + $0x3f0] sm:$0xf]
    %v4363 = vld [vmem:[%s12 + $0x3f4] sm:$0xf]
    %v4364 = vld [vmem:[%s12 + $0x3f8] sm:$0xf]
    %v4365 = vld [vmem:[%s12 + $0x3fc] sm:$0xf]
    %v4366 = vld [vmem:[%s12 + $0x400] sm:$0xf]
    %v4367 = vld [vmem:[%s12 + $0x404] sm:$0xf]
    %v4368 = vld [vmem:[%s12 + $0x408] sm:$0xf]
    %v4369 = vld [vmem:[%s12 + $0x40c] sm:$0xf]
    %v4370 = vld [vmem:[%s12 + $0x410] sm:$0xf]
    %v4371 = vld [vmem:[%s12 + $0x414] sm:$0xf]
    %v4372 = vld [vmem:[%s12 + $0x418] sm:$0xf]
    %v4373 = vld [vmem:[%s12 + $0x41c] sm:$0xf]
    %v4374 = vld [vmem:[%s12 + $0x420] sm:$0xf]
    %v4375 = vld [vmem:[%s12 + $0x424] sm:$0xf]
    %v4376 = vld [vmem:[%s12 + $0x428] sm:$0xf]
    %v4377 = vld [vmem:[%s12 + $0x42c] sm:$0xf]
    %v4378 = vld [vmem:[%s12 + $0x430] sm:$0xf]
    %v4379 = vld [vmem:[%s12 + $0x434] sm:$0xf]
    %v4380 = vld [vmem:[%s12 + $0x438] sm:$0xf]
    %v4381 = vld [vmem:[%s12 + $0x43c] sm:$0xf]
    %v4382 = vld [vmem:[%s12 + $0x440] sm:$0xf]
    %v4383 = vld [vmem:[%s12 + $0x444] sm:$0xf]
    %v4384 = vld [vmem:[%s12 + $0x448] sm:$0xf]
    %v4385 = vld [vmem:[%s12 + $0x44c] sm:$0xf]
    %v4386 = vld [vmem:[%s12 + $0x450] sm:$0xf]
    %v4387 = vld [vmem:[%s12 + $0x454] sm:$0xf]
    %v4388 = vld [vmem:[%s12 + $0x458] sm:$0xf]
    %v4389 = vld [vmem:[%s12 + $0x45c] sm:$0xf]
    %v4390 = vld [vmem:[%s12 + $0x460] sm:$0xf]
    %v4391 = vld [vmem:[%s12 + $0x464] sm:$0xf]
    %v4392 = vld [vmem:[%s12 + $0x468] sm:$0xf]
    %v4393 = vld [vmem:[%s12 + $0x46c] sm:$0xf]
    %v4394 = vld [vmem:[%s12 + $0x470] sm:$0xf]
    %v4395 = vld [vmem:[%s12 + $0x474] sm:$0xf]
    %v4396 = vld [vmem:[%s12 + $0x478] sm:$0xf]
    %v4397 = vld [vmem:[%s12 + $0x47c] sm:$0xf]
    %v4398 = vld [vmem:[%s12 + $0x480] sm:$0xf]
    %v4399 = vld [vmem:[%s12 + $0x484] sm:$0xf]
    %v4400 = vld [vmem:[%s12 + $0x488] sm:$0xf]
    %v4401 = vld [vmem:[%s12 + $0x48c] sm:$0xf]
    %v4402 = vld [vmem:[%s12 + $0x490] sm:$0xf]
    %v4403 = vld [vmem:[%s12 + $0x494] sm:$0xf]
    %v4404 = vld [vmem:[%s12 + $0x498] sm:$0xf]
    %v4405 = vld [vmem:[%s12 + $0x49c] sm:$0xf]
    %v4406 = vld [vmem:[%s12 + $0x4a0] sm:$0xf]
    %v4407 = vld [vmem:[%s12 + $0x4a4] sm:$0xf]
    %v4408 = vld [vmem:[%s12 + $0x4a8] sm:$0xf]
    %v4409 = vld [vmem:[%s12 + $0x4ac] sm:$0xf]
    %v4410 = vld [vmem:[%s12 + $0x4b0] sm:$0xf]
    %v4411 = vld [vmem:[%s12 + $0x4b4] sm:$0xf]
    %v4412 = vld [vmem:[%s12 + $0x4b8] sm:$0xf]
    %v4413 = vld [vmem:[%s12 + $0x4bc] sm:$0xf]
    %v4414 = vld [vmem:[%s12 + $0x4c0] sm:$0xf]
    %v4415 = vld [vmem:[%s12 + $0x4c4] sm:$0xf]
    %v4416 = vld [vmem:[%s12 + $0x4c8] sm:$0xf]
    %v4417 = vld [vmem:[%s12 + $0x4cc] sm:$0xf]
    %v4418 = vld [vmem:[%s12 + $0x4d0] sm:$0xf]
    %v4419 = vld [vmem:[%s12 + $0x4d4] sm:$0xf]
    %v4420 = vld [vmem:[%s12 + $0x4d8] sm:$0xf]
    %v4421 = vld [vmem:[%s12 + $0x4dc] sm:$0xf]
    %v4422 = vld [vmem:[%s12 + $0x4e0] sm:$0xf]
    %v4423 = vld [vmem:[%s12 + $0x4e4] sm:$0xf]
    %v4424 = vld [vmem:[%s12 + $0x4e8] sm:$0xf]
    %v4425 = vld [vmem:[%s12 + $0x4ec] sm:$0xf]
    %v4426 = vld [vmem:[%s12 + $0x4f0] sm:$0xf]
    %v4427 = vld [vmem:[%s12 + $0x4f4] sm:$0xf]
    %v4428 = vld [vmem:[%s12 + $0x4f8] sm:$0xf]
    %v4429 = vld [vmem:[%s12 + $0x4fc] sm:$0xf]
    %v4430 = vld [vmem:[%s12 + $0x500] sm:$0xf]
    %v4431 = vld [vmem:[%s12 + $0x504] sm:$0xf]
    %v4432 = vld [vmem:[%s12 + $0x508] sm:$0xf]
    %v4433 = vld [vmem:[%s12 + $0x50c] sm:$0xf]
    %v4434 = vld [vmem:[%s12 + $0x510] sm:$0xf]
    %v4435 = vld [vmem:[%s12 + $0x514] sm:$0xf]
    %v4436 = vld [vmem:[%s12 + $0x518] sm:$0xf]
    %v4437 = vld [vmem:[%s12 + $0x51c] sm:$0xf]
    %v4438 = vld [vmem:[%s12 + $0x520] sm:$0xf]
    %v4439 = vld [vmem:[%s12 + $0x524] sm:$0xf]
    %v4440 = vld [vmem:[%s12 + $0x528] sm:$0xf]
    %v4441 = vld [vmem:[%s12 + $0x52c] sm:$0xf]
    %v4442 = vld [vmem:[%s12 + $0x530] sm:$0xf]
    %v4443 = vld [vmem:[%s12 + $0x534] sm:$0xf]
    %v4444 = vld [vmem:[%s12 + $0x538] sm:$0xf]
    %v4445 = vld [vmem:[%s12 + $0x53c] sm:$0xf]
    %v4446 = vld [vmem:[%s12 + $0x540] sm:$0xf]
    %v4447 = vld [vmem:[%s12 + $0x544] sm:$0xf]
    %v4448 = vld [vmem:[%s12 + $0x548] sm:$0xf]
    %v4449 = vld [vmem:[%s12 + $0x54c] sm:$0xf]
    %v4450 = vld [vmem:[%s12 + $0x550] sm:$0xf]
    %v4451 = vld [vmem:[%s12 + $0x554] sm:$0xf]
    %v4452 = vld [vmem:[%s12 + $0x558] sm:$0xf]
    %v4453 = vld [vmem:[%s12 + $0x55c] sm:$0xf]
    %v4454 = vld [vmem:[%s12 + $0x560] sm:$0xf]
    %v4455 = vld [vmem:[%s12 + $0x564] sm:$0xf]
    %v4456 = vld [vmem:[%s12 + $0x568] sm:$0xf]
    %v4457 = vld [vmem:[%s12 + $0x56c] sm:$0xf]
    %v4458 = vld [vmem:[%s12 + $0x570] sm:$0xf]
    %v4459 = vld [vmem:[%s12 + $0x574] sm:$0xf]
    %v4460 = vld [vmem:[%s12 + $0x578] sm:$0xf]
    %v4461 = vld [vmem:[%s12 + $0x57c] sm:$0xf]
    %v4462 = vld [vmem:[%s12 + $0x580] sm:$0xf]
    %v4463 = vld [vmem:[%s12 + $0x584] sm:$0xf]
    %v4464 = vld [vmem:[%s12 + $0x588] sm:$0xf]
    %v4465 = vld [vmem:[%s12 + $0x58c] sm:$0xf]
    %v4466 = vld [vmem:[%s12 + $0x590] sm:$0xf]
    %v4467 = vld [vmem:[%s12 + $0x594] sm:$0xf]
    %v4468 = vld [vmem:[%s12 + $0x598] sm:$0xf]
    %v4469 = vld [vmem:[%s12 + $0x59c] sm:$0xf]
    %v4470 = vld [vmem:[%s12 + $0x5a0] sm:$0xf]
    %v4471 = vld [vmem:[%s12 + $0x5a4] sm:$0xf]
    %v4472 = vld [vmem:[%s12 + $0x5a8] sm:$0xf]
    %v4473 = vld [vmem:[%s12 + $0x5ac] sm:$0xf]
    %v4474 = vld [vmem:[%s12 + $0x5b0] sm:$0xf]
    %v4475 = vld [vmem:[%s12 + $0x5b4] sm:$0xf]
    %v4476 = vld [vmem:[%s12 + $0x5b8] sm:$0xf]
    %v4477 = vld [vmem:[%s12 + $0x5bc] sm:$0xf]
    %v4478 = vld [vmem:[%s12 + $0x5c0] sm:$0xf]
    %v4479 = vld [vmem:[%s12 + $0x5c4] sm:$0xf]
    %v4480 = vld [vmem:[%s12 + $0x5c8] sm:$0xf]
    %v4481 = vld [vmem:[%s12 + $0x5cc] sm:$0xf]
    %v4482 = vld [vmem:[%s12 + $0x5d0] sm:$0xf]
    %v4483 = vld [vmem:[%s12 + $0x5d4] sm:$0xf]
    %v4484 = vld [vmem:[%s12 + $0x5d8] sm:$0xf]
    %v4485 = vld [vmem:[%s12 + $0x5dc] sm:$0xf]
    %v4486 = vld [vmem:[%s12 + $0x5e0] sm:$0xf]
    %v4487 = vld [vmem:[%s12 + $0x5e4] sm:$0xf]
    %v4488 = vld [vmem:[%s12 + $0x5e8] sm:$0xf]
    %v4489 = vld [vmem:[%s12 + $0x5ec] sm:$0xf]
    %v4490 = vld [vmem:[%s12 + $0x5f0] sm:$0xf]
    %v4491 = vld [vmem:[%s12 + $0x5f4] sm:$0xf]
    %v4492 = vld [vmem:[%s12 + $0x5f8] sm:$0xf]
    %v4493 = vld [vmem:[%s12 + $0x5fc] sm:$0xf]
    %v4494 = vld [vmem:[%s13] sm:$0x1]
    %v4496 = vperm.slane %v4494, 0
    %v4882 = vunpack.c.l.b16 %v4110
    %v4883 = vunpack.c.l.b16 %v4111
    %v4884 = vunpack.c.l.b16 %v4112
    %v4885 = vunpack.c.l.b16 %v4113
    %v4886 = vunpack.c.l.b16 %v4114
    %v4887 = vunpack.c.l.b16 %v4115
    %v4888 = vunpack.c.l.b16 %v4116
    %v4889 = vunpack.c.l.b16 %v4117
    %v4890 = vunpack.c.l.b16 %v4118
    %v4891 = vunpack.c.l.b16 %v4119
    %v4892 = vunpack.c.l.b16 %v4120
    %v4893 = vunpack.c.l.b16 %v4121
    %v4894 = vunpack.c.l.b16 %v4122
    %v4895 = vunpack.c.l.b16 %v4123
    %v4896 = vunpack.c.l.b16 %v4124
    %v4897 = vunpack.c.l.b16 %v4125
    %v4898 = vunpack.c.l.b16 %v4126
    %v4899 = vunpack.c.l.b16 %v4127
    %v4900 = vunpack.c.l.b16 %v4128
    %v4901 = vunpack.c.l.b16 %v4129
    %v4902 = vunpack.c.l.b16 %v4130
    %v4903 = vunpack.c.l.b16 %v4131
    %v4904 = vunpack.c.l.b16 %v4132
    %v4905 = vunpack.c.l.b16 %v4133
    %v4906 = vunpack.c.l.b16 %v4134
    %v4907 = vunpack.c.l.b16 %v4135
    %v4908 = vunpack.c.l.b16 %v4136
    %v4909 = vunpack.c.l.b16 %v4137
    %v4910 = vunpack.c.l.b16 %v4138
    %v4911 = vunpack.c.l.b16 %v4139
    %v4912 = vunpack.c.l.b16 %v4140
    %v4913 = vunpack.c.l.b16 %v4141
    %v4914 = vunpack.c.l.b16 %v4142
    %v4915 = vunpack.c.l.b16 %v4143
    %v4916 = vunpack.c.l.b16 %v4144
    %v4917 = vunpack.c.l.b16 %v4145
    %v4918 = vunpack.c.l.b16 %v4146
    %v4919 = vunpack.c.l.b16 %v4147
    %v4920 = vunpack.c.l.b16 %v4148
    %v4921 = vunpack.c.l.b16 %v4149
    %v4922 = vunpack.c.l.b16 %v4150
    %v4923 = vunpack.c.l.b16 %v4151
    %v4924 = vunpack.c.l.b16 %v4152
    %v4925 = vunpack.c.l.b16 %v4153
    %v4926 = vunpack.c.l.b16 %v4154
    %v4927 = vunpack.c.l.b16 %v4155
    %v4928 = vunpack.c.l.b16 %v4156
    %v4929 = vunpack.c.l.b16 %v4157
    %v4930 = vunpack.c.l.b16 %v4158
    %v4931 = vunpack.c.l.b16 %v4159
    %v4932 = vunpack.c.l.b16 %v4160
    %v4933 = vunpack.c.l.b16 %v4161
    %v4934 = vunpack.c.l.b16 %v4162
    %v4935 = vunpack.c.l.b16 %v4163
    %v4936 = vunpack.c.l.b16 %v4164
    %v4937 = vunpack.c.l.b16 %v4165
    %v4938 = vunpack.c.l.b16 %v4166
    %v4939 = vunpack.c.l.b16 %v4167
    %v4940 = vunpack.c.l.b16 %v4168
    %v4941 = vunpack.c.l.b16 %v4169
    %v4942 = vunpack.c.l.b16 %v4170
    %v4943 = vunpack.c.l.b16 %v4171
    %v4944 = vunpack.c.l.b16 %v4172
    %v4945 = vunpack.c.l.b16 %v4173
    %v4946 = vunpack.c.l.b16 %v4174
    %v4947 = vunpack.c.l.b16 %v4175
    %v4948 = vunpack.c.l.b16 %v4176
    %v4949 = vunpack.c.l.b16 %v4177
    %v4950 = vunpack.c.l.b16 %v4178
    %v4951 = vunpack.c.l.b16 %v4179
    %v4952 = vunpack.c.l.b16 %v4180
    %v4953 = vunpack.c.l.b16 %v4181
    %v4954 = vunpack.c.l.b16 %v4182
    %v4955 = vunpack.c.l.b16 %v4183
    %v4956 = vunpack.c.l.b16 %v4184
    %v4957 = vunpack.c.l.b16 %v4185
    %v4958 = vunpack.c.l.b16 %v4186
    %v4959 = vunpack.c.l.b16 %v4187
    %v4960 = vunpack.c.l.b16 %v4188
    %v4961 = vunpack.c.l.b16 %v4189
    %v4962 = vunpack.c.l.b16 %v4190
    %v4963 = vunpack.c.l.b16 %v4191
    %v4964 = vunpack.c.l.b16 %v4192
    %v4965 = vunpack.c.l.b16 %v4193
    %v4966 = vunpack.c.l.b16 %v4194
    %v4967 = vunpack.c.l.b16 %v4195
    %v4968 = vunpack.c.l.b16 %v4196
    %v4969 = vunpack.c.l.b16 %v4197
    %v4970 = vunpack.c.l.b16 %v4198
    %v4971 = vunpack.c.l.b16 %v4199
    %v4972 = vunpack.c.l.b16 %v4200
    %v4973 = vunpack.c.l.b16 %v4201
    %v4974 = vunpack.c.l.b16 %v4202
    %v4975 = vunpack.c.l.b16 %v4203
    %v4976 = vunpack.c.l.b16 %v4204
    %v4977 = vunpack.c.l.b16 %v4205
    %v4978 = vunpack.c.l.b16 %v4206
    %v4979 = vunpack.c.l.b16 %v4207
    %v4980 = vunpack.c.l.b16 %v4208
    %v4981 = vunpack.c.l.b16 %v4209
    %v4982 = vunpack.c.l.b16 %v4210
    %v4983 = vunpack.c.l.b16 %v4211
    %v4984 = vunpack.c.l.b16 %v4212
    %v4985 = vunpack.c.l.b16 %v4213
    %v4986 = vunpack.c.l.b16 %v4214
    %v4987 = vunpack.c.l.b16 %v4215
    %v4988 = vunpack.c.l.b16 %v4216
    %v4989 = vunpack.c.l.b16 %v4217
    %v4990 = vunpack.c.l.b16 %v4218
    %v4991 = vunpack.c.l.b16 %v4219
    %v4992 = vunpack.c.l.b16 %v4220
    %v4993 = vunpack.c.l.b16 %v4221
    %v4994 = vunpack.c.l.b16 %v4222
    %v4995 = vunpack.c.l.b16 %v4223
    %v4996 = vunpack.c.l.b16 %v4224
    %v4997 = vunpack.c.l.b16 %v4225
    %v4998 = vunpack.c.l.b16 %v4226
    %v4999 = vunpack.c.l.b16 %v4227
    %v5000 = vunpack.c.l.b16 %v4228
    %v5001 = vunpack.c.l.b16 %v4229
    %v5002 = vunpack.c.l.b16 %v4230
    %v5003 = vunpack.c.l.b16 %v4231
    %v5004 = vunpack.c.l.b16 %v4232
    %v5005 = vunpack.c.l.b16 %v4233
    %v5006 = vunpack.c.l.b16 %v4234
    %v5007 = vunpack.c.l.b16 %v4235
    %v5008 = vunpack.c.l.b16 %v4236
    %v5009 = vunpack.c.l.b16 %v4237
    %v5010 = vunpack.c.l.b16 %v4238
    %v5011 = vunpack.c.l.b16 %v4239
    %v5012 = vunpack.c.l.b16 %v4240
    %v5013 = vunpack.c.l.b16 %v4241
    %v5014 = vunpack.c.l.b16 %v4242
    %v5015 = vunpack.c.l.b16 %v4243
    %v5016 = vunpack.c.l.b16 %v4244
    %v5017 = vunpack.c.l.b16 %v4245
    %v5018 = vunpack.c.l.b16 %v4246
    %v5019 = vunpack.c.l.b16 %v4247
    %v5020 = vunpack.c.l.b16 %v4248
    %v5021 = vunpack.c.l.b16 %v4249
    %v5022 = vunpack.c.l.b16 %v4250
    %v5023 = vunpack.c.l.b16 %v4251
    %v5024 = vunpack.c.l.b16 %v4252
    %v5025 = vunpack.c.l.b16 %v4253
    %v5026 = vunpack.c.l.b16 %v4254
    %v5027 = vunpack.c.l.b16 %v4255
    %v5028 = vunpack.c.l.b16 %v4256
    %v5029 = vunpack.c.l.b16 %v4257
    %v5030 = vunpack.c.l.b16 %v4258
    %v5031 = vunpack.c.l.b16 %v4259
    %v5032 = vunpack.c.l.b16 %v4260
    %v5033 = vunpack.c.l.b16 %v4261
    %v5034 = vunpack.c.l.b16 %v4262
    %v5035 = vunpack.c.l.b16 %v4263
    %v5036 = vunpack.c.l.b16 %v4264
    %v5037 = vunpack.c.l.b16 %v4265
    %v5038 = vunpack.c.l.b16 %v4266
    %v5039 = vunpack.c.l.b16 %v4267
    %v5040 = vunpack.c.l.b16 %v4268
    %v5041 = vunpack.c.l.b16 %v4269
    %v5042 = vunpack.c.l.b16 %v4270
    %v5043 = vunpack.c.l.b16 %v4271
    %v5044 = vunpack.c.l.b16 %v4272
    %v5045 = vunpack.c.l.b16 %v4273
    %v5046 = vunpack.c.l.b16 %v4274
    %v5047 = vunpack.c.l.b16 %v4275
    %v5048 = vunpack.c.l.b16 %v4276
    %v5049 = vunpack.c.l.b16 %v4277
    %v5050 = vunpack.c.l.b16 %v4278
    %v5051 = vunpack.c.l.b16 %v4279
    %v5052 = vunpack.c.l.b16 %v4280
    %v5053 = vunpack.c.l.b16 %v4281
    %v5054 = vunpack.c.l.b16 %v4282
    %v5055 = vunpack.c.l.b16 %v4283
    %v5056 = vunpack.c.l.b16 %v4284
    %v5057 = vunpack.c.l.b16 %v4285
    %v5058 = vunpack.c.l.b16 %v4286
    %v5059 = vunpack.c.l.b16 %v4287
    %v5060 = vunpack.c.l.b16 %v4288
    %v5061 = vunpack.c.l.b16 %v4289
    %v5062 = vunpack.c.l.b16 %v4290
    %v5063 = vunpack.c.l.b16 %v4291
    %v5064 = vunpack.c.l.b16 %v4292
    %v5065 = vunpack.c.l.b16 %v4293
    %v5066 = vunpack.c.l.b16 %v4294
    %v5067 = vunpack.c.l.b16 %v4295
    %v5068 = vunpack.c.l.b16 %v4296
    %v5069 = vunpack.c.l.b16 %v4297
    %v5070 = vunpack.c.l.b16 %v4298
    %v5071 = vunpack.c.l.b16 %v4299
    %v5072 = vunpack.c.l.b16 %v4300
    %v5073 = vunpack.c.l.b16 %v4301
    %v5074 = vunpack.c.l.b16 %v4302
    %v5075 = vunpack.c.l.b16 %v4303
    %v5076 = vunpack.c.l.b16 %v4304
    %v5077 = vunpack.c.l.b16 %v4305
    %v5078 = vunpack.c.l.b16 %v4306
    %v5079 = vunpack.c.l.b16 %v4307
    %v5080 = vunpack.c.l.b16 %v4308
    %v5081 = vunpack.c.l.b16 %v4309
    %v5082 = vunpack.c.l.b16 %v4310
    %v5083 = vunpack.c.l.b16 %v4311
    %v5084 = vunpack.c.l.b16 %v4312
    %v5085 = vunpack.c.l.b16 %v4313
    %v5086 = vunpack.c.l.b16 %v4314
    %v5087 = vunpack.c.l.b16 %v4315
    %v5088 = vunpack.c.l.b16 %v4316
    %v5089 = vunpack.c.l.b16 %v4317
    %v5090 = vunpack.c.l.b16 %v4318
    %v5091 = vunpack.c.l.b16 %v4319
    %v5092 = vunpack.c.l.b16 %v4320
    %v5093 = vunpack.c.l.b16 %v4321
    %v5094 = vunpack.c.l.b16 %v4322
    %v5095 = vunpack.c.l.b16 %v4323
    %v5096 = vunpack.c.l.b16 %v4324
    %v5097 = vunpack.c.l.b16 %v4325
    %v5098 = vunpack.c.l.b16 %v4326
    %v5099 = vunpack.c.l.b16 %v4327
    %v5100 = vunpack.c.l.b16 %v4328
    %v5101 = vunpack.c.l.b16 %v4329
    %v5102 = vunpack.c.l.b16 %v4330
    %v5103 = vunpack.c.l.b16 %v4331
    %v5104 = vunpack.c.l.b16 %v4332
    %v5105 = vunpack.c.l.b16 %v4333
    %v5106 = vunpack.c.l.b16 %v4334
    %v5107 = vunpack.c.l.b16 %v4335
    %v5108 = vunpack.c.l.b16 %v4336
    %v5109 = vunpack.c.l.b16 %v4337
    %v5110 = vunpack.c.l.b16 %v4338
    %v5111 = vunpack.c.l.b16 %v4339
    %v5112 = vunpack.c.l.b16 %v4340
    %v5113 = vunpack.c.l.b16 %v4341
    %v5114 = vunpack.c.l.b16 %v4342
    %v5115 = vunpack.c.l.b16 %v4343
    %v5116 = vunpack.c.l.b16 %v4344
    %v5117 = vunpack.c.l.b16 %v4345
    %v5118 = vunpack.c.l.b16 %v4346
    %v5119 = vunpack.c.l.b16 %v4347
    %v5120 = vunpack.c.l.b16 %v4348
    %v5121 = vunpack.c.l.b16 %v4349
    %v5122 = vunpack.c.l.b16 %v4350
    %v5123 = vunpack.c.l.b16 %v4351
    %v5124 = vunpack.c.l.b16 %v4352
    %v5125 = vunpack.c.l.b16 %v4353
    %v5126 = vunpack.c.l.b16 %v4354
    %v5127 = vunpack.c.l.b16 %v4355
    %v5128 = vunpack.c.l.b16 %v4356
    %v5129 = vunpack.c.l.b16 %v4357
    %v5130 = vunpack.c.l.b16 %v4358
    %v5131 = vunpack.c.l.b16 %v4359
    %v5132 = vunpack.c.l.b16 %v4360
    %v5133 = vunpack.c.l.b16 %v4361
    %v5134 = vunpack.c.l.b16 %v4362
    %v5135 = vunpack.c.l.b16 %v4363
    %v5136 = vunpack.c.l.b16 %v4364
    %v5137 = vunpack.c.l.b16 %v4365
    %v5138 = vunpack.c.l.b16 %v4366
    %v5139 = vunpack.c.l.b16 %v4367
    %v5140 = vunpack.c.l.b16 %v4368
    %v5141 = vunpack.c.l.b16 %v4369
    %v5142 = vunpack.c.l.b16 %v4370
    %v5143 = vunpack.c.l.b16 %v4371
    %v5144 = vunpack.c.l.b16 %v4372
    %v5145 = vunpack.c.l.b16 %v4373
    %v5146 = vunpack.c.l.b16 %v4374
    %v5147 = vunpack.c.l.b16 %v4375
    %v5148 = vunpack.c.l.b16 %v4376
    %v5149 = vunpack.c.l.b16 %v4377
    %v5150 = vunpack.c.l.b16 %v4378
    %v5151 = vunpack.c.l.b16 %v4379
    %v5152 = vunpack.c.l.b16 %v4380
    %v5153 = vunpack.c.l.b16 %v4381
    %v5154 = vunpack.c.l.b16 %v4382
    %v5155 = vunpack.c.l.b16 %v4383
    %v5156 = vunpack.c.l.b16 %v4384
    %v5157 = vunpack.c.l.b16 %v4385
    %v5158 = vunpack.c.l.b16 %v4386
    %v5159 = vunpack.c.l.b16 %v4387
    %v5160 = vunpack.c.l.b16 %v4388
    %v5161 = vunpack.c.l.b16 %v4389
    %v5162 = vunpack.c.l.b16 %v4390
    %v5163 = vunpack.c.l.b16 %v4391
    %v5164 = vunpack.c.l.b16 %v4392
    %v5165 = vunpack.c.l.b16 %v4393
    %v5166 = vunpack.c.l.b16 %v4394
    %v5167 = vunpack.c.l.b16 %v4395
    %v5168 = vunpack.c.l.b16 %v4396
    %v5169 = vunpack.c.l.b16 %v4397
    %v5170 = vunpack.c.l.b16 %v4398
    %v5171 = vunpack.c.l.b16 %v4399
    %v5172 = vunpack.c.l.b16 %v4400
    %v5173 = vunpack.c.l.b16 %v4401
    %v5174 = vunpack.c.l.b16 %v4402
    %v5175 = vunpack.c.l.b16 %v4403
    %v5176 = vunpack.c.l.b16 %v4404
    %v5177 = vunpack.c.l.b16 %v4405
    %v5178 = vunpack.c.l.b16 %v4406
    %v5179 = vunpack.c.l.b16 %v4407
    %v5180 = vunpack.c.l.b16 %v4408
    %v5181 = vunpack.c.l.b16 %v4409
    %v5182 = vunpack.c.l.b16 %v4410
    %v5183 = vunpack.c.l.b16 %v4411
    %v5184 = vunpack.c.l.b16 %v4412
    %v5185 = vunpack.c.l.b16 %v4413
    %v5186 = vunpack.c.l.b16 %v4414
    %v5187 = vunpack.c.l.b16 %v4415
    %v5188 = vunpack.c.l.b16 %v4416
    %v5189 = vunpack.c.l.b16 %v4417
    %v5190 = vunpack.c.l.b16 %v4418
    %v5191 = vunpack.c.l.b16 %v4419
    %v5192 = vunpack.c.l.b16 %v4420
    %v5193 = vunpack.c.l.b16 %v4421
    %v5194 = vunpack.c.l.b16 %v4422
    %v5195 = vunpack.c.l.b16 %v4423
    %v5196 = vunpack.c.l.b16 %v4424
    %v5197 = vunpack.c.l.b16 %v4425
    %v5198 = vunpack.c.l.b16 %v4426
    %v5199 = vunpack.c.l.b16 %v4427
    %v5200 = vunpack.c.l.b16 %v4428
    %v5201 = vunpack.c.l.b16 %v4429
    %v5202 = vunpack.c.l.b16 %v4430
    %v5203 = vunpack.c.l.b16 %v4431
    %v5204 = vunpack.c.l.b16 %v4432
    %v5205 = vunpack.c.l.b16 %v4433
    %v5206 = vunpack.c.l.b16 %v4434
    %v5207 = vunpack.c.l.b16 %v4435
    %v5208 = vunpack.c.l.b16 %v4436
    %v5209 = vunpack.c.l.b16 %v4437
    %v5210 = vunpack.c.l.b16 %v4438
    %v5211 = vunpack.c.l.b16 %v4439
    %v5212 = vunpack.c.l.b16 %v4440
    %v5213 = vunpack.c.l.b16 %v4441
    %v5214 = vunpack.c.l.b16 %v4442
    %v5215 = vunpack.c.l.b16 %v4443
    %v5216 = vunpack.c.l.b16 %v4444
    %v5217 = vunpack.c.l.b16 %v4445
    %v5218 = vunpack.c.l.b16 %v4446
    %v5219 = vunpack.c.l.b16 %v4447
    %v5220 = vunpack.c.l.b16 %v4448
    %v5221 = vunpack.c.l.b16 %v4449
    %v5222 = vunpack.c.l.b16 %v4450
    %v5223 = vunpack.c.l.b16 %v4451
    %v5224 = vunpack.c.l.b16 %v4452
    %v5225 = vunpack.c.l.b16 %v4453
    %v5226 = vunpack.c.l.b16 %v4454
    %v5227 = vunpack.c.l.b16 %v4455
    %v5228 = vunpack.c.l.b16 %v4456
    %v5229 = vunpack.c.l.b16 %v4457
    %v5230 = vunpack.c.l.b16 %v4458
    %v5231 = vunpack.c.l.b16 %v4459
    %v5232 = vunpack.c.l.b16 %v4460
    %v5233 = vunpack.c.l.b16 %v4461
    %v5234 = vunpack.c.l.b16 %v4462
    %v5235 = vunpack.c.l.b16 %v4463
    %v5236 = vunpack.c.l.b16 %v4464
    %v5237 = vunpack.c.l.b16 %v4465
    %v5238 = vunpack.c.l.b16 %v4466
    %v5239 = vunpack.c.l.b16 %v4467
    %v5240 = vunpack.c.l.b16 %v4468
    %v5241 = vunpack.c.l.b16 %v4469
    %v5242 = vunpack.c.l.b16 %v4470
    %v5243 = vunpack.c.l.b16 %v4471
    %v5244 = vunpack.c.l.b16 %v4472
    %v5245 = vunpack.c.l.b16 %v4473
    %v5246 = vunpack.c.l.b16 %v4474
    %v5247 = vunpack.c.l.b16 %v4475
    %v5248 = vunpack.c.l.b16 %v4476
    %v5249 = vunpack.c.l.b16 %v4477
    %v5250 = vunpack.c.l.b16 %v4478
    %v5251 = vunpack.c.l.b16 %v4479
    %v5252 = vunpack.c.l.b16 %v4480
    %v5253 = vunpack.c.l.b16 %v4481
    %v5254 = vunpack.c.l.b16 %v4482
    %v5255 = vunpack.c.l.b16 %v4483
    %v5256 = vunpack.c.l.b16 %v4484
    %v5257 = vunpack.c.l.b16 %v4485
    %v5258 = vunpack.c.l.b16 %v4486
    %v5259 = vunpack.c.l.b16 %v4487
    %v5260 = vunpack.c.l.b16 %v4488
    %v5261 = vunpack.c.l.b16 %v4489
    %v5262 = vunpack.c.l.b16 %v4490
    %v5263 = vunpack.c.l.b16 %v4491
    %v5264 = vunpack.c.l.b16 %v4492
    %v5265 = vunpack.c.l.b16 %v4493
    %v5266 = vpack.c.b16 %v4883, %v4882
    %v5267 = vpack.c.b16 %v4885, %v4884
    %v5268 = vpack.c.b16 %v4887, %v4886
    %v5269 = vpack.c.b16 %v4889, %v4888
    %v5270 = vpack.c.b16 %v4891, %v4890
    %v5271 = vpack.c.b16 %v4893, %v4892
    %v5272 = vpack.c.b16 %v4895, %v4894
    %v5273 = vpack.c.b16 %v4897, %v4896
    %v5274 = vpack.c.b16 %v4899, %v4898
    %v5275 = vpack.c.b16 %v4901, %v4900
    %v5276 = vpack.c.b16 %v4903, %v4902
    %v5277 = vpack.c.b16 %v4905, %v4904
    %v5278 = vpack.c.b16 %v4907, %v4906
    %v5279 = vpack.c.b16 %v4909, %v4908
    %v5280 = vpack.c.b16 %v4911, %v4910
    %v5281 = vpack.c.b16 %v4913, %v4912
    %v5282 = vpack.c.b16 %v4915, %v4914
    %v5283 = vpack.c.b16 %v4917, %v4916
    %v5284 = vpack.c.b16 %v4919, %v4918
    %v5285 = vpack.c.b16 %v4921, %v4920
    %v5286 = vpack.c.b16 %v4923, %v4922
    %v5287 = vpack.c.b16 %v4925, %v4924
    %v5288 = vpack.c.b16 %v4927, %v4926
    %v5289 = vpack.c.b16 %v4929, %v4928
    %v5290 = vpack.c.b16 %v4931, %v4930
    %v5291 = vpack.c.b16 %v4933, %v4932
    %v5292 = vpack.c.b16 %v4935, %v4934
    %v5293 = vpack.c.b16 %v4937, %v4936
    %v5294 = vpack.c.b16 %v4939, %v4938
    %v5295 = vpack.c.b16 %v4941, %v4940
    %v5296 = vpack.c.b16 %v4943, %v4942
    %v5297 = vpack.c.b16 %v4945, %v4944
    %v5298 = vpack.c.b16 %v4947, %v4946
    %v5299 = vpack.c.b16 %v4949, %v4948
    %v5300 = vpack.c.b16 %v4951, %v4950
    %v5301 = vpack.c.b16 %v4953, %v4952
    %v5302 = vpack.c.b16 %v4955, %v4954
    %v5303 = vpack.c.b16 %v4957, %v4956
    %v5304 = vpack.c.b16 %v4959, %v4958
    %v5305 = vpack.c.b16 %v4961, %v4960
    %v5306 = vpack.c.b16 %v4963, %v4962
    %v5307 = vpack.c.b16 %v4965, %v4964
    %v5308 = vpack.c.b16 %v4967, %v4966
    %v5309 = vpack.c.b16 %v4969, %v4968
    %v5310 = vpack.c.b16 %v4971, %v4970
    %v5311 = vpack.c.b16 %v4973, %v4972
    %v5312 = vpack.c.b16 %v4975, %v4974
    %v5313 = vpack.c.b16 %v4977, %v4976
    %v5314 = vpack.c.b16 %v4979, %v4978
    %v5315 = vpack.c.b16 %v4981, %v4980
    %v5316 = vpack.c.b16 %v4983, %v4982
    %v5317 = vpack.c.b16 %v4985, %v4984
    %v5318 = vpack.c.b16 %v4987, %v4986
    %v5319 = vpack.c.b16 %v4989, %v4988
    %v5320 = vpack.c.b16 %v4991, %v4990
    %v5321 = vpack.c.b16 %v4993, %v4992
    %v5322 = vpack.c.b16 %v4995, %v4994
    %v5323 = vpack.c.b16 %v4997, %v4996
    %v5324 = vpack.c.b16 %v4999, %v4998
    %v5325 = vpack.c.b16 %v5001, %v5000
    %v5326 = vpack.c.b16 %v5003, %v5002
    %v5327 = vpack.c.b16 %v5005, %v5004
    %v5328 = vpack.c.b16 %v5007, %v5006
    %v5329 = vpack.c.b16 %v5009, %v5008
    %v5330 = vpack.c.b16 %v5011, %v5010
    %v5331 = vpack.c.b16 %v5013, %v5012
    %v5332 = vpack.c.b16 %v5015, %v5014
    %v5333 = vpack.c.b16 %v5017, %v5016
    %v5334 = vpack.c.b16 %v5019, %v5018
    %v5335 = vpack.c.b16 %v5021, %v5020
    %v5336 = vpack.c.b16 %v5023, %v5022
    %v5337 = vpack.c.b16 %v5025, %v5024
    %v5338 = vpack.c.b16 %v5027, %v5026
    %v5339 = vpack.c.b16 %v5029, %v5028
    %v5340 = vpack.c.b16 %v5031, %v5030
    %v5341 = vpack.c.b16 %v5033, %v5032
    %v5342 = vpack.c.b16 %v5035, %v5034
    %v5343 = vpack.c.b16 %v5037, %v5036
    %v5344 = vpack.c.b16 %v5039, %v5038
    %v5345 = vpack.c.b16 %v5041, %v5040
    %v5346 = vpack.c.b16 %v5043, %v5042
    %v5347 = vpack.c.b16 %v5045, %v5044
    %v5348 = vpack.c.b16 %v5047, %v5046
    %v5349 = vpack.c.b16 %v5049, %v5048
    %v5350 = vpack.c.b16 %v5051, %v5050
    %v5351 = vpack.c.b16 %v5053, %v5052
    %v5352 = vpack.c.b16 %v5055, %v5054
    %v5353 = vpack.c.b16 %v5057, %v5056
    %v5354 = vpack.c.b16 %v5059, %v5058
    %v5355 = vpack.c.b16 %v5061, %v5060
    %v5356 = vpack.c.b16 %v5063, %v5062
    %v5357 = vpack.c.b16 %v5065, %v5064
    %v5358 = vpack.c.b16 %v5067, %v5066
    %v5359 = vpack.c.b16 %v5069, %v5068
    %v5360 = vpack.c.b16 %v5071, %v5070
    %v5361 = vpack.c.b16 %v5073, %v5072
    %v5362 = vpack.c.b16 %v5075, %v5074
    %v5363 = vpack.c.b16 %v5077, %v5076
    %v5364 = vpack.c.b16 %v5079, %v5078
    %v5365 = vpack.c.b16 %v5081, %v5080
    %v5366 = vpack.c.b16 %v5083, %v5082
    %v5367 = vpack.c.b16 %v5085, %v5084
    %v5368 = vpack.c.b16 %v5087, %v5086
    %v5369 = vpack.c.b16 %v5089, %v5088
    %v5370 = vpack.c.b16 %v5091, %v5090
    %v5371 = vpack.c.b16 %v5093, %v5092
    %v5372 = vpack.c.b16 %v5095, %v5094
    %v5373 = vpack.c.b16 %v5097, %v5096
    %v5374 = vpack.c.b16 %v5099, %v5098
    %v5375 = vpack.c.b16 %v5101, %v5100
    %v5376 = vpack.c.b16 %v5103, %v5102
    %v5377 = vpack.c.b16 %v5105, %v5104
    %v5378 = vpack.c.b16 %v5107, %v5106
    %v5379 = vpack.c.b16 %v5109, %v5108
    %v5380 = vpack.c.b16 %v5111, %v5110
    %v5381 = vpack.c.b16 %v5113, %v5112
    %v5382 = vpack.c.b16 %v5115, %v5114
    %v5383 = vpack.c.b16 %v5117, %v5116
    %v5384 = vpack.c.b16 %v5119, %v5118
    %v5385 = vpack.c.b16 %v5121, %v5120
    %v5386 = vpack.c.b16 %v5123, %v5122
    %v5387 = vpack.c.b16 %v5125, %v5124
    %v5388 = vpack.c.b16 %v5127, %v5126
    %v5389 = vpack.c.b16 %v5129, %v5128
    %v5390 = vpack.c.b16 %v5131, %v5130
    %v5391 = vpack.c.b16 %v5133, %v5132
    %v5392 = vpack.c.b16 %v5135, %v5134
    %v5393 = vpack.c.b16 %v5137, %v5136
    %v5394 = vpack.c.b16 %v5139, %v5138
    %v5395 = vpack.c.b16 %v5141, %v5140
    %v5396 = vpack.c.b16 %v5143, %v5142
    %v5397 = vpack.c.b16 %v5145, %v5144
    %v5398 = vpack.c.b16 %v5147, %v5146
    %v5399 = vpack.c.b16 %v5149, %v5148
    %v5400 = vpack.c.b16 %v5151, %v5150
    %v5401 = vpack.c.b16 %v5153, %v5152
    %v5402 = vpack.c.b16 %v5155, %v5154
    %v5403 = vpack.c.b16 %v5157, %v5156
    %v5404 = vpack.c.b16 %v5159, %v5158
    %v5405 = vpack.c.b16 %v5161, %v5160
    %v5406 = vpack.c.b16 %v5163, %v5162
    %v5407 = vpack.c.b16 %v5165, %v5164
    %v5408 = vpack.c.b16 %v5167, %v5166
    %v5409 = vpack.c.b16 %v5169, %v5168
    %v5410 = vpack.c.b16 %v5171, %v5170
    %v5411 = vpack.c.b16 %v5173, %v5172
    %v5412 = vpack.c.b16 %v5175, %v5174
    %v5413 = vpack.c.b16 %v5177, %v5176
    %v5414 = vpack.c.b16 %v5179, %v5178
    %v5415 = vpack.c.b16 %v5181, %v5180
    %v5416 = vpack.c.b16 %v5183, %v5182
    %v5417 = vpack.c.b16 %v5185, %v5184
    %v5418 = vpack.c.b16 %v5187, %v5186
    %v5419 = vpack.c.b16 %v5189, %v5188
    %v5420 = vpack.c.b16 %v5191, %v5190
    %v5421 = vpack.c.b16 %v5193, %v5192
    %v5422 = vpack.c.b16 %v5195, %v5194
    %v5423 = vpack.c.b16 %v5197, %v5196
    %v5424 = vpack.c.b16 %v5199, %v5198
    %v5425 = vpack.c.b16 %v5201, %v5200
    %v5426 = vpack.c.b16 %v5203, %v5202
    %v5427 = vpack.c.b16 %v5205, %v5204
    %v5428 = vpack.c.b16 %v5207, %v5206
    %v5429 = vpack.c.b16 %v5209, %v5208
    %v5430 = vpack.c.b16 %v5211, %v5210
    %v5431 = vpack.c.b16 %v5213, %v5212
    %v5432 = vpack.c.b16 %v5215, %v5214
    %v5433 = vpack.c.b16 %v5217, %v5216
    %v5434 = vpack.c.b16 %v5219, %v5218
    %v5435 = vpack.c.b16 %v5221, %v5220
    %v5436 = vpack.c.b16 %v5223, %v5222
    %v5437 = vpack.c.b16 %v5225, %v5224
    %v5438 = vpack.c.b16 %v5227, %v5226
    %v5439 = vpack.c.b16 %v5229, %v5228
    %v5440 = vpack.c.b16 %v5231, %v5230
    %v5441 = vpack.c.b16 %v5233, %v5232
    %v5442 = vpack.c.b16 %v5235, %v5234
    %v5443 = vpack.c.b16 %v5237, %v5236
    %v5444 = vpack.c.b16 %v5239, %v5238
    %v5445 = vpack.c.b16 %v5241, %v5240
    %v5446 = vpack.c.b16 %v5243, %v5242
    %v5447 = vpack.c.b16 %v5245, %v5244
    %v5448 = vpack.c.b16 %v5247, %v5246
    %v5449 = vpack.c.b16 %v5249, %v5248
    %v5450 = vpack.c.b16 %v5251, %v5250
    %v5451 = vpack.c.b16 %v5253, %v5252
    %v5452 = vpack.c.b16 %v5255, %v5254
    %v5453 = vpack.c.b16 %v5257, %v5256
    %v5454 = vpack.c.b16 %v5259, %v5258
    %v5455 = vpack.c.b16 %v5261, %v5260
    %v5456 = vpack.c.b16 %v5263, %v5262
    %v5457 = vpack.c.b16 %v5265, %v5264
    %5650 = vmatpush.bf16.msra.mxu0 %v5273
    %5651 = vmatpush.bf16.msra.mxu0 %v5272
    %5652 = vmatpush.bf16.msra.mxu0 %v5271
    %5653 = vmatpush.bf16.msra.mxu0 %v5270
    %5654 = vmatpush.bf16.msra.mxu0 %v5269
    %5655 = vmatpush.bf16.msra.mxu0 %v5268
    %5656 = vmatpush.bf16.msra.mxu0 %v5267
    %5657 = vmatpush.bf16.msra.mxu0 %v5266
    %5658 = vmatmul.bf16.gmra.mxu0 %v4086
    %v5659 = vpop.f32.mrf.mxu0
    %v5660 = vadd.f32 %v4496, %v5659
    %v5661 = vpop.f32.mrf.mxu0
    %v5662 = vadd.f32 %v4496, %v5661
    %5663 = vdwg.mxu0
    %5664 = vmatpush.bf16.msra.mxu0 %v5281
    %5665 = vmatpush.bf16.msra.mxu0 %v5280
    %5666 = vmatpush.bf16.msra.mxu0 %v5279
    %5667 = vmatpush.bf16.msra.mxu0 %v5278
    %5668 = vmatpush.bf16.msra.mxu0 %v5277
    %5669 = vmatpush.bf16.msra.mxu0 %v5276
    %5670 = vmatpush.bf16.msra.mxu0 %v5275
    %5671 = vmatpush.bf16.msra.mxu0 %v5274
    %5672 = vmatmul.bf16.gmra.mxu0 %v4087
    %v5673 = vpop.f32.mrf.mxu0
    %v5674 = vadd.f32 %v5660, %v5673
    %v5675 = vpop.f32.mrf.mxu0
    %v5676 = vadd.f32 %v5662, %v5675
    %5677 = vdwg.mxu0
    %5678 = vmatpush.bf16.msra.mxu0 %v5289
    %5679 = vmatpush.bf16.msra.mxu0 %v5288
    %5680 = vmatpush.bf16.msra.mxu0 %v5287
    %5681 = vmatpush.bf16.msra.mxu0 %v5286
    %5682 = vmatpush.bf16.msra.mxu0 %v5285
    %5683 = vmatpush.bf16.msra.mxu0 %v5284
    %5684 = vmatpush.bf16.msra.mxu0 %v5283
    %5685 = vmatpush.bf16.msra.mxu0 %v5282
    %5686 = vmatmul.bf16.gmra.mxu0 %v4088
    %v5687 = vpop.f32.mrf.mxu0
    %v5688 = vadd.f32 %v5674, %v5687
    %v5689 = vpop.f32.mrf.mxu0
    %v5690 = vadd.f32 %v5676, %v5689
    %5691 = vdwg.mxu0
    %5692 = vmatpush.bf16.msra.mxu0 %v5297
    %5693 = vmatpush.bf16.msra.mxu0 %v5296
    %5694 = vmatpush.bf16.msra.mxu0 %v5295
    %5695 = vmatpush.bf16.msra.mxu0 %v5294
    %5696 = vmatpush.bf16.msra.mxu0 %v5293
    %5697 = vmatpush.bf16.msra.mxu0 %v5292
    %5698 = vmatpush.bf16.msra.mxu0 %v5291
    %5699 = vmatpush.bf16.msra.mxu0 %v5290
    %5700 = vmatmul.bf16.gmra.mxu0 %v4089
    %v5701 = vpop.f32.mrf.mxu0
    %v5702 = vadd.f32 %v5688, %v5701
    %v5703 = vpop.f32.mrf.mxu0
    %v5704 = vadd.f32 %v5690, %v5703
    %5705 = vdwg.mxu0
    %5706 = vmatpush.bf16.msra.mxu0 %v5305
    %5707 = vmatpush.bf16.msra.mxu0 %v5304
    %5708 = vmatpush.bf16.msra.mxu0 %v5303
    %5709 = vmatpush.bf16.msra.mxu0 %v5302
    %5710 = vmatpush.bf16.msra.mxu0 %v5301
    %5711 = vmatpush.bf16.msra.mxu0 %v5300
    %5712 = vmatpush.bf16.msra.mxu0 %v5299
    %5713 = vmatpush.bf16.msra.mxu0 %v5298
    %5714 = vmatmul.bf16.gmra.mxu0 %v4090
    %v5715 = vpop.f32.mrf.mxu0
    %v5716 = vadd.f32 %v5702, %v5715
    %v5717 = vpop.f32.mrf.mxu0
    %v5718 = vadd.f32 %v5704, %v5717
    %5719 = vdwg.mxu0
    %5720 = vmatpush.bf16.msra.mxu0 %v5313
    %5721 = vmatpush.bf16.msra.mxu0 %v5312
    %5722 = vmatpush.bf16.msra.mxu0 %v5311
    %5723 = vmatpush.bf16.msra.mxu0 %v5310
    %5724 = vmatpush.bf16.msra.mxu0 %v5309
    %5725 = vmatpush.bf16.msra.mxu0 %v5308
    %5726 = vmatpush.bf16.msra.mxu0 %v5307
    %5727 = vmatpush.bf16.msra.mxu0 %v5306
    %5728 = vmatmul.bf16.gmra.mxu0 %v4091
    %v5729 = vpop.f32.mrf.mxu0
    %v5730 = vadd.f32 %v5716, %v5729
    %v5731 = vpop.f32.mrf.mxu0
    %v5732 = vadd.f32 %v5718, %v5731
    %5733 = vdwg.mxu0
    %5734 = vmatpush.bf16.msra.mxu0 %v5321
    %5735 = vmatpush.bf16.msra.mxu0 %v5320
    %5736 = vmatpush.bf16.msra.mxu0 %v5319
    %5737 = vmatpush.bf16.msra.mxu0 %v5318
    %5738 = vmatpush.bf16.msra.mxu0 %v5317
    %5739 = vmatpush.bf16.msra.mxu0 %v5316
    %5740 = vmatpush.bf16.msra.mxu0 %v5315
    %5741 = vmatpush.bf16.msra.mxu0 %v5314
    %5742 = vmatmul.bf16.gmra.mxu0 %v4092
    %v5743 = vpop.f32.mrf.mxu0
    %v5744 = vadd.f32 %v5730, %v5743
    %v5745 = vpop.f32.mrf.mxu0
    %v5746 = vadd.f32 %v5732, %v5745
    %5747 = vdwg.mxu0
    %5748 = vmatpush.bf16.msra.mxu0 %v5329
    %5749 = vmatpush.bf16.msra.mxu0 %v5328
    %5750 = vmatpush.bf16.msra.mxu0 %v5327
    %5751 = vmatpush.bf16.msra.mxu0 %v5326
    %5752 = vmatpush.bf16.msra.mxu0 %v5325
    %5753 = vmatpush.bf16.msra.mxu0 %v5324
    %5754 = vmatpush.bf16.msra.mxu0 %v5323
    %5755 = vmatpush.bf16.msra.mxu0 %v5322
    %5756 = vmatmul.bf16.gmra.mxu0 %v4093
    %v5757 = vpop.f32.mrf.mxu0
    %v5758 = vadd.f32 %v5744, %v5757
    %v5759 = vpop.f32.mrf.mxu0
    %v5760 = vadd.f32 %v5746, %v5759
    %5761 = vdwg.mxu0
    %5762 = vmatpush.bf16.msra.mxu0 %v5337
    %5763 = vmatpush.bf16.msra.mxu0 %v5336
    %5764 = vmatpush.bf16.msra.mxu0 %v5335
    %5765 = vmatpush.bf16.msra.mxu0 %v5334
    %5766 = vmatpush.bf16.msra.mxu0 %v5333
    %5767 = vmatpush.bf16.msra.mxu0 %v5332
    %5768 = vmatpush.bf16.msra.mxu0 %v5331
    %5769 = vmatpush.bf16.msra.mxu0 %v5330
    %5770 = vmatmul.bf16.gmra.mxu0 %v4094
    %v5771 = vpop.f32.mrf.mxu0
    %v5772 = vadd.f32 %v5758, %v5771
    %v5773 = vpop.f32.mrf.mxu0
    %v5774 = vadd.f32 %v5760, %v5773
    %5775 = vdwg.mxu0
    %5776 = vmatpush.bf16.msra.mxu0 %v5345
    %5777 = vmatpush.bf16.msra.mxu0 %v5344
    %5778 = vmatpush.bf16.msra.mxu0 %v5343
    %5779 = vmatpush.bf16.msra.mxu0 %v5342
    %5780 = vmatpush.bf16.msra.mxu0 %v5341
    %5781 = vmatpush.bf16.msra.mxu0 %v5340
    %5782 = vmatpush.bf16.msra.mxu0 %v5339
    %5783 = vmatpush.bf16.msra.mxu0 %v5338
    %5784 = vmatmul.bf16.gmra.mxu0 %v4095
    %v5785 = vpop.f32.mrf.mxu0
    %v5786 = vadd.f32 %v5772, %v5785
    %v5787 = vpop.f32.mrf.mxu0
    %v5788 = vadd.f32 %v5774, %v5787
    %5789 = vdwg.mxu0
    %5790 = vmatpush.bf16.msra.mxu0 %v5353
    %5791 = vmatpush.bf16.msra.mxu0 %v5352
    %5792 = vmatpush.bf16.msra.mxu0 %v5351
    %5793 = vmatpush.bf16.msra.mxu0 %v5350
    %5794 = vmatpush.bf16.msra.mxu0 %v5349
    %5795 = vmatpush.bf16.msra.mxu0 %v5348
    %5796 = vmatpush.bf16.msra.mxu0 %v5347
    %5797 = vmatpush.bf16.msra.mxu0 %v5346
    %5798 = vmatmul.bf16.gmra.mxu0 %v4096
    %v5799 = vpop.f32.mrf.mxu0
    %v5800 = vadd.f32 %v5786, %v5799
    %v5801 = vpop.f32.mrf.mxu0
    %v5802 = vadd.f32 %v5788, %v5801
    %5803 = vdwg.mxu0
    %5804 = vmatpush.bf16.msra.mxu0 %v5361
    %5805 = vmatpush.bf16.msra.mxu0 %v5360
    %5806 = vmatpush.bf16.msra.mxu0 %v5359
    %5807 = vmatpush.bf16.msra.mxu0 %v5358
    %5808 = vmatpush.bf16.msra.mxu0 %v5357
    %5809 = vmatpush.bf16.msra.mxu0 %v5356
    %5810 = vmatpush.bf16.msra.mxu0 %v5355
    %5811 = vmatpush.bf16.msra.mxu0 %v5354
    %5812 = vmatmul.bf16.gmra.mxu0 %v4097
    %v5813 = vpop.f32.mrf.mxu0
    %v5814 = vadd.f32 %v5800, %v5813
    %v5815 = vpop.f32.mrf.mxu0
    %v5816 = vadd.f32 %v5802, %v5815
    %5817 = vdwg.mxu0
    %5818 = vmatpush.bf16.msra.mxu0 %v5369
    %5819 = vmatpush.bf16.msra.mxu0 %v5368
    %5820 = vmatpush.bf16.msra.mxu0 %v5367
    %5821 = vmatpush.bf16.msra.mxu0 %v5366
    %5822 = vmatpush.bf16.msra.mxu0 %v5365
    %5823 = vmatpush.bf16.msra.mxu0 %v5364
    %5824 = vmatpush.bf16.msra.mxu0 %v5363
    %5825 = vmatpush.bf16.msra.mxu0 %v5362
    %5826 = vmatmul.bf16.gmra.mxu0 %v4098
    %v5827 = vpop.f32.mrf.mxu0
    %v5828 = vadd.f32 %v5814, %v5827
    %v5829 = vpop.f32.mrf.mxu0
    %v5830 = vadd.f32 %v5816, %v5829
    %5831 = vdwg.mxu0
    %5832 = vmatpush.bf16.msra.mxu0 %v5377
    %5833 = vmatpush.bf16.msra.mxu0 %v5376
    %5834 = vmatpush.bf16.msra.mxu0 %v5375
    %5835 = vmatpush.bf16.msra.mxu0 %v5374
    %5836 = vmatpush.bf16.msra.mxu0 %v5373
    %5837 = vmatpush.bf16.msra.mxu0 %v5372
    %5838 = vmatpush.bf16.msra.mxu0 %v5371
    %5839 = vmatpush.bf16.msra.mxu0 %v5370
    %5840 = vmatmul.bf16.gmra.mxu0 %v4099
    %v5841 = vpop.f32.mrf.mxu0
    %v5842 = vadd.f32 %v5828, %v5841
    %v5843 = vpop.f32.mrf.mxu0
    %v5844 = vadd.f32 %v5830, %v5843
    %5845 = vdwg.mxu0
    %5846 = vmatpush.bf16.msra.mxu0 %v5385
    %5847 = vmatpush.bf16.msra.mxu0 %v5384
    %5848 = vmatpush.bf16.msra.mxu0 %v5383
    %5849 = vmatpush.bf16.msra.mxu0 %v5382
    %5850 = vmatpush.bf16.msra.mxu0 %v5381
    %5851 = vmatpush.bf16.msra.mxu0 %v5380
    %5852 = vmatpush.bf16.msra.mxu0 %v5379
    %5853 = vmatpush.bf16.msra.mxu0 %v5378
    %5854 = vmatmul.bf16.gmra.mxu0 %v4100
    %v5855 = vpop.f32.mrf.mxu0
    %v5856 = vadd.f32 %v5842, %v5855
    %v5857 = vpop.f32.mrf.mxu0
    %v5858 = vadd.f32 %v5844, %v5857
    %5859 = vdwg.mxu0
    %5860 = vmatpush.bf16.msra.mxu0 %v5393
    %5861 = vmatpush.bf16.msra.mxu0 %v5392
    %5862 = vmatpush.bf16.msra.mxu0 %v5391
    %5863 = vmatpush.bf16.msra.mxu0 %v5390
    %5864 = vmatpush.bf16.msra.mxu0 %v5389
    %5865 = vmatpush.bf16.msra.mxu0 %v5388
    %5866 = vmatpush.bf16.msra.mxu0 %v5387
    %5867 = vmatpush.bf16.msra.mxu0 %v5386
    %5868 = vmatmul.bf16.gmra.mxu0 %v4101
    %v5869 = vpop.f32.mrf.mxu0
    %v5870 = vadd.f32 %v5856, %v5869
    %v5871 = vpop.f32.mrf.mxu0
    %v5872 = vadd.f32 %v5858, %v5871
    %5873 = vdwg.mxu0
    %5874 = vmatpush.bf16.msra.mxu0 %v5401
    %5875 = vmatpush.bf16.msra.mxu0 %v5400
    %5876 = vmatpush.bf16.msra.mxu0 %v5399
    %5877 = vmatpush.bf16.msra.mxu0 %v5398
    %5878 = vmatpush.bf16.msra.mxu0 %v5397
    %5879 = vmatpush.bf16.msra.mxu0 %v5396
    %5880 = vmatpush.bf16.msra.mxu0 %v5395
    %5881 = vmatpush.bf16.msra.mxu0 %v5394
    %5882 = vmatmul.bf16.gmra.mxu0 %v4102
    %v5883 = vpop.f32.mrf.mxu0
    %v5884 = vadd.f32 %v5870, %v5883
    %v5885 = vpop.f32.mrf.mxu0
    %v5886 = vadd.f32 %v5872, %v5885
    %5887 = vdwg.mxu0
    %5888 = vmatpush.bf16.msra.mxu0 %v5409
    %5889 = vmatpush.bf16.msra.mxu0 %v5408
    %5890 = vmatpush.bf16.msra.mxu0 %v5407
    %5891 = vmatpush.bf16.msra.mxu0 %v5406
    %5892 = vmatpush.bf16.msra.mxu0 %v5405
    %5893 = vmatpush.bf16.msra.mxu0 %v5404
    %5894 = vmatpush.bf16.msra.mxu0 %v5403
    %5895 = vmatpush.bf16.msra.mxu0 %v5402
    %5896 = vmatmul.bf16.gmra.mxu0 %v4103
    %v5897 = vpop.f32.mrf.mxu0
    %v5898 = vadd.f32 %v5884, %v5897
    %v5899 = vpop.f32.mrf.mxu0
    %v5900 = vadd.f32 %v5886, %v5899
    %5901 = vdwg.mxu0
    %5902 = vmatpush.bf16.msra.mxu0 %v5417
    %5903 = vmatpush.bf16.msra.mxu0 %v5416
    %5904 = vmatpush.bf16.msra.mxu0 %v5415
    %5905 = vmatpush.bf16.msra.mxu0 %v5414
    %5906 = vmatpush.bf16.msra.mxu0 %v5413
    %5907 = vmatpush.bf16.msra.mxu0 %v5412
    %5908 = vmatpush.bf16.msra.mxu0 %v5411
    %5909 = vmatpush.bf16.msra.mxu0 %v5410
    %5910 = vmatmul.bf16.gmra.mxu0 %v4104
    %v5911 = vpop.f32.mrf.mxu0
    %v5912 = vadd.f32 %v5898, %v5911
    %v5913 = vpop.f32.mrf.mxu0
    %v5914 = vadd.f32 %v5900, %v5913
    %5915 = vdwg.mxu0
    %5916 = vmatpush.bf16.msra.mxu0 %v5425
    %5917 = vmatpush.bf16.msra.mxu0 %v5424
    %5918 = vmatpush.bf16.msra.mxu0 %v5423
    %5919 = vmatpush.bf16.msra.mxu0 %v5422
    %5920 = vmatpush.bf16.msra.mxu0 %v5421
    %5921 = vmatpush.bf16.msra.mxu0 %v5420
    %5922 = vmatpush.bf16.msra.mxu0 %v5419
    %5923 = vmatpush.bf16.msra.mxu0 %v5418
    %5924 = vmatmul.bf16.gmra.mxu0 %v4105
    %v5925 = vpop.f32.mrf.mxu0
    %v5926 = vadd.f32 %v5912, %v5925
    %v5927 = vpop.f32.mrf.mxu0
    %v5928 = vadd.f32 %v5914, %v5927
    %5929 = vdwg.mxu0
    %5930 = vmatpush.bf16.msra.mxu0 %v5433
    %5931 = vmatpush.bf16.msra.mxu0 %v5432
    %5932 = vmatpush.bf16.msra.mxu0 %v5431
    %5933 = vmatpush.bf16.msra.mxu0 %v5430
    %5934 = vmatpush.bf16.msra.mxu0 %v5429
    %5935 = vmatpush.bf16.msra.mxu0 %v5428
    %5936 = vmatpush.bf16.msra.mxu0 %v5427
    %5937 = vmatpush.bf16.msra.mxu0 %v5426
    %5938 = vmatmul.bf16.gmra.mxu0 %v4106
    %v5939 = vpop.f32.mrf.mxu0
    %v5940 = vadd.f32 %v5926, %v5939
    %v5941 = vpop.f32.mrf.mxu0
    %v5942 = vadd.f32 %v5928, %v5941
    %5943 = vdwg.mxu0
    %5944 = vmatpush.bf16.msra.mxu0 %v5441
    %5945 = vmatpush.bf16.msra.mxu0 %v5440
    %5946 = vmatpush.bf16.msra.mxu0 %v5439
    %5947 = vmatpush.bf16.msra.mxu0 %v5438
    %5948 = vmatpush.bf16.msra.mxu0 %v5437
    %5949 = vmatpush.bf16.msra.mxu0 %v5436
    %5950 = vmatpush.bf16.msra.mxu0 %v5435
    %5951 = vmatpush.bf16.msra.mxu0 %v5434
    %5952 = vmatmul.bf16.gmra.mxu0 %v4107
    %v5953 = vpop.f32.mrf.mxu0
    %v5954 = vadd.f32 %v5940, %v5953
    %v5955 = vpop.f32.mrf.mxu0
    %v5956 = vadd.f32 %v5942, %v5955
    %5957 = vdwg.mxu0
    %5958 = vmatpush.bf16.msra.mxu0 %v5449
    %5959 = vmatpush.bf16.msra.mxu0 %v5448
    %5960 = vmatpush.bf16.msra.mxu0 %v5447
    %5961 = vmatpush.bf16.msra.mxu0 %v5446
    %5962 = vmatpush.bf16.msra.mxu0 %v5445
    %5963 = vmatpush.bf16.msra.mxu0 %v5444
    %5964 = vmatpush.bf16.msra.mxu0 %v5443
    %5965 = vmatpush.bf16.msra.mxu0 %v5442
    %5966 = vmatmul.bf16.gmra.mxu0 %v4108
    %v5967 = vpop.f32.mrf.mxu0
    %v5968 = vadd.f32 %v5954, %v5967
    %v5969 = vpop.f32.mrf.mxu0
    %v5970 = vadd.f32 %v5956, %v5969
    %5971 = vdwg.mxu0
    %5972 = vmatpush.bf16.msra.mxu0 %v5457
    %5973 = vmatpush.bf16.msra.mxu0 %v5456
    %5974 = vmatpush.bf16.msra.mxu0 %v5455
    %5975 = vmatpush.bf16.msra.mxu0 %v5454
    %5976 = vmatpush.bf16.msra.mxu0 %v5453
    %5977 = vmatpush.bf16.msra.mxu0 %v5452
    %5978 = vmatpush.bf16.msra.mxu0 %v5451
    %5979 = vmatpush.bf16.msra.mxu0 %v5450
    %5980 = vmatmul.bf16.gmra.mxu0 %v4109
    %v5981 = vpop.f32.mrf.mxu0
    %v5982 = vadd.f32 %v5968, %v5981
    %v5983 = vpop.f32.mrf.mxu0
    %v5984 = vadd.f32 %v5970, %v5983
    %5985 = vdwg.mxu0
    %v5986 = vadd.f32 %v2914, %v5982
    %v5987 = vadd.f32 %v2915, %v5984
    %v5988 = vsel %vm111, %v5986, 0.0
    %v5989 = vrot.slane %v5988, 4
    %v5990 = vadd.f32 %v5988, %v5989
    %v5991 = vrot.slane %v5990, 2
    %v5992 = vadd.f32 %v5990, %v5991
    %v5993 = vrot.slane %v5992, 1
    %v5994 = vadd.f32 %v5992, %v5993
    %v5995 = vsel %vm111, %v5987, 0.0
    %v5996 = vrot.slane %v5995, 4
    %v5997 = vadd.f32 %v5995, %v5996
    %v5998 = vrot.slane %v5997, 2
    %v5999 = vadd.f32 %v5997, %v5998
    %v6000 = vrot.slane %v5999, 1
    %v6001 = vadd.f32 %v5999, %v6000
    %v6002 = vrcp.pop 8.0
    %v6003 = vmul.f32 8.0, %v6002
    %v6004 = vsub.f32 1.0, %v6003
    %v6005 = vmul.f32 %v6002, %v6004
    %v6006 = vadd.f32 %v6002, %v6005
    %vm6007 = vweird.f32 %v6002
    %v6008 = vsel %vm6007, %v6002, %v6006
    %v6009 = vmul.f32 %v5994, %v6008
    %v6010 = vmul.f32 %v6001, %v6008
    %vm6013 = vcmask 1041409
    %v6014 = vsel %vm6013, %v6010, %v6009
    %vm6016 = vcmask 254976
    %6017 = vst.msk [vmem:[#allocation2] sm:$0x3] %vm6016, %v6014
    // Predicated region
    $region58: #{tpu_custom_call.1} parent=1 // pred_check
      _
    $region59: #{tpu_custom_call.1} parent=1 // pred_check_branch
      %6019 = sbr.rel (0) target = $region61
    $region60: #{tpu_custom_call.1} parent=1 // pred_region
      %6021 = vsyncadd [#allocation3], 0
      %s6023 = sshll.u32 [#allocation2], 4
      %s6024 = int_to_ptr.vmem [resolvable:$true] %s6023
      %s6025 = sshll.u32 %s14, 4
      %s6026 = int_to_ptr.hbm [resolvable:$true] %s6025
      %6028 = dma.vmem_to_hbm [thread:$0]  %s6024, 32, %s6026, [#allocation3]
    $region61: #{tpu_custom_call.1} parent=1 // pred_fallthru
      _
    // Predicated region
    $region62: #{tpu_custom_call.1} parent=1 // pred_check
      _
    $region63: #{tpu_custom_call.1} parent=1 // pred_check_branch
      %6030 = sbr.rel (0) target = $region65
    $region64: #{tpu_custom_call.1} parent=1 // pred_region
      %6032 = dma.done [#allocation3], 32
    $region65: #{tpu_custom_call.1} parent=1 // pred_fallthru
      _
    %6033 = vsyncpa [#allocation3], 1

</llo_original>
